<compile_context>
chip_gen: v7x
topology: tpu7x:2x2x1
jax: 0.10.0
libtpu: 0.0.40
codegen_flags: <defaults>
</compile_context>

<pallas_src>
import jax
import jax.numpy as jnp
from jax.experimental import pallas as pl
from jax.experimental.pallas import tpu as pltpu


def _round_up(x, m):
    return (x + m - 1) // m * m


def effhead_kernel(x_ref, wc_ref, shift_ref, pool_ref, wf_ref, bf_ref, o_ref):
    # x_ref block: (B_BLK, HW, C_in) -> flatten samples+spatial into the M dim.
    b_blk, hw, c_in = x_ref.shape
    x = x_ref[...].reshape(b_blk * hw, c_in)

    # 1x1 conv with BN scale pre-folded into the weight (MXU matmul).
    h = jnp.dot(x, wc_ref[...], preferred_element_type=jnp.float32)

    # Folded BN shift + Swish (f32 element-wise math).
    h = h + shift_ref[...]
    h = h * jax.nn.sigmoid(h)

    # AdaptiveAvgPool2d((1,1)) as an MXU matmul with a block-diagonal
    # (B_BLK, B_BLK*HW) ones/HW matrix -> (B_BLK, C_out_pad).
    pooled = jnp.dot(pool_ref[...], h, preferred_element_type=jnp.float32)

    # FC on the whole batched pooled block: (B_BLK, C_out_pad) @ (C_out_pad, nc_pad).
    out = jnp.dot(pooled.astype(wf_ref.dtype), wf_ref[...],
                  preferred_element_type=jnp.float32)
    out = out + bf_ref[...]

    o_ref[...] = out.astype(o_ref.dtype)


def effhead_forward(x_nchw, conv_w, bn_gamma, bn_beta, bn_mean, bn_var,
                    fc_w, fc_b, *, eps=1e-5, b_blk=8, compute_dtype=None):
    """x_nchw: [N, C_in, H, W] (PyTorch layout). Returns [N, nc] float32.

    compute_dtype: set to jnp.bfloat16 on v6e/v7x to halve MXU/DMA cost for
    x and the weight matrices (accumulation stays f32).
    """
    N, C_in, H, W = x_nchw.shape
    C_out = conv_w.shape[0]
    nc = fc_w.shape[0]
    HW = H * W

    # Lane-dense padding of channel dims; batch padded up to a B_BLK multiple.
    C_out_p = _round_up(C_out, 128)
    nc_p = _round_up(nc, 128)
    b_blk = max(1, min(b_blk, N))
    N_p = _round_up(N, b_blk)

    # ---- wrapper-side glue (layout + parameter folding) -------------------
    # TODO(synk): NCHW -> (N, HW, C_in) permute still done by XLA here.
    x = jnp.transpose(x_nchw, (0, 2, 3, 1)).reshape(N, HW, C_in)
    if N_p != N:
        x = jnp.pad(x, ((0, N_p - N), (0, 0), (0, 0)))

    # Fold inference-mode BN into the conv weight (scale) and a shift vector.
    inv_std = 1.0 / jnp.sqrt(bn_var + eps)
    scale = bn_gamma * inv_std                                  # (C_out,)
    shift = bn_beta - bn_mean * scale                           # (C_out,)

    wc = conv_w.reshape(C_out, C_in).T * scale[None, :]         # (C_in, C_out)
    wc = jnp.pad(wc, ((0, 0), (0, C_out_p - C_out)))            # (C_in, C_out_p)
    shift = jnp.pad(shift, (0, C_out_p - C_out)).reshape(1, C_out_p)

    wf = jnp.pad(fc_w.T, ((0, C_out_p - C_out), (0, nc_p - nc)))  # (C_out_p, nc_p)
    bf = jnp.pad(fc_b, (0, nc_p - nc)).reshape(1, nc_p)

    # Block-diagonal pooling matrix: row b has 1/HW over its sample's rows.
    pool = jnp.repeat(jnp.eye(b_blk, dtype=jnp.float32), HW, axis=1) / HW

    if compute_dtype is not None:
        x = x.astype(compute_dtype)
        wc = wc.astype(compute_dtype)
        wf = wf.astype(compute_dtype)

    out = pl.pallas_call(
        effhead_kernel,
        out_shape=jax.ShapeDtypeStruct((N_p, nc_p), jnp.float32),
        grid_spec=pltpu.PrefetchScalarGridSpec(
            num_scalar_prefetch=0,
            grid=(N_p // b_blk,),
            in_specs=[
                pl.BlockSpec((b_blk, HW, C_in), lambda b: (b, 0, 0)),   # x batch block
                pl.BlockSpec((C_in, C_out_p), lambda b: (0, 0)),        # conv w (BN-scaled)
                pl.BlockSpec((1, C_out_p), lambda b: (0, 0)),           # BN shift
                pl.BlockSpec((b_blk, b_blk * HW), lambda b: (0, 0)),    # pooling matrix
                pl.BlockSpec((C_out_p, nc_p), lambda b: (0, 0)),        # fc weight
                pl.BlockSpec((1, nc_p), lambda b: (0, 0)),              # fc bias
            ],
            out_specs=pl.BlockSpec((b_blk, nc_p), lambda b: (b, 0)),
        ),
        compiler_params=pltpu.CompilerParams(
            dimension_semantics=("parallel",)),
    )(x, wc, shift, pool, wf, bf)

    # Strip batch / lane padding.
    return out[:N, :nc]


def effhead_reference(x_nchw, conv_w, bn_gamma, bn_beta, bn_mean, bn_var,
                      fc_w, fc_b, eps=1e-5):
    """Pure-JAX reference of the PyTorch forward (inference-mode BN)."""
    N, C_in, H, W = x_nchw.shape
    C_out = conv_w.shape[0]
    x = jnp.transpose(x_nchw, (0, 2, 3, 1)).reshape(N * H * W, C_in)
    h = x @ jnp.transpose(conv_w.reshape(C_out, C_in))
    h = (h - bn_mean) / jnp.sqrt(bn_var + eps) * bn_gamma + bn_beta
    h = h * jax.nn.sigmoid(h)
    h = h.reshape(N, H * W, C_out).mean(axis=1)
    return h @ fc_w.T + fc_b


if __name__ == "__main__":
    # Small shapes consistent with EffHead(w_in=16, w_out=32, nc=10).
    # N=16 with b_blk=8 -> 2 parallel grid steps (keeps both v7x TCs busy).
    N, w_in, H, W = 16, 16, 16, 16
    w_out, nc = 32, 10

    key = jax.random.PRNGKey(0)
    k = jax.random.split(key, 8)

    x = jax.random.normal(k[0], (N, w_in, H, W), dtype=jnp.float32)

    conv_w = jax.random.normal(k[1], (w_out, w_in, 1, 1), dtype=jnp.float32) * 0.1
    bn_gamma = 1.0 + 0.1 * jax.random.normal(k[2], (w_out,), dtype=jnp.float32)
    bn_beta = 0.1 * jax.random.normal(k[3], (w_out,), dtype=jnp.float32)
    bn_mean = 0.05 * jax.random.normal(k[4], (w_out,), dtype=jnp.float32)
    bn_var = 1.0 + 0.1 * jax.nn.softplus(
        jax.random.normal(k[5], (w_out,), dtype=jnp.float32))
    fc_w = jax.random.normal(k[6], (nc, w_out), dtype=jnp.float32) * 0.1
    fc_b = 0.01 * jax.random.normal(k[7], (nc,), dtype=jnp.float32)

    out = effhead_forward(x, conv_w, bn_gamma, bn_beta, bn_mean, bn_var,
                          fc_w, fc_b, b_blk=8)
    out = jax.block_until_ready(out)

    ref = effhead_reference(x, conv_w, bn_gamma, bn_beta, bn_mean, bn_var,
                            fc_w, fc_b)
    assert out.shape == (N, nc), out.shape
    assert jnp.allclose(out, ref, atol=1e-3, rtol=1e-3), (
        jnp.max(jnp.abs(out - ref)))

    print("KERNEL_OK")
</pallas_src>

<mosaic_0001>
module attributes {stable_mosaic.version = 11 : i64} {
  func.func @effhead_kernel(%arg0: i32, %arg1: memref<8x256x16xf32, #tpu.memory_space<vmem>>, %arg2: memref<16x128xf32, #tpu.memory_space<vmem>>, %arg3: memref<1x128xf32, #tpu.memory_space<vmem>>, %arg4: memref<8x2048xf32, #tpu.memory_space<vmem>>, %arg5: memref<128x128xf32, #tpu.memory_space<vmem>>, %arg6: memref<1x128xf32, #tpu.memory_space<vmem>>, %arg7: memref<8x128xf32, #tpu.memory_space<vmem>>) attributes {dimension_semantics = [#tpu.dimension_semantics<parallel>], iteration_bounds = array<i64: 2>, scalar_prefetch = 0 : i64, scratch_operands = 0 : i64, tpu.core_type = #tpu.core_type<tc>, window_params = [{transform_indices = @transform_0, window_bounds = array<i64: 8, 256, 16>}, {pipeline_mode = #tpu.pipeline_mode<synchronous>, transform_indices = @transform_1, window_bounds = array<i64: 16, 128>}, {pipeline_mode = #tpu.pipeline_mode<synchronous>, transform_indices = @transform_2, window_bounds = array<i64: 1, 128>}, {pipeline_mode = #tpu.pipeline_mode<synchronous>, transform_indices = @transform_3, window_bounds = array<i64: 8, 2048>}, {pipeline_mode = #tpu.pipeline_mode<synchronous>, transform_indices = @transform_4, window_bounds = array<i64: 128, 128>}, {pipeline_mode = #tpu.pipeline_mode<synchronous>, transform_indices = @transform_5, window_bounds = array<i64: 1, 128>}, {transform_indices = @transform_6, window_bounds = array<i64: 8, 128>}]} {
    %c0 = arith.constant 0 : index
    %c0_0 = arith.constant 0 : index
    %c0_1 = arith.constant 0 : index
    %0 = vector.load %arg1[%c0, %c0_0, %c0_1] : memref<8x256x16xf32, #tpu.memory_space<vmem>>, vector<8x256x16xf32>
    %1 = vector.shape_cast %0 : vector<8x256x16xf32> to vector<2048x16xf32>
    %c0_2 = arith.constant 0 : index
    %c0_3 = arith.constant 0 : index
    %2 = vector.load %arg2[%c0_2, %c0_3] : memref<16x128xf32, #tpu.memory_space<vmem>>, vector<16x128xf32>
    %cst = arith.constant dense<0.000000e+00> : vector<2048x128xf32>
    %3 = tpu.matmul %1, %2, %cst {dimension_numbers = #tpu.dot_dimension_numbers<[1], [0], [0], [1], [0, 0, 1, 1], [], []>} : vector<2048x16xf32>, vector<16x128xf32>, vector<2048x128xf32> -> vector<2048x128xf32>
    %c0_4 = arith.constant 0 : index
    %c0_5 = arith.constant 0 : index
    %4 = vector.load %arg3[%c0_4, %c0_5] : memref<1x128xf32, #tpu.memory_space<vmem>>, vector<1x128xf32>
    %5 = vector.broadcast %4 : vector<1x128xf32> to vector<2048x128xf32>
    %6 = arith.addf %3, %5 : vector<2048x128xf32>
    %7 = arith.negf %6 : vector<2048x128xf32>
    %8 = math.exp %7 : vector<2048x128xf32>
    %cst_6 = arith.constant 1.000000e+00 : f32
    %9 = vector.broadcast %cst_6 : f32 to vector<2048x128xf32>
    %10 = arith.addf %9, %8 : vector<2048x128xf32>
    %11 = arith.divf %9, %10 : vector<2048x128xf32>
    %12 = arith.mulf %6, %11 : vector<2048x128xf32>
    %c0_7 = arith.constant 0 : index
    %c0_8 = arith.constant 0 : index
    %13 = vector.load %arg4[%c0_7, %c0_8] : memref<8x2048xf32, #tpu.memory_space<vmem>>, vector<8x2048xf32>
    %cst_9 = arith.constant dense<0.000000e+00> : vector<8x128xf32>
    %14 = tpu.matmul %13, %12, %cst_9 {dimension_numbers = #tpu.dot_dimension_numbers<[1], [0], [0], [1], [0, 0, 1, 1], [], []>} : vector<8x2048xf32>, vector<2048x128xf32>, vector<8x128xf32> -> vector<8x128xf32>
    %c0_10 = arith.constant 0 : index
    %c0_11 = arith.constant 0 : index
    %15 = vector.load %arg5[%c0_10, %c0_11] : memref<128x128xf32, #tpu.memory_space<vmem>>, vector<128x128xf32>
    %cst_12 = arith.constant dense<0.000000e+00> : vector<8x128xf32>
    %16 = tpu.matmul %14, %15, %cst_12 {dimension_numbers = #tpu.dot_dimension_numbers<[1], [0], [0], [1], [0, 0, 1, 1], [], []>} : vector<8x128xf32>, vector<128x128xf32>, vector<8x128xf32> -> vector<8x128xf32>
    %c0_13 = arith.constant 0 : index
    %c0_14 = arith.constant 0 : index
    %17 = vector.load %arg6[%c0_13, %c0_14] : memref<1x128xf32, #tpu.memory_space<vmem>>, vector<1x128xf32>
    %18 = vector.broadcast %17 : vector<1x128xf32> to vector<8x128xf32>
    %19 = arith.addf %16, %18 : vector<8x128xf32>
    %c0_15 = arith.constant 0 : index
    %c0_16 = arith.constant 0 : index
    %20 = vector.load %arg7[%c0_15, %c0_16] : memref<8x128xf32, #tpu.memory_space<vmem>>, vector<8x128xf32>
    tpu.vector_store %arg7[%c0_15, %c0_16], %19 {strides = array<i32>} : memref<8x128xf32, #tpu.memory_space<vmem>>, vector<8x128xf32>,
    return
  }
  func.func @transform_0(%arg0: i32) -> (i32, i32, i32) {
    %c0_i32 = arith.constant 0 : i32
    %c0_i32_0 = arith.constant 0 : i32
    %c0_i32_1 = arith.constant 0 : i32
    return %arg0, %c0_i32, %c0_i32_0 : i32, i32, i32
  }
  func.func @transform_1(%arg0: i32) -> (i32, i32) {
    %c0_i32 = arith.constant 0 : i32
    %c0_i32_0 = arith.constant 0 : i32
    %c0_i32_1 = arith.constant 0 : i32
    return %c0_i32, %c0_i32_0 : i32, i32
  }
  func.func @transform_2(%arg0: i32) -> (i32, i32) {
    %c0_i32 = arith.constant 0 : i32
    %c0_i32_0 = arith.constant 0 : i32
    %c0_i32_1 = arith.constant 0 : i32
    return %c0_i32, %c0_i32_0 : i32, i32
  }
  func.func @transform_3(%arg0: i32) -> (i32, i32) {
    %c0_i32 = arith.constant 0 : i32
    %c0_i32_0 = arith.constant 0 : i32
    %c0_i32_1 = arith.constant 0 : i32
    return %c0_i32, %c0_i32_0 : i32, i32
  }
  func.func @transform_4(%arg0: i32) -> (i32, i32) {
    %c0_i32 = arith.constant 0 : i32
    %c0_i32_0 = arith.constant 0 : i32
    %c0_i32_1 = arith.constant 0 : i32
    return %c0_i32, %c0_i32_0 : i32, i32
  }
  func.func @transform_5(%arg0: i32) -> (i32, i32) {
    %c0_i32 = arith.constant 0 : i32
    %c0_i32_0 = arith.constant 0 : i32
    %c0_i32_1 = arith.constant 0 : i32
    return %c0_i32, %c0_i32_0 : i32, i32
  }
  func.func @transform_6(%arg0: i32) -> (i32, i32) {
    %c0_i32 = arith.constant 0 : i32
    %c0_i32_0 = arith.constant 0 : i32
    return %arg0, %c0_i32 : i32, i32
  }
}

</mosaic_0001>

<llo_original>
// kernel: tpu_custom_call.1
$region0: #{tpu_custom_call.1}
  #allocation0 [shape = 'u32[]', space=smem, size = 0x4, offset = 0x4, fixed_abs, tag = 'smem constant byte address 0x4 - core index']
  #allocation1 [shape = 'u32[144,128]{1,0:T(1,128)}', space=vmem, size = 0x12000, scoped, tag = 'internal scratch']
  %s0 = inlined_call_operand.vmem [shape: f32[16,256,16], index: 0, kind: input, shape index: {}]
  %s1 = inlined_call_operand.vmem [shape: f32[16,128], index: 1, kind: input, shape index: {}]
  %s2 = inlined_call_operand.vmem [shape: f32[1,128], index: 2, kind: input, shape index: {}]
  %s3 = inlined_call_operand.vmem [shape: f32[8,2048], index: 3, kind: input, shape index: {}]
  %s4 = inlined_call_operand.vmem [shape: f32[128,128], index: 4, kind: input, shape index: {}]
  %s5 = inlined_call_operand.vmem [shape: f32[1,128], index: 5, kind: input, shape index: {}]
  %s6 = inlined_call_operand.hbm [shape: f32[16,128], index: 6, kind: output, shape index: {}]
  %s7 = sld [smem:[#allocation0]]
  $region57: #{tpu_custom_call.1} parent=0
    _
  %s9 = ssub.s32 1, %s7
  %s10 = scalar_select 0, %s9, %s7
  $region1: #{tpu_custom_call.1} parent=0
    #allocation2 [shape = 'u8[8192]{0}', space=vmem, size = 0x2000, scoped, tag = 'output window, operand 0']
    #allocation3 [shape = 's32[2]{0}', space=sflag, size = 0x8, scoped, tag = 'scoped memory for tpu_custom_call.1']
    %11 = vsyncpa [#allocation3], 0
    %s12 = scalar_lea.sflag [#allocation3], 1
    %13 = vsyncpa %s12, 0
    loop: start=0, step=1, limit=4
    $region2: #{tpu_custom_call.1} parent=1 // loop_pre_header
      _
    $region3: #{tpu_custom_call.1} parent=1 // loop_header
      %s15 = sphi 0, %s19
      %p16 = scmp.ge.s32.totalorder %s15, 4
      %s25 = sphi 0, %s27
      %s28 = sphi 0, %s25
      %s29 = sphi 0, %s28
      %s45 = sphi 0, %s29
      %s49 = sphi 0, %s49
      %s51 = sphi 0, %s49
      %s52 = sphi 0, %s51
      %s66 = sphi 0, %s52
      %s70 = sphi 0, %s70
      %s72 = sphi 0, %s70
      %s73 = sphi 0, %s72
      %s87 = sphi 0, %s73
      %s91 = sphi 0, %s91
      %s93 = sphi 0, %s91
      %s94 = sphi 0, %s93
      %s108 = sphi 0, %s94
      %s112 = sphi 0, %s112
      %s114 = sphi 0, %s112
      %s115 = sphi 0, %s114
      %s129 = sphi 0, %s115
      %s133 = sphi 0, %s133
      %s135 = sphi 0, %s133
      %s136 = sphi 0, %s135
      %s150 = sphi 0, %s136
      %s156 = sphi 0, %s158
      %s159 = sphi 0, %s156
      %s160 = sphi 0, %s159
      %s176 = sphi 0, %s160
    $region4: #{tpu_custom_call.1} parent=1 // loop_header_branch
      %18 = sbr.rel (%p16) target = $region8
    $region5: #{tpu_custom_call.1} parent=1 // loop_body
      %s20 = ssub.s32 %s15, 1
      %s21 = ssub.s32 %s15, 2
      %s22 = sadd.s32 %s15, 1
      %s23 = ssub.s32 %s15, %s22
      %p24 = scmp.eq.s32.totalorder %s23, 0
      %s26 = sadd.s32 %s25, 1
      %s27 = scalar_select %p24, %s25, %s26
      %p30 = pneg %p24
      %p31 = scmp.eq.s32.totalorder %s15, 1
      %p32 = por %p30, %p31
      %p33 = scmp.ne.s32.totalorder %s25, %s28
      %p34 = scmp.eq.s32.totalorder %s15, 0
      %p35 = por %p33, %p34
      %p36 = scmp.ne.s32.totalorder %s25, %s28
      %p37 = scmp.eq.s32.totalorder %s20, 1
      %p38 = por %p36, %p37
      %p39 = scmp.ne.s32.totalorder %s28, %s29
      %p40 = scmp.eq.s32.totalorder %s20, 0
      %p41 = por %p39, %p40
      %p42 = scmp.ne.s32.totalorder %s28, %s29
      %p43 = scmp.eq.s32.totalorder %s21, 1
      %p44 = por %p42, %p43
      %p46 = scmp.ne.s32.totalorder %s29, %s45
      %p47 = scmp.eq.s32.totalorder %s21, 0
      %p48 = por %p46, %p47
      %s50 = sadd.s32 %s49, 1
      %p53 = scmp.eq.s32.totalorder %s15, 1
      %p54 = scmp.ne.s32.totalorder %s49, %s51
      %p55 = scmp.eq.s32.totalorder %s15, 0
      %p56 = por %p54, %p55
      %p57 = scmp.ne.s32.totalorder %s49, %s51
      %p58 = scmp.eq.s32.totalorder %s20, 1
      %p59 = por %p57, %p58
      %p60 = scmp.ne.s32.totalorder %s51, %s52
      %p61 = scmp.eq.s32.totalorder %s20, 0
      %p62 = por %p60, %p61
      %p63 = scmp.ne.s32.totalorder %s51, %s52
      %p64 = scmp.eq.s32.totalorder %s21, 1
      %p65 = por %p63, %p64
      %p67 = scmp.ne.s32.totalorder %s52, %s66
      %p68 = scmp.eq.s32.totalorder %s21, 0
      %p69 = por %p67, %p68
      %s71 = sadd.s32 %s70, 1
      %p74 = scmp.eq.s32.totalorder %s15, 1
      %p75 = scmp.ne.s32.totalorder %s70, %s72
      %p76 = scmp.eq.s32.totalorder %s15, 0
      %p77 = por %p75, %p76
      %p78 = scmp.ne.s32.totalorder %s70, %s72
      %p79 = scmp.eq.s32.totalorder %s20, 1
      %p80 = por %p78, %p79
      %p81 = scmp.ne.s32.totalorder %s72, %s73
      %p82 = scmp.eq.s32.totalorder %s20, 0
      %p83 = por %p81, %p82
      %p84 = scmp.ne.s32.totalorder %s72, %s73
      %p85 = scmp.eq.s32.totalorder %s21, 1
      %p86 = por %p84, %p85
      %p88 = scmp.ne.s32.totalorder %s73, %s87
      %p89 = scmp.eq.s32.totalorder %s21, 0
      %p90 = por %p88, %p89
      %s92 = sadd.s32 %s91, 1
      %p95 = scmp.eq.s32.totalorder %s15, 1
      %p96 = scmp.ne.s32.totalorder %s91, %s93
      %p97 = scmp.eq.s32.totalorder %s15, 0
      %p98 = por %p96, %p97
      %p99 = scmp.ne.s32.totalorder %s91, %s93
      %p100 = scmp.eq.s32.totalorder %s20, 1
      %p101 = por %p99, %p100
      %p102 = scmp.ne.s32.totalorder %s93, %s94
      %p103 = scmp.eq.s32.totalorder %s20, 0
      %p104 = por %p102, %p103
      %p105 = scmp.ne.s32.totalorder %s93, %s94
      %p106 = scmp.eq.s32.totalorder %s21, 1
      %p107 = por %p105, %p106
      %p109 = scmp.ne.s32.totalorder %s94, %s108
      %p110 = scmp.eq.s32.totalorder %s21, 0
      %p111 = por %p109, %p110
      %s113 = sadd.s32 %s112, 1
      %p116 = scmp.eq.s32.totalorder %s15, 1
      %p117 = scmp.ne.s32.totalorder %s112, %s114
      %p118 = scmp.eq.s32.totalorder %s15, 0
      %p119 = por %p117, %p118
      %p120 = scmp.ne.s32.totalorder %s112, %s114
      %p121 = scmp.eq.s32.totalorder %s20, 1
      %p122 = por %p120, %p121
      %p123 = scmp.ne.s32.totalorder %s114, %s115
      %p124 = scmp.eq.s32.totalorder %s20, 0
      %p125 = por %p123, %p124
      %p126 = scmp.ne.s32.totalorder %s114, %s115
      %p127 = scmp.eq.s32.totalorder %s21, 1
      %p128 = por %p126, %p127
      %p130 = scmp.ne.s32.totalorder %s115, %s129
      %p131 = scmp.eq.s32.totalorder %s21, 0
      %p132 = por %p130, %p131
      %s134 = sadd.s32 %s133, 1
      %p137 = scmp.eq.s32.totalorder %s15, 1
      %p138 = scmp.ne.s32.totalorder %s133, %s135
      %p139 = scmp.eq.s32.totalorder %s15, 0
      %p140 = por %p138, %p139
      %p141 = scmp.ne.s32.totalorder %s133, %s135
      %p142 = scmp.eq.s32.totalorder %s20, 1
      %p143 = por %p141, %p142
      %p144 = scmp.ne.s32.totalorder %s135, %s136
      %p145 = scmp.eq.s32.totalorder %s20, 0
      %p146 = por %p144, %p145
      %p147 = scmp.ne.s32.totalorder %s135, %s136
      %p148 = scmp.eq.s32.totalorder %s21, 1
      %p149 = por %p147, %p148
      %p151 = scmp.ne.s32.totalorder %s136, %s150
      %p152 = scmp.eq.s32.totalorder %s21, 0
      %p153 = por %p151, %p152
      %s154 = ssub.s32 %s15, %s22
      %p155 = scmp.eq.s32.totalorder %s154, 0
      %s157 = sadd.s32 %s156, 1
      %s158 = scalar_select %p155, %s156, %s157
      %p161 = pneg %p155
      %p162 = scmp.eq.s32.totalorder %s15, 1
      %p163 = por %p161, %p162
      %p164 = scmp.ne.s32.totalorder %s156, %s159
      %p165 = scmp.eq.s32.totalorder %s15, 0
      %p166 = por %p164, %p165
      %p167 = scmp.ne.s32.totalorder %s156, %s159
      %p168 = scmp.eq.s32.totalorder %s20, 1
      %p169 = por %p167, %p168
      %p170 = scmp.ne.s32.totalorder %s159, %s160
      %p171 = scmp.eq.s32.totalorder %s20, 0
      %p172 = por %p170, %p171
      %p173 = scmp.ne.s32.totalorder %s159, %s160
      %p174 = scmp.eq.s32.totalorder %s21, 1
      %p175 = por %p173, %p174
      %p177 = scmp.ne.s32.totalorder %s160, %s176
      %p178 = scmp.eq.s32.totalorder %s21, 0
      %p179 = por %p177, %p178
      %p180 = scmp.le.s32.totalorder 1, %s15
      %p181 = scmp.lt.s32.totalorder %s15, 3
      %p182 = pnand %p180, %p181
      %p183 = pneg %p182
      // Predicated region
      $region9: #{tpu_custom_call.1} parent=5 // pred_check
        _
      $region10: #{tpu_custom_call.1} parent=5 // pred_check_branch
        %185 = sbr.rel (%p182) target = $region12
      $region11: #{tpu_custom_call.1} parent=5 // pred_region
        %s186 = ssub.s32 %s15, 1
        // Predicated region
        $region13: #{tpu_custom_call.1} parent=11 // pred_check
          %p187 = pneg %p62
        $region14: #{tpu_custom_call.1} parent=11 // pred_check_branch
          %189 = sbr.rel (%p187) target = $region16
        $region15: #{tpu_custom_call.1} parent=11 // pred_region
          _
        $region16: #{tpu_custom_call.1} parent=11 // pred_fallthru
          _
        // Predicated region
        $region17: #{tpu_custom_call.1} parent=11 // pred_check
          %p190 = pneg %p83
        $region18: #{tpu_custom_call.1} parent=11 // pred_check_branch
          %192 = sbr.rel (%p190) target = $region20
        $region19: #{tpu_custom_call.1} parent=11 // pred_region
          _
        $region20: #{tpu_custom_call.1} parent=11 // pred_fallthru
          _
        // Predicated region
        $region21: #{tpu_custom_call.1} parent=11 // pred_check
          %p193 = pneg %p104
        $region22: #{tpu_custom_call.1} parent=11 // pred_check_branch
          %195 = sbr.rel (%p193) target = $region24
        $region23: #{tpu_custom_call.1} parent=11 // pred_region
          _
        $region24: #{tpu_custom_call.1} parent=11 // pred_fallthru
          _
        // Predicated region
        $region25: #{tpu_custom_call.1} parent=11 // pred_check
          %p196 = pneg %p125
        $region26: #{tpu_custom_call.1} parent=11 // pred_check_branch
          %198 = sbr.rel (%p196) target = $region28
        $region27: #{tpu_custom_call.1} parent=11 // pred_region
          _
        $region28: #{tpu_custom_call.1} parent=11 // pred_fallthru
          _
        // Predicated region
        $region29: #{tpu_custom_call.1} parent=11 // pred_check
          %p199 = pneg %p146
        $region30: #{tpu_custom_call.1} parent=11 // pred_check_branch
          %201 = sbr.rel (%p199) target = $region32
        $region31: #{tpu_custom_call.1} parent=11 // pred_region
          _
        $region32: #{tpu_custom_call.1} parent=11 // pred_fallthru
          _
      $region12: #{tpu_custom_call.1} parent=5 // pred_fallthru
        _
      %p202 = scmp.lt.s32.totalorder %s15, 2
      // Predicated region
      $region33: #{tpu_custom_call.1} parent=5 // pred_check
        %p203 = pneg %p202
      $region34: #{tpu_custom_call.1} parent=5 // pred_check_branch
        %205 = sbr.rel (%p203) target = $region36
      $region35: #{tpu_custom_call.1} parent=5 // pred_region
        // Predicated region
        $region37: #{tpu_custom_call.1} parent=35 // pred_check
          %p206 = pneg %p35
        $region38: #{tpu_custom_call.1} parent=35 // pred_check_branch
          %208 = sbr.rel (%p206) target = $region40
        $region39: #{tpu_custom_call.1} parent=35 // pred_region
          %s209 = smul.u32 8, %s15
          %p210 = scmp.lt.s32.totalorder %s209, 15
          %s211 = scalar_select %p210, %s209, 15
          %s212 = smul.addr %s211, 32
          %s213 = smul.addr %s212, 8
          %s214 = scalar_lea.vmem %s0, %s213
          %s215 = smul.u32 8, %s15
        $region40: #{tpu_custom_call.1} parent=35 // pred_fallthru
          _
      $region36: #{tpu_custom_call.1} parent=5 // pred_fallthru
        _
      %p216 = scmp.le.s32.totalorder 1, %s15
      %p217 = scmp.lt.s32.totalorder %s15, 3
      %p218 = pnand %p216, %p217
      %p219 = pneg %p218
      // Predicated region
      $region41: #{tpu_custom_call.1} parent=5 // pred_check
        _
      $region42: #{tpu_custom_call.1} parent=5 // pred_check_branch
        %221 = sbr.rel (%p218) target = $region44
      $region43: #{tpu_custom_call.1} parent=5 // pred_region
        %s222 = ssub.s32 %s15, 1
        %s223 = smul.u32 8, %s20
        %p224 = scmp.lt.s32.totalorder %s223, 15
        %s225 = scalar_select %p224, %s223, 15
        %s226 = smul.addr %s225, 32
        %s227 = smul.addr %s226, 8
        %s228 = scalar_lea.vmem %s0, %s227
        %p229 = pneg %p41
        %p230 = pneg %p38
        %p231 = pneg %p62
        %p232 = pneg %p59
        %p233 = pneg %p83
        %p234 = pneg %p80
        %p235 = pneg %p104
        %p236 = pneg %p101
        %p237 = pneg %p125
        %p238 = pneg %p122
        %p239 = pneg %p146
        %p240 = pneg %p143
        %p241 = pneg %p172
        %p242 = pneg %p169
        %s243 = sand.u32 %s159, 1
        %s244 = scalar_lea.sflag [#allocation3], %s243
        %s245 = sand.u32 %s159, 1
        %s246 = smul.addr %s245, 8
        %s247 = scalar_lea.vmem [#allocation2], %s246
        %s248 = smul.u32 8, %s20
        %p249 = scmp.lt.s32.totalorder %s248, 15
        %s250 = scalar_select %p249, %s248, 15
        %s251 = smul.addr %s250, 32
        %s252 = smul.addr %s251, 8
        %s253 = scalar_lea.vmem %s0, %s252
        %s254 = smul.u32 8, %s20
        %v255 = vld [vmem:[%s253] sm:$0xff]
        %v256 = vld [vmem:[%s253 + $0x8] sm:$0xff]
        %v257 = vld [vmem:[%s253 + $0x10] sm:$0xff]
        %v258 = vld [vmem:[%s253 + $0x18] sm:$0xff]
        %v259 = vld [vmem:[%s253 + $0x20] sm:$0xff]
        %v260 = vld [vmem:[%s253 + $0x28] sm:$0xff]
        %v261 = vld [vmem:[%s253 + $0x30] sm:$0xff]
        %v262 = vld [vmem:[%s253 + $0x38] sm:$0xff]
        %v263 = vld [vmem:[%s253 + $0x40] sm:$0xff]
        %v264 = vld [vmem:[%s253 + $0x48] sm:$0xff]
        %v265 = vld [vmem:[%s253 + $0x50] sm:$0xff]
        %v266 = vld [vmem:[%s253 + $0x58] sm:$0xff]
        %v267 = vld [vmem:[%s253 + $0x60] sm:$0xff]
        %v268 = vld [vmem:[%s253 + $0x68] sm:$0xff]
        %v269 = vld [vmem:[%s253 + $0x70] sm:$0xff]
        %v270 = vld [vmem:[%s253 + $0x78] sm:$0xff]
        %v271 = vld [vmem:[%s253 + $0x80] sm:$0xff]
        %v272 = vld [vmem:[%s253 + $0x88] sm:$0xff]
        %v273 = vld [vmem:[%s253 + $0x90] sm:$0xff]
        %v274 = vld [vmem:[%s253 + $0x98] sm:$0xff]
        %v275 = vld [vmem:[%s253 + $0xa0] sm:$0xff]
        %v276 = vld [vmem:[%s253 + $0xa8] sm:$0xff]
        %v277 = vld [vmem:[%s253 + $0xb0] sm:$0xff]
        %v278 = vld [vmem:[%s253 + $0xb8] sm:$0xff]
        %v279 = vld [vmem:[%s253 + $0xc0] sm:$0xff]
        %v280 = vld [vmem:[%s253 + $0xc8] sm:$0xff]
        %v281 = vld [vmem:[%s253 + $0xd0] sm:$0xff]
        %v282 = vld [vmem:[%s253 + $0xd8] sm:$0xff]
        %v283 = vld [vmem:[%s253 + $0xe0] sm:$0xff]
        %v284 = vld [vmem:[%s253 + $0xe8] sm:$0xff]
        %v285 = vld [vmem:[%s253 + $0xf0] sm:$0xff]
        %v286 = vld [vmem:[%s253 + $0xf8] sm:$0xff]
        %v287 = vld [vmem:[%s253 + $0x100] sm:$0xff]
        %v288 = vld [vmem:[%s253 + $0x108] sm:$0xff]
        %v289 = vld [vmem:[%s253 + $0x110] sm:$0xff]
        %v290 = vld [vmem:[%s253 + $0x118] sm:$0xff]
        %v291 = vld [vmem:[%s253 + $0x120] sm:$0xff]
        %v292 = vld [vmem:[%s253 + $0x128] sm:$0xff]
        %v293 = vld [vmem:[%s253 + $0x130] sm:$0xff]
        %v294 = vld [vmem:[%s253 + $0x138] sm:$0xff]
        %v295 = vld [vmem:[%s253 + $0x140] sm:$0xff]
        %v296 = vld [vmem:[%s253 + $0x148] sm:$0xff]
        %v297 = vld [vmem:[%s253 + $0x150] sm:$0xff]
        %v298 = vld [vmem:[%s253 + $0x158] sm:$0xff]
        %v299 = vld [vmem:[%s253 + $0x160] sm:$0xff]
        %v300 = vld [vmem:[%s253 + $0x168] sm:$0xff]
        %v301 = vld [vmem:[%s253 + $0x170] sm:$0xff]
        %v302 = vld [vmem:[%s253 + $0x178] sm:$0xff]
        %v303 = vld [vmem:[%s253 + $0x180] sm:$0xff]
        %v304 = vld [vmem:[%s253 + $0x188] sm:$0xff]
        %v305 = vld [vmem:[%s253 + $0x190] sm:$0xff]
        %v306 = vld [vmem:[%s253 + $0x198] sm:$0xff]
        %v307 = vld [vmem:[%s253 + $0x1a0] sm:$0xff]
        %v308 = vld [vmem:[%s253 + $0x1a8] sm:$0xff]
        %v309 = vld [vmem:[%s253 + $0x1b0] sm:$0xff]
        %v310 = vld [vmem:[%s253 + $0x1b8] sm:$0xff]
        %v311 = vld [vmem:[%s253 + $0x1c0] sm:$0xff]
        %v312 = vld [vmem:[%s253 + $0x1c8] sm:$0xff]
        %v313 = vld [vmem:[%s253 + $0x1d0] sm:$0xff]
        %v314 = vld [vmem:[%s253 + $0x1d8] sm:$0xff]
        %v315 = vld [vmem:[%s253 + $0x1e0] sm:$0xff]
        %v316 = vld [vmem:[%s253 + $0x1e8] sm:$0xff]
        %v317 = vld [vmem:[%s253 + $0x1f0] sm:$0xff]
        %v318 = vld [vmem:[%s253 + $0x1f8] sm:$0xff]
        %v319 = vld [vmem:[%s253 + $0x200] sm:$0xff]
        %v320 = vld [vmem:[%s253 + $0x208] sm:$0xff]
        %v321 = vld [vmem:[%s253 + $0x210] sm:$0xff]
        %v322 = vld [vmem:[%s253 + $0x218] sm:$0xff]
        %v323 = vld [vmem:[%s253 + $0x220] sm:$0xff]
        %v324 = vld [vmem:[%s253 + $0x228] sm:$0xff]
        %v325 = vld [vmem:[%s253 + $0x230] sm:$0xff]
        %v326 = vld [vmem:[%s253 + $0x238] sm:$0xff]
        %v327 = vld [vmem:[%s253 + $0x240] sm:$0xff]
        %v328 = vld [vmem:[%s253 + $0x248] sm:$0xff]
        %v329 = vld [vmem:[%s253 + $0x250] sm:$0xff]
        %v330 = vld [vmem:[%s253 + $0x258] sm:$0xff]
        %v331 = vld [vmem:[%s253 + $0x260] sm:$0xff]
        %v332 = vld [vmem:[%s253 + $0x268] sm:$0xff]
        %v333 = vld [vmem:[%s253 + $0x270] sm:$0xff]
        %v334 = vld [vmem:[%s253 + $0x278] sm:$0xff]
        %v335 = vld [vmem:[%s253 + $0x280] sm:$0xff]
        %v336 = vld [vmem:[%s253 + $0x288] sm:$0xff]
        %v337 = vld [vmem:[%s253 + $0x290] sm:$0xff]
        %v338 = vld [vmem:[%s253 + $0x298] sm:$0xff]
        %v339 = vld [vmem:[%s253 + $0x2a0] sm:$0xff]
        %v340 = vld [vmem:[%s253 + $0x2a8] sm:$0xff]
        %v341 = vld [vmem:[%s253 + $0x2b0] sm:$0xff]
        %v342 = vld [vmem:[%s253 + $0x2b8] sm:$0xff]
        %v343 = vld [vmem:[%s253 + $0x2c0] sm:$0xff]
        %v344 = vld [vmem:[%s253 + $0x2c8] sm:$0xff]
        %v345 = vld [vmem:[%s253 + $0x2d0] sm:$0xff]
        %v346 = vld [vmem:[%s253 + $0x2d8] sm:$0xff]
        %v347 = vld [vmem:[%s253 + $0x2e0] sm:$0xff]
        %v348 = vld [vmem:[%s253 + $0x2e8] sm:$0xff]
        %v349 = vld [vmem:[%s253 + $0x2f0] sm:$0xff]
        %v350 = vld [vmem:[%s253 + $0x2f8] sm:$0xff]
        %v351 = vld [vmem:[%s253 + $0x300] sm:$0xff]
        %v352 = vld [vmem:[%s253 + $0x308] sm:$0xff]
        %v353 = vld [vmem:[%s253 + $0x310] sm:$0xff]
        %v354 = vld [vmem:[%s253 + $0x318] sm:$0xff]
        %v355 = vld [vmem:[%s253 + $0x320] sm:$0xff]
        %v356 = vld [vmem:[%s253 + $0x328] sm:$0xff]
        %v357 = vld [vmem:[%s253 + $0x330] sm:$0xff]
        %v358 = vld [vmem:[%s253 + $0x338] sm:$0xff]
        %v359 = vld [vmem:[%s253 + $0x340] sm:$0xff]
        %v360 = vld [vmem:[%s253 + $0x348] sm:$0xff]
        %v361 = vld [vmem:[%s253 + $0x350] sm:$0xff]
        %v362 = vld [vmem:[%s253 + $0x358] sm:$0xff]
        %v363 = vld [vmem:[%s253 + $0x360] sm:$0xff]
        %v364 = vld [vmem:[%s253 + $0x368] sm:$0xff]
        %v365 = vld [vmem:[%s253 + $0x370] sm:$0xff]
        %v366 = vld [vmem:[%s253 + $0x378] sm:$0xff]
        %v367 = vld [vmem:[%s253 + $0x380] sm:$0xff]
        %v368 = vld [vmem:[%s253 + $0x388] sm:$0xff]
        %v369 = vld [vmem:[%s253 + $0x390] sm:$0xff]
        %v370 = vld [vmem:[%s253 + $0x398] sm:$0xff]
        %v371 = vld [vmem:[%s253 + $0x3a0] sm:$0xff]
        %v372 = vld [vmem:[%s253 + $0x3a8] sm:$0xff]
        %v373 = vld [vmem:[%s253 + $0x3b0] sm:$0xff]
        %v374 = vld [vmem:[%s253 + $0x3b8] sm:$0xff]
        %v375 = vld [vmem:[%s253 + $0x3c0] sm:$0xff]
        %v376 = vld [vmem:[%s253 + $0x3c8] sm:$0xff]
        %v377 = vld [vmem:[%s253 + $0x3d0] sm:$0xff]
        %v378 = vld [vmem:[%s253 + $0x3d8] sm:$0xff]
        %v379 = vld [vmem:[%s253 + $0x3e0] sm:$0xff]
        %v380 = vld [vmem:[%s253 + $0x3e8] sm:$0xff]
        %v381 = vld [vmem:[%s253 + $0x3f0] sm:$0xff]
        %v382 = vld [vmem:[%s253 + $0x3f8] sm:$0xff]
        %v383 = vld [vmem:[%s253 + $0x400] sm:$0xff]
        %v384 = vld [vmem:[%s253 + $0x408] sm:$0xff]
        %v385 = vld [vmem:[%s253 + $0x410] sm:$0xff]
        %v386 = vld [vmem:[%s253 + $0x418] sm:$0xff]
        %v387 = vld [vmem:[%s253 + $0x420] sm:$0xff]
        %v388 = vld [vmem:[%s253 + $0x428] sm:$0xff]
        %v389 = vld [vmem:[%s253 + $0x430] sm:$0xff]
        %v390 = vld [vmem:[%s253 + $0x438] sm:$0xff]
        %v391 = vld [vmem:[%s253 + $0x440] sm:$0xff]
        %v392 = vld [vmem:[%s253 + $0x448] sm:$0xff]
        %v393 = vld [vmem:[%s253 + $0x450] sm:$0xff]
        %v394 = vld [vmem:[%s253 + $0x458] sm:$0xff]
        %v395 = vld [vmem:[%s253 + $0x460] sm:$0xff]
        %v396 = vld [vmem:[%s253 + $0x468] sm:$0xff]
        %v397 = vld [vmem:[%s253 + $0x470] sm:$0xff]
        %v398 = vld [vmem:[%s253 + $0x478] sm:$0xff]
        %v399 = vld [vmem:[%s253 + $0x480] sm:$0xff]
        %v400 = vld [vmem:[%s253 + $0x488] sm:$0xff]
        %v401 = vld [vmem:[%s253 + $0x490] sm:$0xff]
        %v402 = vld [vmem:[%s253 + $0x498] sm:$0xff]
        %v403 = vld [vmem:[%s253 + $0x4a0] sm:$0xff]
        %v404 = vld [vmem:[%s253 + $0x4a8] sm:$0xff]
        %v405 = vld [vmem:[%s253 + $0x4b0] sm:$0xff]
        %v406 = vld [vmem:[%s253 + $0x4b8] sm:$0xff]
        %v407 = vld [vmem:[%s253 + $0x4c0] sm:$0xff]
        %v408 = vld [vmem:[%s253 + $0x4c8] sm:$0xff]
        %v409 = vld [vmem:[%s253 + $0x4d0] sm:$0xff]
        %v410 = vld [vmem:[%s253 + $0x4d8] sm:$0xff]
        %v411 = vld [vmem:[%s253 + $0x4e0] sm:$0xff]
        %v412 = vld [vmem:[%s253 + $0x4e8] sm:$0xff]
        %v413 = vld [vmem:[%s253 + $0x4f0] sm:$0xff]
        %v414 = vld [vmem:[%s253 + $0x4f8] sm:$0xff]
        %v415 = vld [vmem:[%s253 + $0x500] sm:$0xff]
        %v416 = vld [vmem:[%s253 + $0x508] sm:$0xff]
        %v417 = vld [vmem:[%s253 + $0x510] sm:$0xff]
        %v418 = vld [vmem:[%s253 + $0x518] sm:$0xff]
        %v419 = vld [vmem:[%s253 + $0x520] sm:$0xff]
        %v420 = vld [vmem:[%s253 + $0x528] sm:$0xff]
        %v421 = vld [vmem:[%s253 + $0x530] sm:$0xff]
        %v422 = vld [vmem:[%s253 + $0x538] sm:$0xff]
        %v423 = vld [vmem:[%s253 + $0x540] sm:$0xff]
        %v424 = vld [vmem:[%s253 + $0x548] sm:$0xff]
        %v425 = vld [vmem:[%s253 + $0x550] sm:$0xff]
        %v426 = vld [vmem:[%s253 + $0x558] sm:$0xff]
        %v427 = vld [vmem:[%s253 + $0x560] sm:$0xff]
        %v428 = vld [vmem:[%s253 + $0x568] sm:$0xff]
        %v429 = vld [vmem:[%s253 + $0x570] sm:$0xff]
        %v430 = vld [vmem:[%s253 + $0x578] sm:$0xff]
        %v431 = vld [vmem:[%s253 + $0x580] sm:$0xff]
        %v432 = vld [vmem:[%s253 + $0x588] sm:$0xff]
        %v433 = vld [vmem:[%s253 + $0x590] sm:$0xff]
        %v434 = vld [vmem:[%s253 + $0x598] sm:$0xff]
        %v435 = vld [vmem:[%s253 + $0x5a0] sm:$0xff]
        %v436 = vld [vmem:[%s253 + $0x5a8] sm:$0xff]
        %v437 = vld [vmem:[%s253 + $0x5b0] sm:$0xff]
        %v438 = vld [vmem:[%s253 + $0x5b8] sm:$0xff]
        %v439 = vld [vmem:[%s253 + $0x5c0] sm:$0xff]
        %v440 = vld [vmem:[%s253 + $0x5c8] sm:$0xff]
        %v441 = vld [vmem:[%s253 + $0x5d0] sm:$0xff]
        %v442 = vld [vmem:[%s253 + $0x5d8] sm:$0xff]
        %v443 = vld [vmem:[%s253 + $0x5e0] sm:$0xff]
        %v444 = vld [vmem:[%s253 + $0x5e8] sm:$0xff]
        %v445 = vld [vmem:[%s253 + $0x5f0] sm:$0xff]
        %v446 = vld [vmem:[%s253 + $0x5f8] sm:$0xff]
        %v447 = vld [vmem:[%s253 + $0x600] sm:$0xff]
        %v448 = vld [vmem:[%s253 + $0x608] sm:$0xff]
        %v449 = vld [vmem:[%s253 + $0x610] sm:$0xff]
        %v450 = vld [vmem:[%s253 + $0x618] sm:$0xff]
        %v451 = vld [vmem:[%s253 + $0x620] sm:$0xff]
        %v452 = vld [vmem:[%s253 + $0x628] sm:$0xff]
        %v453 = vld [vmem:[%s253 + $0x630] sm:$0xff]
        %v454 = vld [vmem:[%s253 + $0x638] sm:$0xff]
        %v455 = vld [vmem:[%s253 + $0x640] sm:$0xff]
        %v456 = vld [vmem:[%s253 + $0x648] sm:$0xff]
        %v457 = vld [vmem:[%s253 + $0x650] sm:$0xff]
        %v458 = vld [vmem:[%s253 + $0x658] sm:$0xff]
        %v459 = vld [vmem:[%s253 + $0x660] sm:$0xff]
        %v460 = vld [vmem:[%s253 + $0x668] sm:$0xff]
        %v461 = vld [vmem:[%s253 + $0x670] sm:$0xff]
        %v462 = vld [vmem:[%s253 + $0x678] sm:$0xff]
        %v463 = vld [vmem:[%s253 + $0x680] sm:$0xff]
        %v464 = vld [vmem:[%s253 + $0x688] sm:$0xff]
        %v465 = vld [vmem:[%s253 + $0x690] sm:$0xff]
        %v466 = vld [vmem:[%s253 + $0x698] sm:$0xff]
        %v467 = vld [vmem:[%s253 + $0x6a0] sm:$0xff]
        %v468 = vld [vmem:[%s253 + $0x6a8] sm:$0xff]
        %v469 = vld [vmem:[%s253 + $0x6b0] sm:$0xff]
        %v470 = vld [vmem:[%s253 + $0x6b8] sm:$0xff]
        %v471 = vld [vmem:[%s253 + $0x6c0] sm:$0xff]
        %v472 = vld [vmem:[%s253 + $0x6c8] sm:$0xff]
        %v473 = vld [vmem:[%s253 + $0x6d0] sm:$0xff]
        %v474 = vld [vmem:[%s253 + $0x6d8] sm:$0xff]
        %v475 = vld [vmem:[%s253 + $0x6e0] sm:$0xff]
        %v476 = vld [vmem:[%s253 + $0x6e8] sm:$0xff]
        %v477 = vld [vmem:[%s253 + $0x6f0] sm:$0xff]
        %v478 = vld [vmem:[%s253 + $0x6f8] sm:$0xff]
        %v479 = vld [vmem:[%s253 + $0x700] sm:$0xff]
        %v480 = vld [vmem:[%s253 + $0x708] sm:$0xff]
        %v481 = vld [vmem:[%s253 + $0x710] sm:$0xff]
        %v482 = vld [vmem:[%s253 + $0x718] sm:$0xff]
        %v483 = vld [vmem:[%s253 + $0x720] sm:$0xff]
        %v484 = vld [vmem:[%s253 + $0x728] sm:$0xff]
        %v485 = vld [vmem:[%s253 + $0x730] sm:$0xff]
        %v486 = vld [vmem:[%s253 + $0x738] sm:$0xff]
        %v487 = vld [vmem:[%s253 + $0x740] sm:$0xff]
        %v488 = vld [vmem:[%s253 + $0x748] sm:$0xff]
        %v489 = vld [vmem:[%s253 + $0x750] sm:$0xff]
        %v490 = vld [vmem:[%s253 + $0x758] sm:$0xff]
        %v491 = vld [vmem:[%s253 + $0x760] sm:$0xff]
        %v492 = vld [vmem:[%s253 + $0x768] sm:$0xff]
        %v493 = vld [vmem:[%s253 + $0x770] sm:$0xff]
        %v494 = vld [vmem:[%s253 + $0x778] sm:$0xff]
        %v495 = vld [vmem:[%s253 + $0x780] sm:$0xff]
        %v496 = vld [vmem:[%s253 + $0x788] sm:$0xff]
        %v497 = vld [vmem:[%s253 + $0x790] sm:$0xff]
        %v498 = vld [vmem:[%s253 + $0x798] sm:$0xff]
        %v499 = vld [vmem:[%s253 + $0x7a0] sm:$0xff]
        %v500 = vld [vmem:[%s253 + $0x7a8] sm:$0xff]
        %v501 = vld [vmem:[%s253 + $0x7b0] sm:$0xff]
        %v502 = vld [vmem:[%s253 + $0x7b8] sm:$0xff]
        %v503 = vld [vmem:[%s253 + $0x7c0] sm:$0xff]
        %v504 = vld [vmem:[%s253 + $0x7c8] sm:$0xff]
        %v505 = vld [vmem:[%s253 + $0x7d0] sm:$0xff]
        %v506 = vld [vmem:[%s253 + $0x7d8] sm:$0xff]
        %v507 = vld [vmem:[%s253 + $0x7e0] sm:$0xff]
        %v508 = vld [vmem:[%s253 + $0x7e8] sm:$0xff]
        %v509 = vld [vmem:[%s253 + $0x7f0] sm:$0xff]
        %v510 = vld [vmem:[%s253 + $0x7f8] sm:$0xff]
        %v511 = vld [vmem:[%s1] sm:$0xff]
        %v512 = vld [vmem:[%s1 + $0x8] sm:$0xff]
        %v513 = vld [vmem:[%s2] sm:$0x1]
        %v515 = vlaneseq
        %v516 = vshrl.u32 %v515, 7
        %v517 = vsub.s32 0, %v516
        %v518 = vrot.slane %v513, %v517
        %vm520 = vcmask 130048
        %v522 = vsel %vm520, %v255, 0
        %v525 = vsel %vm520, %v256, 0
        %v528 = vsel %vm520, %v257, 0
        %v531 = vsel %vm520, %v258, 0
        %v534 = vsel %vm520, %v259, 0
        %v537 = vsel %vm520, %v260, 0
        %v540 = vsel %vm520, %v261, 0
        %v543 = vsel %vm520, %v262, 0
        %v546 = vsel %vm520, %v263, 0
        %v549 = vsel %vm520, %v264, 0
        %v552 = vsel %vm520, %v265, 0
        %v555 = vsel %vm520, %v266, 0
        %v558 = vsel %vm520, %v267, 0
        %v561 = vsel %vm520, %v268, 0
        %v564 = vsel %vm520, %v269, 0
        %v567 = vsel %vm520, %v270, 0
        %v570 = vsel %vm520, %v271, 0
        %v573 = vsel %vm520, %v272, 0
        %v576 = vsel %vm520, %v273, 0
        %v579 = vsel %vm520, %v274, 0
        %v582 = vsel %vm520, %v275, 0
        %v585 = vsel %vm520, %v276, 0
        %v588 = vsel %vm520, %v277, 0
        %v591 = vsel %vm520, %v278, 0
        %v594 = vsel %vm520, %v279, 0
        %v597 = vsel %vm520, %v280, 0
        %v600 = vsel %vm520, %v281, 0
        %v603 = vsel %vm520, %v282, 0
        %v606 = vsel %vm520, %v283, 0
        %v609 = vsel %vm520, %v284, 0
        %v612 = vsel %vm520, %v285, 0
        %v615 = vsel %vm520, %v286, 0
        %v618 = vsel %vm520, %v287, 0
        %v621 = vsel %vm520, %v288, 0
        %v624 = vsel %vm520, %v289, 0
        %v627 = vsel %vm520, %v290, 0
        %v630 = vsel %vm520, %v291, 0
        %v633 = vsel %vm520, %v292, 0
        %v636 = vsel %vm520, %v293, 0
        %v639 = vsel %vm520, %v294, 0
        %v642 = vsel %vm520, %v295, 0
        %v645 = vsel %vm520, %v296, 0
        %v648 = vsel %vm520, %v297, 0
        %v651 = vsel %vm520, %v298, 0
        %v654 = vsel %vm520, %v299, 0
        %v657 = vsel %vm520, %v300, 0
        %v660 = vsel %vm520, %v301, 0
        %v663 = vsel %vm520, %v302, 0
        %v666 = vsel %vm520, %v303, 0
        %v669 = vsel %vm520, %v304, 0
        %v672 = vsel %vm520, %v305, 0
        %v675 = vsel %vm520, %v306, 0
        %v678 = vsel %vm520, %v307, 0
        %v681 = vsel %vm520, %v308, 0
        %v684 = vsel %vm520, %v309, 0
        %v687 = vsel %vm520, %v310, 0
        %v690 = vsel %vm520, %v311, 0
        %v693 = vsel %vm520, %v312, 0
        %v696 = vsel %vm520, %v313, 0
        %v699 = vsel %vm520, %v314, 0
        %v702 = vsel %vm520, %v315, 0
        %v705 = vsel %vm520, %v316, 0
        %v708 = vsel %vm520, %v317, 0
        %v711 = vsel %vm520, %v318, 0
        %v714 = vsel %vm520, %v319, 0
        %v717 = vsel %vm520, %v320, 0
        %v720 = vsel %vm520, %v321, 0
        %v723 = vsel %vm520, %v322, 0
        %v726 = vsel %vm520, %v323, 0
        %v729 = vsel %vm520, %v324, 0
        %v732 = vsel %vm520, %v325, 0
        %v735 = vsel %vm520, %v326, 0
        %v738 = vsel %vm520, %v327, 0
        %v741 = vsel %vm520, %v328, 0
        %v744 = vsel %vm520, %v329, 0
        %v747 = vsel %vm520, %v330, 0
        %v750 = vsel %vm520, %v331, 0
        %v753 = vsel %vm520, %v332, 0
        %v756 = vsel %vm520, %v333, 0
        %v759 = vsel %vm520, %v334, 0
        %v762 = vsel %vm520, %v335, 0
        %v765 = vsel %vm520, %v336, 0
        %v768 = vsel %vm520, %v337, 0
        %v771 = vsel %vm520, %v338, 0
        %v774 = vsel %vm520, %v339, 0
        %v777 = vsel %vm520, %v340, 0
        %v780 = vsel %vm520, %v341, 0
        %v783 = vsel %vm520, %v342, 0
        %v786 = vsel %vm520, %v343, 0
        %v789 = vsel %vm520, %v344, 0
        %v792 = vsel %vm520, %v345, 0
        %v795 = vsel %vm520, %v346, 0
        %v798 = vsel %vm520, %v347, 0
        %v801 = vsel %vm520, %v348, 0
        %v804 = vsel %vm520, %v349, 0
        %v807 = vsel %vm520, %v350, 0
        %v810 = vsel %vm520, %v351, 0
        %v813 = vsel %vm520, %v352, 0
        %v816 = vsel %vm520, %v353, 0
        %v819 = vsel %vm520, %v354, 0
        %v822 = vsel %vm520, %v355, 0
        %v825 = vsel %vm520, %v356, 0
        %v828 = vsel %vm520, %v357, 0
        %v831 = vsel %vm520, %v358, 0
        %v834 = vsel %vm520, %v359, 0
        %v837 = vsel %vm520, %v360, 0
        %v840 = vsel %vm520, %v361, 0
        %v843 = vsel %vm520, %v362, 0
        %v846 = vsel %vm520, %v363, 0
        %v849 = vsel %vm520, %v364, 0
        %v852 = vsel %vm520, %v365, 0
        %v855 = vsel %vm520, %v366, 0
        %v858 = vsel %vm520, %v367, 0
        %v861 = vsel %vm520, %v368, 0
        %v864 = vsel %vm520, %v369, 0
        %v867 = vsel %vm520, %v370, 0
        %v870 = vsel %vm520, %v371, 0
        %v873 = vsel %vm520, %v372, 0
        %v876 = vsel %vm520, %v373, 0
        %v879 = vsel %vm520, %v374, 0
        %v882 = vsel %vm520, %v375, 0
        %v885 = vsel %vm520, %v376, 0
        %v888 = vsel %vm520, %v377, 0
        %v891 = vsel %vm520, %v378, 0
        %v894 = vsel %vm520, %v379, 0
        %v897 = vsel %vm520, %v380, 0
        %v900 = vsel %vm520, %v381, 0
        %v903 = vsel %vm520, %v382, 0
        %v906 = vsel %vm520, %v383, 0
        %v909 = vsel %vm520, %v384, 0
        %v912 = vsel %vm520, %v385, 0
        %v915 = vsel %vm520, %v386, 0
        %v918 = vsel %vm520, %v387, 0
        %v921 = vsel %vm520, %v388, 0
        %v924 = vsel %vm520, %v389, 0
        %v927 = vsel %vm520, %v390, 0
        %v930 = vsel %vm520, %v391, 0
        %v933 = vsel %vm520, %v392, 0
        %v936 = vsel %vm520, %v393, 0
        %v939 = vsel %vm520, %v394, 0
        %v942 = vsel %vm520, %v395, 0
        %v945 = vsel %vm520, %v396, 0
        %v948 = vsel %vm520, %v397, 0
        %v951 = vsel %vm520, %v398, 0
        %v954 = vsel %vm520, %v399, 0
        %v957 = vsel %vm520, %v400, 0
        %v960 = vsel %vm520, %v401, 0
        %v963 = vsel %vm520, %v402, 0
        %v966 = vsel %vm520, %v403, 0
        %v969 = vsel %vm520, %v404, 0
        %v972 = vsel %vm520, %v405, 0
        %v975 = vsel %vm520, %v406, 0
        %v978 = vsel %vm520, %v407, 0
        %v981 = vsel %vm520, %v408, 0
        %v984 = vsel %vm520, %v409, 0
        %v987 = vsel %vm520, %v410, 0
        %v990 = vsel %vm520, %v411, 0
        %v993 = vsel %vm520, %v412, 0
        %v996 = vsel %vm520, %v413, 0
        %v999 = vsel %vm520, %v414, 0
        %v1002 = vsel %vm520, %v415, 0
        %v1005 = vsel %vm520, %v416, 0
        %v1008 = vsel %vm520, %v417, 0
        %v1011 = vsel %vm520, %v418, 0
        %v1014 = vsel %vm520, %v419, 0
        %v1017 = vsel %vm520, %v420, 0
        %v1020 = vsel %vm520, %v421, 0
        %v1023 = vsel %vm520, %v422, 0
        %v1026 = vsel %vm520, %v423, 0
        %v1029 = vsel %vm520, %v424, 0
        %v1032 = vsel %vm520, %v425, 0
        %v1035 = vsel %vm520, %v426, 0
        %v1038 = vsel %vm520, %v427, 0
        %v1041 = vsel %vm520, %v428, 0
        %v1044 = vsel %vm520, %v429, 0
        %v1047 = vsel %vm520, %v430, 0
        %v1050 = vsel %vm520, %v431, 0
        %v1053 = vsel %vm520, %v432, 0
        %v1056 = vsel %vm520, %v433, 0
        %v1059 = vsel %vm520, %v434, 0
        %v1062 = vsel %vm520, %v435, 0
        %v1065 = vsel %vm520, %v436, 0
        %v1068 = vsel %vm520, %v437, 0
        %v1071 = vsel %vm520, %v438, 0
        %v1074 = vsel %vm520, %v439, 0
        %v1077 = vsel %vm520, %v440, 0
        %v1080 = vsel %vm520, %v441, 0
        %v1083 = vsel %vm520, %v442, 0
        %v1086 = vsel %vm520, %v443, 0
        %v1089 = vsel %vm520, %v444, 0
        %v1092 = vsel %vm520, %v445, 0
        %v1095 = vsel %vm520, %v446, 0
        %v1098 = vsel %vm520, %v447, 0
        %v1101 = vsel %vm520, %v448, 0
        %v1104 = vsel %vm520, %v449, 0
        %v1107 = vsel %vm520, %v450, 0
        %v1110 = vsel %vm520, %v451, 0
        %v1113 = vsel %vm520, %v452, 0
        %v1116 = vsel %vm520, %v453, 0
        %v1119 = vsel %vm520, %v454, 0
        %v1122 = vsel %vm520, %v455, 0
        %v1125 = vsel %vm520, %v456, 0
        %v1128 = vsel %vm520, %v457, 0
        %v1131 = vsel %vm520, %v458, 0
        %v1134 = vsel %vm520, %v459, 0
        %v1137 = vsel %vm520, %v460, 0
        %v1140 = vsel %vm520, %v461, 0
        %v1143 = vsel %vm520, %v462, 0
        %v1146 = vsel %vm520, %v463, 0
        %v1149 = vsel %vm520, %v464, 0
        %v1152 = vsel %vm520, %v465, 0
        %v1155 = vsel %vm520, %v466, 0
        %v1158 = vsel %vm520, %v467, 0
        %v1161 = vsel %vm520, %v468, 0
        %v1164 = vsel %vm520, %v469, 0
        %v1167 = vsel %vm520, %v470, 0
        %v1170 = vsel %vm520, %v471, 0
        %v1173 = vsel %vm520, %v472, 0
        %v1176 = vsel %vm520, %v473, 0
        %v1179 = vsel %vm520, %v474, 0
        %v1182 = vsel %vm520, %v475, 0
        %v1185 = vsel %vm520, %v476, 0
        %v1188 = vsel %vm520, %v477, 0
        %v1191 = vsel %vm520, %v478, 0
        %v1194 = vsel %vm520, %v479, 0
        %v1197 = vsel %vm520, %v480, 0
        %v1200 = vsel %vm520, %v481, 0
        %v1203 = vsel %vm520, %v482, 0
        %v1206 = vsel %vm520, %v483, 0
        %v1209 = vsel %vm520, %v484, 0
        %v1212 = vsel %vm520, %v485, 0
        %v1215 = vsel %vm520, %v486, 0
        %v1218 = vsel %vm520, %v487, 0
        %v1221 = vsel %vm520, %v488, 0
        %v1224 = vsel %vm520, %v489, 0
        %v1227 = vsel %vm520, %v490, 0
        %v1230 = vsel %vm520, %v491, 0
        %v1233 = vsel %vm520, %v492, 0
        %v1236 = vsel %vm520, %v493, 0
        %v1239 = vsel %vm520, %v494, 0
        %v1242 = vsel %vm520, %v495, 0
        %v1245 = vsel %vm520, %v496, 0
        %v1248 = vsel %vm520, %v497, 0
        %v1251 = vsel %vm520, %v498, 0
        %v1254 = vsel %vm520, %v499, 0
        %v1257 = vsel %vm520, %v500, 0
        %v1260 = vsel %vm520, %v501, 0
        %v1263 = vsel %vm520, %v502, 0
        %v1266 = vsel %vm520, %v503, 0
        %v1269 = vsel %vm520, %v504, 0
        %v1272 = vsel %vm520, %v505, 0
        %v1275 = vsel %vm520, %v506, 0
        %v1278 = vsel %vm520, %v507, 0
        %v1281 = vsel %vm520, %v508, 0
        %v1284 = vsel %vm520, %v509, 0
        %v1287 = vsel %vm520, %v510, 0
        %1289 = vmatprep.subr.mxu0 0.0
        %1290 = vmatpush1.msra.mxu0 %v511
        %1291 = vmatprep.subr.mxu0 0.0
        %1292 = vmatpush1.msra.mxu0 %v512
        %1293 = vmatprep.subr.mxu0 0.0
        %1294 = vmatpush1.msra.mxu0 0.0
        %1295 = vmatprep.subr.mxu0 0.0
        %1296 = vmatpush1.msra.mxu0 0.0
        %1297 = vmatprep.subr.mxu0 0.0
        %1298 = vmatpush1.msra.mxu0 0.0
        %1299 = vmatprep.subr.mxu0 0.0
        %1300 = vmatpush1.msra.mxu0 0.0
        %1301 = vmatprep.subr.mxu0 0.0
        %1302 = vmatpush1.msra.mxu0 0.0
        %1303 = vmatprep.subr.mxu0 0.0
        %1304 = vmatpush1.msra.mxu0 0.0
        %1305 = vmatprep.subr.mxu0 0.0
        %1306 = vmatpush1.msra.mxu0 0.0
        %1307 = vmatprep.subr.mxu0 0.0
        %1308 = vmatpush1.msra.mxu0 0.0
        %1309 = vmatprep.subr.mxu0 0.0
        %1310 = vmatpush1.msra.mxu0 0.0
        %1311 = vmatprep.subr.mxu0 0.0
        %1312 = vmatpush1.msra.mxu0 0.0
        %1313 = vmatprep.subr.mxu0 0.0
        %1314 = vmatpush1.msra.mxu0 0.0
        %1315 = vmatprep.subr.mxu0 0.0
        %1316 = vmatpush1.msra.mxu0 0.0
        %1317 = vmatprep.subr.mxu0 0.0
        %1318 = vmatpush1.msra.mxu0 0.0
        %1319 = vmatprep.subr.mxu0 0.0
        %1320 = vmatpush1.msra.mxu0 0.0
        %1321 = vmatprep.subr.mxu0 0.0
        %1322 = vmatpush1.msra.mxu0 0.0
        %1323 = vmatprep.subr.mxu0 0.0
        %1324 = vmatpush1.msra.mxu0 0.0
        %1325 = vmatprep.subr.mxu0 0.0
        %1326 = vmatpush1.msra.mxu0 0.0
        %1327 = vmatprep.subr.mxu0 0.0
        %1328 = vmatpush1.msra.mxu0 0.0
        %1329 = vmatprep.subr.mxu0 0.0
        %1330 = vmatpush1.msra.mxu0 0.0
        %1331 = vmatprep.subr.mxu0 0.0
        %1332 = vmatpush1.msra.mxu0 0.0
        %1333 = vmatprep.subr.mxu0 0.0
        %1334 = vmatpush1.msra.mxu0 0.0
        %1335 = vmatprep.subr.mxu0 0.0
        %1336 = vmatpush1.msra.mxu0 0.0
        %1337 = vmatprep.subr.mxu0 0.0
        %1338 = vmatpush1.msra.mxu0 0.0
        %1339 = vmatprep.subr.mxu0 0.0
        %1340 = vmatpush1.msra.mxu0 0.0
        %1341 = vmatprep.subr.mxu0 0.0
        %1342 = vmatpush1.msra.mxu0 0.0
        %1343 = vmatprep.subr.mxu0 0.0
        %1344 = vmatpush1.msra.mxu0 0.0
        %1345 = vmatprep.subr.mxu0 0.0
        %1346 = vmatpush1.msra.mxu0 0.0
        %1347 = vmatprep.subr.mxu0 0.0
        %1348 = vmatpush1.msra.mxu0 0.0
        %1349 = vmatprep.subr.mxu0 0.0
        %1350 = vmatpush1.msra.mxu0 0.0
        %1351 = vmatprep.subr.mxu0 0.0
        %1352 = vmatpush1.msra.mxu0 0.0
        %1353 = vmatprep.mubr.f32.mxu0 0.0
        %1354 = vmatmul.mubr.f32.gmra.mrb[0].mxu0 %v522
        %v1355 = vpop.f32.mrb[0].mxu0
        %v1356 = vadd.f32 %v518, %v1355
        %v1357 = vpop.f32.mrb[0].mxu0
        %1358 = vmatprep.mubr.f32.mxu0 0.0
        %1359 = vmatmul.mubr.f32.gmra.mrb[0].mxu0 %v525
        %v1360 = vpop.f32.mrb[0].mxu0
        %v1361 = vadd.f32 %v518, %v1360
        %v1362 = vpop.f32.mrb[0].mxu0
        %1363 = vmatprep.mubr.f32.mxu0 0.0
        %1364 = vmatmul.mubr.f32.gmra.mrb[0].mxu0 %v528
        %v1365 = vpop.f32.mrb[0].mxu0
        %v1366 = vadd.f32 %v518, %v1365
        %v1367 = vpop.f32.mrb[0].mxu0
        %1368 = vmatprep.mubr.f32.mxu0 0.0
        %1369 = vmatmul.mubr.f32.gmra.mrb[0].mxu0 %v531
        %v1370 = vpop.f32.mrb[0].mxu0
        %v1371 = vadd.f32 %v518, %v1370
        %v1372 = vpop.f32.mrb[0].mxu0
        %1373 = vmatprep.mubr.f32.mxu0 0.0
        %1374 = vmatmul.mubr.f32.gmra.mrb[0].mxu0 %v534
        %v1375 = vpop.f32.mrb[0].mxu0
        %v1376 = vadd.f32 %v518, %v1375
        %v1377 = vpop.f32.mrb[0].mxu0
        %1378 = vmatprep.mubr.f32.mxu0 0.0
        %1379 = vmatmul.mubr.f32.gmra.mrb[0].mxu0 %v537
        %v1380 = vpop.f32.mrb[0].mxu0
        %v1381 = vadd.f32 %v518, %v1380
        %v1382 = vpop.f32.mrb[0].mxu0
        %1383 = vmatprep.mubr.f32.mxu0 0.0
        %1384 = vmatmul.mubr.f32.gmra.mrb[0].mxu0 %v540
        %v1385 = vpop.f32.mrb[0].mxu0
        %v1386 = vadd.f32 %v518, %v1385
        %v1387 = vpop.f32.mrb[0].mxu0
        %1388 = vmatprep.mubr.f32.mxu0 0.0
        %1389 = vmatmul.mubr.f32.gmra.mrb[0].mxu0 %v543
        %v1390 = vpop.f32.mrb[0].mxu0
        %v1391 = vadd.f32 %v518, %v1390
        %v1392 = vpop.f32.mrb[0].mxu0
        %1393 = vmatprep.mubr.f32.mxu0 0.0
        %1394 = vmatmul.mubr.f32.gmra.mrb[0].mxu0 %v546
        %v1395 = vpop.f32.mrb[0].mxu0
        %v1396 = vadd.f32 %v518, %v1395
        %v1397 = vpop.f32.mrb[0].mxu0
        %1398 = vmatprep.mubr.f32.mxu0 0.0
        %1399 = vmatmul.mubr.f32.gmra.mrb[0].mxu0 %v549
        %v1400 = vpop.f32.mrb[0].mxu0
        %v1401 = vadd.f32 %v518, %v1400
        %v1402 = vpop.f32.mrb[0].mxu0
        %1403 = vmatprep.mubr.f32.mxu0 0.0
        %1404 = vmatmul.mubr.f32.gmra.mrb[0].mxu0 %v552
        %v1405 = vpop.f32.mrb[0].mxu0
        %v1406 = vadd.f32 %v518, %v1405
        %v1407 = vpop.f32.mrb[0].mxu0
        %1408 = vmatprep.mubr.f32.mxu0 0.0
        %1409 = vmatmul.mubr.f32.gmra.mrb[0].mxu0 %v555
        %v1410 = vpop.f32.mrb[0].mxu0
        %v1411 = vadd.f32 %v518, %v1410
        %v1412 = vpop.f32.mrb[0].mxu0
        %1413 = vmatprep.mubr.f32.mxu0 0.0
        %1414 = vmatmul.mubr.f32.gmra.mrb[0].mxu0 %v558
        %v1415 = vpop.f32.mrb[0].mxu0
        %v1416 = vadd.f32 %v518, %v1415
        %v1417 = vpop.f32.mrb[0].mxu0
        %1418 = vmatprep.mubr.f32.mxu0 0.0
        %1419 = vmatmul.mubr.f32.gmra.mrb[0].mxu0 %v561
        %v1420 = vpop.f32.mrb[0].mxu0
        %v1421 = vadd.f32 %v518, %v1420
        %v1422 = vpop.f32.mrb[0].mxu0
        %1423 = vmatprep.mubr.f32.mxu0 0.0
        %1424 = vmatmul.mubr.f32.gmra.mrb[0].mxu0 %v564
        %v1425 = vpop.f32.mrb[0].mxu0
        %v1426 = vadd.f32 %v518, %v1425
        %v1427 = vpop.f32.mrb[0].mxu0
        %1428 = vmatprep.mubr.f32.mxu0 0.0
        %1429 = vmatmul.mubr.f32.gmra.mrb[0].mxu0 %v567
        %v1430 = vpop.f32.mrb[0].mxu0
        %v1431 = vadd.f32 %v518, %v1430
        %v1432 = vpop.f32.mrb[0].mxu0
        %1433 = vmatprep.mubr.f32.mxu0 0.0
        %1434 = vmatmul.mubr.f32.gmra.mrb[0].mxu0 %v570
        %v1435 = vpop.f32.mrb[0].mxu0
        %v1436 = vadd.f32 %v518, %v1435
        %v1437 = vpop.f32.mrb[0].mxu0
        %1438 = vmatprep.mubr.f32.mxu0 0.0
        %1439 = vmatmul.mubr.f32.gmra.mrb[0].mxu0 %v573
        %v1440 = vpop.f32.mrb[0].mxu0
        %v1441 = vadd.f32 %v518, %v1440
        %v1442 = vpop.f32.mrb[0].mxu0
        %1443 = vmatprep.mubr.f32.mxu0 0.0
        %1444 = vmatmul.mubr.f32.gmra.mrb[0].mxu0 %v576
        %v1445 = vpop.f32.mrb[0].mxu0
        %v1446 = vadd.f32 %v518, %v1445
        %v1447 = vpop.f32.mrb[0].mxu0
        %1448 = vmatprep.mubr.f32.mxu0 0.0
        %1449 = vmatmul.mubr.f32.gmra.mrb[0].mxu0 %v579
        %v1450 = vpop.f32.mrb[0].mxu0
        %v1451 = vadd.f32 %v518, %v1450
        %v1452 = vpop.f32.mrb[0].mxu0
        %1453 = vmatprep.mubr.f32.mxu0 0.0
        %1454 = vmatmul.mubr.f32.gmra.mrb[0].mxu0 %v582
        %v1455 = vpop.f32.mrb[0].mxu0
        %v1456 = vadd.f32 %v518, %v1455
        %v1457 = vpop.f32.mrb[0].mxu0
        %1458 = vmatprep.mubr.f32.mxu0 0.0
        %1459 = vmatmul.mubr.f32.gmra.mrb[0].mxu0 %v585
        %v1460 = vpop.f32.mrb[0].mxu0
        %v1461 = vadd.f32 %v518, %v1460
        %v1462 = vpop.f32.mrb[0].mxu0
        %1463 = vmatprep.mubr.f32.mxu0 0.0
        %1464 = vmatmul.mubr.f32.gmra.mrb[0].mxu0 %v588
        %v1465 = vpop.f32.mrb[0].mxu0
        %v1466 = vadd.f32 %v518, %v1465
        %v1467 = vpop.f32.mrb[0].mxu0
        %1468 = vmatprep.mubr.f32.mxu0 0.0
        %1469 = vmatmul.mubr.f32.gmra.mrb[0].mxu0 %v591
        %v1470 = vpop.f32.mrb[0].mxu0
        %v1471 = vadd.f32 %v518, %v1470
        %v1472 = vpop.f32.mrb[0].mxu0
        %1473 = vmatprep.mubr.f32.mxu0 0.0
        %1474 = vmatmul.mubr.f32.gmra.mrb[0].mxu0 %v594
        %v1475 = vpop.f32.mrb[0].mxu0
        %v1476 = vadd.f32 %v518, %v1475
        %v1477 = vpop.f32.mrb[0].mxu0
        %1478 = vmatprep.mubr.f32.mxu0 0.0
        %1479 = vmatmul.mubr.f32.gmra.mrb[0].mxu0 %v597
        %v1480 = vpop.f32.mrb[0].mxu0
        %v1481 = vadd.f32 %v518, %v1480
        %v1482 = vpop.f32.mrb[0].mxu0
        %1483 = vmatprep.mubr.f32.mxu0 0.0
        %1484 = vmatmul.mubr.f32.gmra.mrb[0].mxu0 %v600
        %v1485 = vpop.f32.mrb[0].mxu0
        %v1486 = vadd.f32 %v518, %v1485
        %v1487 = vpop.f32.mrb[0].mxu0
        %1488 = vmatprep.mubr.f32.mxu0 0.0
        %1489 = vmatmul.mubr.f32.gmra.mrb[0].mxu0 %v603
        %v1490 = vpop.f32.mrb[0].mxu0
        %v1491 = vadd.f32 %v518, %v1490
        %v1492 = vpop.f32.mrb[0].mxu0
        %1493 = vmatprep.mubr.f32.mxu0 0.0
        %1494 = vmatmul.mubr.f32.gmra.mrb[0].mxu0 %v606
        %v1495 = vpop.f32.mrb[0].mxu0
        %v1496 = vadd.f32 %v518, %v1495
        %v1497 = vpop.f32.mrb[0].mxu0
        %1498 = vmatprep.mubr.f32.mxu0 0.0
        %1499 = vmatmul.mubr.f32.gmra.mrb[0].mxu0 %v609
        %v1500 = vpop.f32.mrb[0].mxu0
        %v1501 = vadd.f32 %v518, %v1500
        %v1502 = vpop.f32.mrb[0].mxu0
        %1503 = vmatprep.mubr.f32.mxu0 0.0
        %1504 = vmatmul.mubr.f32.gmra.mrb[0].mxu0 %v612
        %v1505 = vpop.f32.mrb[0].mxu0
        %v1506 = vadd.f32 %v518, %v1505
        %v1507 = vpop.f32.mrb[0].mxu0
        %1508 = vmatprep.mubr.f32.mxu0 0.0
        %1509 = vmatmul.mubr.f32.gmra.mrb[0].mxu0 %v615
        %v1510 = vpop.f32.mrb[0].mxu0
        %v1511 = vadd.f32 %v518, %v1510
        %v1512 = vpop.f32.mrb[0].mxu0
        %1513 = vmatprep.mubr.f32.mxu0 0.0
        %1514 = vmatmul.mubr.f32.gmra.mrb[0].mxu0 %v618
        %v1515 = vpop.f32.mrb[0].mxu0
        %v1516 = vadd.f32 %v518, %v1515
        %v1517 = vpop.f32.mrb[0].mxu0
        %1518 = vmatprep.mubr.f32.mxu0 0.0
        %1519 = vmatmul.mubr.f32.gmra.mrb[0].mxu0 %v621
        %v1520 = vpop.f32.mrb[0].mxu0
        %v1521 = vadd.f32 %v518, %v1520
        %v1522 = vpop.f32.mrb[0].mxu0
        %1523 = vmatprep.mubr.f32.mxu0 0.0
        %1524 = vmatmul.mubr.f32.gmra.mrb[0].mxu0 %v624
        %v1525 = vpop.f32.mrb[0].mxu0
        %v1526 = vadd.f32 %v518, %v1525
        %v1527 = vpop.f32.mrb[0].mxu0
        %1528 = vmatprep.mubr.f32.mxu0 0.0
        %1529 = vmatmul.mubr.f32.gmra.mrb[0].mxu0 %v627
        %v1530 = vpop.f32.mrb[0].mxu0
        %v1531 = vadd.f32 %v518, %v1530
        %v1532 = vpop.f32.mrb[0].mxu0
        %1533 = vmatprep.mubr.f32.mxu0 0.0
        %1534 = vmatmul.mubr.f32.gmra.mrb[0].mxu0 %v630
        %v1535 = vpop.f32.mrb[0].mxu0
        %v1536 = vadd.f32 %v518, %v1535
        %v1537 = vpop.f32.mrb[0].mxu0
        %1538 = vmatprep.mubr.f32.mxu0 0.0
        %1539 = vmatmul.mubr.f32.gmra.mrb[0].mxu0 %v633
        %v1540 = vpop.f32.mrb[0].mxu0
        %v1541 = vadd.f32 %v518, %v1540
        %v1542 = vpop.f32.mrb[0].mxu0
        %1543 = vmatprep.mubr.f32.mxu0 0.0
        %1544 = vmatmul.mubr.f32.gmra.mrb[0].mxu0 %v636
        %v1545 = vpop.f32.mrb[0].mxu0
        %v1546 = vadd.f32 %v518, %v1545
        %v1547 = vpop.f32.mrb[0].mxu0
        %1548 = vmatprep.mubr.f32.mxu0 0.0
        %1549 = vmatmul.mubr.f32.gmra.mrb[0].mxu0 %v639
        %v1550 = vpop.f32.mrb[0].mxu0
        %v1551 = vadd.f32 %v518, %v1550
        %v1552 = vpop.f32.mrb[0].mxu0
        %1553 = vmatprep.mubr.f32.mxu0 0.0
        %1554 = vmatmul.mubr.f32.gmra.mrb[0].mxu0 %v642
        %v1555 = vpop.f32.mrb[0].mxu0
        %v1556 = vadd.f32 %v518, %v1555
        %v1557 = vpop.f32.mrb[0].mxu0
        %1558 = vmatprep.mubr.f32.mxu0 0.0
        %1559 = vmatmul.mubr.f32.gmra.mrb[0].mxu0 %v645
        %v1560 = vpop.f32.mrb[0].mxu0
        %v1561 = vadd.f32 %v518, %v1560
        %v1562 = vpop.f32.mrb[0].mxu0
        %1563 = vmatprep.mubr.f32.mxu0 0.0
        %1564 = vmatmul.mubr.f32.gmra.mrb[0].mxu0 %v648
        %v1565 = vpop.f32.mrb[0].mxu0
        %v1566 = vadd.f32 %v518, %v1565
        %v1567 = vpop.f32.mrb[0].mxu0
        %1568 = vmatprep.mubr.f32.mxu0 0.0
        %1569 = vmatmul.mubr.f32.gmra.mrb[0].mxu0 %v651
        %v1570 = vpop.f32.mrb[0].mxu0
        %v1571 = vadd.f32 %v518, %v1570
        %v1572 = vpop.f32.mrb[0].mxu0
        %1573 = vmatprep.mubr.f32.mxu0 0.0
        %1574 = vmatmul.mubr.f32.gmra.mrb[0].mxu0 %v654
        %v1575 = vpop.f32.mrb[0].mxu0
        %v1576 = vadd.f32 %v518, %v1575
        %v1577 = vpop.f32.mrb[0].mxu0
        %1578 = vmatprep.mubr.f32.mxu0 0.0
        %1579 = vmatmul.mubr.f32.gmra.mrb[0].mxu0 %v657
        %v1580 = vpop.f32.mrb[0].mxu0
        %v1581 = vadd.f32 %v518, %v1580
        %v1582 = vpop.f32.mrb[0].mxu0
        %1583 = vmatprep.mubr.f32.mxu0 0.0
        %1584 = vmatmul.mubr.f32.gmra.mrb[0].mxu0 %v660
        %v1585 = vpop.f32.mrb[0].mxu0
        %v1586 = vadd.f32 %v518, %v1585
        %v1587 = vpop.f32.mrb[0].mxu0
        %1588 = vmatprep.mubr.f32.mxu0 0.0
        %1589 = vmatmul.mubr.f32.gmra.mrb[0].mxu0 %v663
        %v1590 = vpop.f32.mrb[0].mxu0
        %v1591 = vadd.f32 %v518, %v1590
        %v1592 = vpop.f32.mrb[0].mxu0
        %1593 = vmatprep.mubr.f32.mxu0 0.0
        %1594 = vmatmul.mubr.f32.gmra.mrb[0].mxu0 %v666
        %v1595 = vpop.f32.mrb[0].mxu0
        %v1596 = vadd.f32 %v518, %v1595
        %v1597 = vpop.f32.mrb[0].mxu0
        %1598 = vmatprep.mubr.f32.mxu0 0.0
        %1599 = vmatmul.mubr.f32.gmra.mrb[0].mxu0 %v669
        %v1600 = vpop.f32.mrb[0].mxu0
        %v1601 = vadd.f32 %v518, %v1600
        %v1602 = vpop.f32.mrb[0].mxu0
        %1603 = vmatprep.mubr.f32.mxu0 0.0
        %1604 = vmatmul.mubr.f32.gmra.mrb[0].mxu0 %v672
        %v1605 = vpop.f32.mrb[0].mxu0
        %v1606 = vadd.f32 %v518, %v1605
        %v1607 = vpop.f32.mrb[0].mxu0
        %1608 = vmatprep.mubr.f32.mxu0 0.0
        %1609 = vmatmul.mubr.f32.gmra.mrb[0].mxu0 %v675
        %v1610 = vpop.f32.mrb[0].mxu0
        %v1611 = vadd.f32 %v518, %v1610
        %v1612 = vpop.f32.mrb[0].mxu0
        %1613 = vmatprep.mubr.f32.mxu0 0.0
        %1614 = vmatmul.mubr.f32.gmra.mrb[0].mxu0 %v678
        %v1615 = vpop.f32.mrb[0].mxu0
        %v1616 = vadd.f32 %v518, %v1615
        %v1617 = vpop.f32.mrb[0].mxu0
        %1618 = vmatprep.mubr.f32.mxu0 0.0
        %1619 = vmatmul.mubr.f32.gmra.mrb[0].mxu0 %v681
        %v1620 = vpop.f32.mrb[0].mxu0
        %v1621 = vadd.f32 %v518, %v1620
        %v1622 = vpop.f32.mrb[0].mxu0
        %1623 = vmatprep.mubr.f32.mxu0 0.0
        %1624 = vmatmul.mubr.f32.gmra.mrb[0].mxu0 %v684
        %v1625 = vpop.f32.mrb[0].mxu0
        %v1626 = vadd.f32 %v518, %v1625
        %v1627 = vpop.f32.mrb[0].mxu0
        %1628 = vmatprep.mubr.f32.mxu0 0.0
        %1629 = vmatmul.mubr.f32.gmra.mrb[0].mxu0 %v687
        %v1630 = vpop.f32.mrb[0].mxu0
        %v1631 = vadd.f32 %v518, %v1630
        %v1632 = vpop.f32.mrb[0].mxu0
        %1633 = vmatprep.mubr.f32.mxu0 0.0
        %1634 = vmatmul.mubr.f32.gmra.mrb[0].mxu0 %v690
        %v1635 = vpop.f32.mrb[0].mxu0
        %v1636 = vadd.f32 %v518, %v1635
        %v1637 = vpop.f32.mrb[0].mxu0
        %1638 = vmatprep.mubr.f32.mxu0 0.0
        %1639 = vmatmul.mubr.f32.gmra.mrb[0].mxu0 %v693
        %v1640 = vpop.f32.mrb[0].mxu0
        %v1641 = vadd.f32 %v518, %v1640
        %v1642 = vpop.f32.mrb[0].mxu0
        %1643 = vmatprep.mubr.f32.mxu0 0.0
        %1644 = vmatmul.mubr.f32.gmra.mrb[0].mxu0 %v696
        %v1645 = vpop.f32.mrb[0].mxu0
        %v1646 = vadd.f32 %v518, %v1645
        %v1647 = vpop.f32.mrb[0].mxu0
        %1648 = vmatprep.mubr.f32.mxu0 0.0
        %1649 = vmatmul.mubr.f32.gmra.mrb[0].mxu0 %v699
        %v1650 = vpop.f32.mrb[0].mxu0
        %v1651 = vadd.f32 %v518, %v1650
        %v1652 = vpop.f32.mrb[0].mxu0
        %1653 = vmatprep.mubr.f32.mxu0 0.0
        %1654 = vmatmul.mubr.f32.gmra.mrb[0].mxu0 %v702
        %v1655 = vpop.f32.mrb[0].mxu0
        %v1656 = vadd.f32 %v518, %v1655
        %v1657 = vpop.f32.mrb[0].mxu0
        %1658 = vmatprep.mubr.f32.mxu0 0.0
        %1659 = vmatmul.mubr.f32.gmra.mrb[0].mxu0 %v705
        %v1660 = vpop.f32.mrb[0].mxu0
        %v1661 = vadd.f32 %v518, %v1660
        %v1662 = vpop.f32.mrb[0].mxu0
        %1663 = vmatprep.mubr.f32.mxu0 0.0
        %1664 = vmatmul.mubr.f32.gmra.mrb[0].mxu0 %v708
        %v1665 = vpop.f32.mrb[0].mxu0
        %v1666 = vadd.f32 %v518, %v1665
        %v1667 = vpop.f32.mrb[0].mxu0
        %1668 = vmatprep.mubr.f32.mxu0 0.0
        %1669 = vmatmul.mubr.f32.gmra.mrb[0].mxu0 %v711
        %v1670 = vpop.f32.mrb[0].mxu0
        %v1671 = vadd.f32 %v518, %v1670
        %v1672 = vpop.f32.mrb[0].mxu0
        %1673 = vmatprep.mubr.f32.mxu0 0.0
        %1674 = vmatmul.mubr.f32.gmra.mrb[0].mxu0 %v714
        %v1675 = vpop.f32.mrb[0].mxu0
        %v1676 = vadd.f32 %v518, %v1675
        %v1677 = vpop.f32.mrb[0].mxu0
        %1678 = vmatprep.mubr.f32.mxu0 0.0
        %1679 = vmatmul.mubr.f32.gmra.mrb[0].mxu0 %v717
        %v1680 = vpop.f32.mrb[0].mxu0
        %v1681 = vadd.f32 %v518, %v1680
        %v1682 = vpop.f32.mrb[0].mxu0
        %1683 = vmatprep.mubr.f32.mxu0 0.0
        %1684 = vmatmul.mubr.f32.gmra.mrb[0].mxu0 %v720
        %v1685 = vpop.f32.mrb[0].mxu0
        %v1686 = vadd.f32 %v518, %v1685
        %v1687 = vpop.f32.mrb[0].mxu0
        %1688 = vmatprep.mubr.f32.mxu0 0.0
        %1689 = vmatmul.mubr.f32.gmra.mrb[0].mxu0 %v723
        %v1690 = vpop.f32.mrb[0].mxu0
        %v1691 = vadd.f32 %v518, %v1690
        %v1692 = vpop.f32.mrb[0].mxu0
        %1693 = vmatprep.mubr.f32.mxu0 0.0
        %1694 = vmatmul.mubr.f32.gmra.mrb[0].mxu0 %v726
        %v1695 = vpop.f32.mrb[0].mxu0
        %v1696 = vadd.f32 %v518, %v1695
        %v1697 = vpop.f32.mrb[0].mxu0
        %1698 = vmatprep.mubr.f32.mxu0 0.0
        %1699 = vmatmul.mubr.f32.gmra.mrb[0].mxu0 %v729
        %v1700 = vpop.f32.mrb[0].mxu0
        %v1701 = vadd.f32 %v518, %v1700
        %v1702 = vpop.f32.mrb[0].mxu0
        %1703 = vmatprep.mubr.f32.mxu0 0.0
        %1704 = vmatmul.mubr.f32.gmra.mrb[0].mxu0 %v732
        %v1705 = vpop.f32.mrb[0].mxu0
        %v1706 = vadd.f32 %v518, %v1705
        %v1707 = vpop.f32.mrb[0].mxu0
        %1708 = vmatprep.mubr.f32.mxu0 0.0
        %1709 = vmatmul.mubr.f32.gmra.mrb[0].mxu0 %v735
        %v1710 = vpop.f32.mrb[0].mxu0
        %v1711 = vadd.f32 %v518, %v1710
        %v1712 = vpop.f32.mrb[0].mxu0
        %1713 = vmatprep.mubr.f32.mxu0 0.0
        %1714 = vmatmul.mubr.f32.gmra.mrb[0].mxu0 %v738
        %v1715 = vpop.f32.mrb[0].mxu0
        %v1716 = vadd.f32 %v518, %v1715
        %v1717 = vpop.f32.mrb[0].mxu0
        %1718 = vmatprep.mubr.f32.mxu0 0.0
        %1719 = vmatmul.mubr.f32.gmra.mrb[0].mxu0 %v741
        %v1720 = vpop.f32.mrb[0].mxu0
        %v1721 = vadd.f32 %v518, %v1720
        %v1722 = vpop.f32.mrb[0].mxu0
        %1723 = vmatprep.mubr.f32.mxu0 0.0
        %1724 = vmatmul.mubr.f32.gmra.mrb[0].mxu0 %v744
        %v1725 = vpop.f32.mrb[0].mxu0
        %v1726 = vadd.f32 %v518, %v1725
        %v1727 = vpop.f32.mrb[0].mxu0
        %1728 = vmatprep.mubr.f32.mxu0 0.0
        %1729 = vmatmul.mubr.f32.gmra.mrb[0].mxu0 %v747
        %v1730 = vpop.f32.mrb[0].mxu0
        %v1731 = vadd.f32 %v518, %v1730
        %v1732 = vpop.f32.mrb[0].mxu0
        %1733 = vmatprep.mubr.f32.mxu0 0.0
        %1734 = vmatmul.mubr.f32.gmra.mrb[0].mxu0 %v750
        %v1735 = vpop.f32.mrb[0].mxu0
        %v1736 = vadd.f32 %v518, %v1735
        %v1737 = vpop.f32.mrb[0].mxu0
        %1738 = vmatprep.mubr.f32.mxu0 0.0
        %1739 = vmatmul.mubr.f32.gmra.mrb[0].mxu0 %v753
        %v1740 = vpop.f32.mrb[0].mxu0
        %v1741 = vadd.f32 %v518, %v1740
        %v1742 = vpop.f32.mrb[0].mxu0
        %1743 = vmatprep.mubr.f32.mxu0 0.0
        %1744 = vmatmul.mubr.f32.gmra.mrb[0].mxu0 %v756
        %v1745 = vpop.f32.mrb[0].mxu0
        %v1746 = vadd.f32 %v518, %v1745
        %v1747 = vpop.f32.mrb[0].mxu0
        %1748 = vmatprep.mubr.f32.mxu0 0.0
        %1749 = vmatmul.mubr.f32.gmra.mrb[0].mxu0 %v759
        %v1750 = vpop.f32.mrb[0].mxu0
        %v1751 = vadd.f32 %v518, %v1750
        %v1752 = vpop.f32.mrb[0].mxu0
        %1753 = vmatprep.mubr.f32.mxu0 0.0
        %1754 = vmatmul.mubr.f32.gmra.mrb[0].mxu0 %v762
        %v1755 = vpop.f32.mrb[0].mxu0
        %v1756 = vadd.f32 %v518, %v1755
        %v1757 = vpop.f32.mrb[0].mxu0
        %1758 = vmatprep.mubr.f32.mxu0 0.0
        %1759 = vmatmul.mubr.f32.gmra.mrb[0].mxu0 %v765
        %v1760 = vpop.f32.mrb[0].mxu0
        %v1761 = vadd.f32 %v518, %v1760
        %v1762 = vpop.f32.mrb[0].mxu0
        %1763 = vmatprep.mubr.f32.mxu0 0.0
        %1764 = vmatmul.mubr.f32.gmra.mrb[0].mxu0 %v768
        %v1765 = vpop.f32.mrb[0].mxu0
        %v1766 = vadd.f32 %v518, %v1765
        %v1767 = vpop.f32.mrb[0].mxu0
        %1768 = vmatprep.mubr.f32.mxu0 0.0
        %1769 = vmatmul.mubr.f32.gmra.mrb[0].mxu0 %v771
        %v1770 = vpop.f32.mrb[0].mxu0
        %v1771 = vadd.f32 %v518, %v1770
        %v1772 = vpop.f32.mrb[0].mxu0
        %1773 = vmatprep.mubr.f32.mxu0 0.0
        %1774 = vmatmul.mubr.f32.gmra.mrb[0].mxu0 %v774
        %v1775 = vpop.f32.mrb[0].mxu0
        %v1776 = vadd.f32 %v518, %v1775
        %v1777 = vpop.f32.mrb[0].mxu0
        %1778 = vmatprep.mubr.f32.mxu0 0.0
        %1779 = vmatmul.mubr.f32.gmra.mrb[0].mxu0 %v777
        %v1780 = vpop.f32.mrb[0].mxu0
        %v1781 = vadd.f32 %v518, %v1780
        %v1782 = vpop.f32.mrb[0].mxu0
        %1783 = vmatprep.mubr.f32.mxu0 0.0
        %1784 = vmatmul.mubr.f32.gmra.mrb[0].mxu0 %v780
        %v1785 = vpop.f32.mrb[0].mxu0
        %v1786 = vadd.f32 %v518, %v1785
        %v1787 = vpop.f32.mrb[0].mxu0
        %1788 = vmatprep.mubr.f32.mxu0 0.0
        %1789 = vmatmul.mubr.f32.gmra.mrb[0].mxu0 %v783
        %v1790 = vpop.f32.mrb[0].mxu0
        %v1791 = vadd.f32 %v518, %v1790
        %v1792 = vpop.f32.mrb[0].mxu0
        %1793 = vmatprep.mubr.f32.mxu0 0.0
        %1794 = vmatmul.mubr.f32.gmra.mrb[0].mxu0 %v786
        %v1795 = vpop.f32.mrb[0].mxu0
        %v1796 = vadd.f32 %v518, %v1795
        %v1797 = vpop.f32.mrb[0].mxu0
        %1798 = vmatprep.mubr.f32.mxu0 0.0
        %1799 = vmatmul.mubr.f32.gmra.mrb[0].mxu0 %v789
        %v1800 = vpop.f32.mrb[0].mxu0
        %v1801 = vadd.f32 %v518, %v1800
        %v1802 = vpop.f32.mrb[0].mxu0
        %1803 = vmatprep.mubr.f32.mxu0 0.0
        %1804 = vmatmul.mubr.f32.gmra.mrb[0].mxu0 %v792
        %v1805 = vpop.f32.mrb[0].mxu0
        %v1806 = vadd.f32 %v518, %v1805
        %v1807 = vpop.f32.mrb[0].mxu0
        %1808 = vmatprep.mubr.f32.mxu0 0.0
        %1809 = vmatmul.mubr.f32.gmra.mrb[0].mxu0 %v795
        %v1810 = vpop.f32.mrb[0].mxu0
        %v1811 = vadd.f32 %v518, %v1810
        %v1812 = vpop.f32.mrb[0].mxu0
        %1813 = vmatprep.mubr.f32.mxu0 0.0
        %1814 = vmatmul.mubr.f32.gmra.mrb[0].mxu0 %v798
        %v1815 = vpop.f32.mrb[0].mxu0
        %v1816 = vadd.f32 %v518, %v1815
        %v1817 = vpop.f32.mrb[0].mxu0
        %1818 = vmatprep.mubr.f32.mxu0 0.0
        %1819 = vmatmul.mubr.f32.gmra.mrb[0].mxu0 %v801
        %v1820 = vpop.f32.mrb[0].mxu0
        %v1821 = vadd.f32 %v518, %v1820
        %v1822 = vpop.f32.mrb[0].mxu0
        %1823 = vmatprep.mubr.f32.mxu0 0.0
        %1824 = vmatmul.mubr.f32.gmra.mrb[0].mxu0 %v804
        %v1825 = vpop.f32.mrb[0].mxu0
        %v1826 = vadd.f32 %v518, %v1825
        %v1827 = vpop.f32.mrb[0].mxu0
        %1828 = vmatprep.mubr.f32.mxu0 0.0
        %1829 = vmatmul.mubr.f32.gmra.mrb[0].mxu0 %v807
        %v1830 = vpop.f32.mrb[0].mxu0
        %v1831 = vadd.f32 %v518, %v1830
        %v1832 = vpop.f32.mrb[0].mxu0
        %1833 = vmatprep.mubr.f32.mxu0 0.0
        %1834 = vmatmul.mubr.f32.gmra.mrb[0].mxu0 %v810
        %v1835 = vpop.f32.mrb[0].mxu0
        %v1836 = vadd.f32 %v518, %v1835
        %v1837 = vpop.f32.mrb[0].mxu0
        %1838 = vmatprep.mubr.f32.mxu0 0.0
        %1839 = vmatmul.mubr.f32.gmra.mrb[0].mxu0 %v813
        %v1840 = vpop.f32.mrb[0].mxu0
        %v1841 = vadd.f32 %v518, %v1840
        %v1842 = vpop.f32.mrb[0].mxu0
        %1843 = vmatprep.mubr.f32.mxu0 0.0
        %1844 = vmatmul.mubr.f32.gmra.mrb[0].mxu0 %v816
        %v1845 = vpop.f32.mrb[0].mxu0
        %v1846 = vadd.f32 %v518, %v1845
        %v1847 = vpop.f32.mrb[0].mxu0
        %1848 = vmatprep.mubr.f32.mxu0 0.0
        %1849 = vmatmul.mubr.f32.gmra.mrb[0].mxu0 %v819
        %v1850 = vpop.f32.mrb[0].mxu0
        %v1851 = vadd.f32 %v518, %v1850
        %v1852 = vpop.f32.mrb[0].mxu0
        %1853 = vmatprep.mubr.f32.mxu0 0.0
        %1854 = vmatmul.mubr.f32.gmra.mrb[0].mxu0 %v822
        %v1855 = vpop.f32.mrb[0].mxu0
        %v1856 = vadd.f32 %v518, %v1855
        %v1857 = vpop.f32.mrb[0].mxu0
        %1858 = vmatprep.mubr.f32.mxu0 0.0
        %1859 = vmatmul.mubr.f32.gmra.mrb[0].mxu0 %v825
        %v1860 = vpop.f32.mrb[0].mxu0
        %v1861 = vadd.f32 %v518, %v1860
        %v1862 = vpop.f32.mrb[0].mxu0
        %1863 = vmatprep.mubr.f32.mxu0 0.0
        %1864 = vmatmul.mubr.f32.gmra.mrb[0].mxu0 %v828
        %v1865 = vpop.f32.mrb[0].mxu0
        %v1866 = vadd.f32 %v518, %v1865
        %v1867 = vpop.f32.mrb[0].mxu0
        %1868 = vmatprep.mubr.f32.mxu0 0.0
        %1869 = vmatmul.mubr.f32.gmra.mrb[0].mxu0 %v831
        %v1870 = vpop.f32.mrb[0].mxu0
        %v1871 = vadd.f32 %v518, %v1870
        %v1872 = vpop.f32.mrb[0].mxu0
        %1873 = vmatprep.mubr.f32.mxu0 0.0
        %1874 = vmatmul.mubr.f32.gmra.mrb[0].mxu0 %v834
        %v1875 = vpop.f32.mrb[0].mxu0
        %v1876 = vadd.f32 %v518, %v1875
        %v1877 = vpop.f32.mrb[0].mxu0
        %1878 = vmatprep.mubr.f32.mxu0 0.0
        %1879 = vmatmul.mubr.f32.gmra.mrb[0].mxu0 %v837
        %v1880 = vpop.f32.mrb[0].mxu0
        %v1881 = vadd.f32 %v518, %v1880
        %v1882 = vpop.f32.mrb[0].mxu0
        %1883 = vmatprep.mubr.f32.mxu0 0.0
        %1884 = vmatmul.mubr.f32.gmra.mrb[0].mxu0 %v840
        %v1885 = vpop.f32.mrb[0].mxu0
        %v1886 = vadd.f32 %v518, %v1885
        %v1887 = vpop.f32.mrb[0].mxu0
        %1888 = vmatprep.mubr.f32.mxu0 0.0
        %1889 = vmatmul.mubr.f32.gmra.mrb[0].mxu0 %v843
        %v1890 = vpop.f32.mrb[0].mxu0
        %v1891 = vadd.f32 %v518, %v1890
        %v1892 = vpop.f32.mrb[0].mxu0
        %1893 = vmatprep.mubr.f32.mxu0 0.0
        %1894 = vmatmul.mubr.f32.gmra.mrb[0].mxu0 %v846
        %v1895 = vpop.f32.mrb[0].mxu0
        %v1896 = vadd.f32 %v518, %v1895
        %v1897 = vpop.f32.mrb[0].mxu0
        %1898 = vmatprep.mubr.f32.mxu0 0.0
        %1899 = vmatmul.mubr.f32.gmra.mrb[0].mxu0 %v849
        %v1900 = vpop.f32.mrb[0].mxu0
        %v1901 = vadd.f32 %v518, %v1900
        %v1902 = vpop.f32.mrb[0].mxu0
        %1903 = vmatprep.mubr.f32.mxu0 0.0
        %1904 = vmatmul.mubr.f32.gmra.mrb[0].mxu0 %v852
        %v1905 = vpop.f32.mrb[0].mxu0
        %v1906 = vadd.f32 %v518, %v1905
        %v1907 = vpop.f32.mrb[0].mxu0
        %1908 = vmatprep.mubr.f32.mxu0 0.0
        %1909 = vmatmul.mubr.f32.gmra.mrb[0].mxu0 %v855
        %v1910 = vpop.f32.mrb[0].mxu0
        %v1911 = vadd.f32 %v518, %v1910
        %v1912 = vpop.f32.mrb[0].mxu0
        %1913 = vmatprep.mubr.f32.mxu0 0.0
        %1914 = vmatmul.mubr.f32.gmra.mrb[0].mxu0 %v858
        %v1915 = vpop.f32.mrb[0].mxu0
        %v1916 = vadd.f32 %v518, %v1915
        %v1917 = vpop.f32.mrb[0].mxu0
        %1918 = vmatprep.mubr.f32.mxu0 0.0
        %1919 = vmatmul.mubr.f32.gmra.mrb[0].mxu0 %v861
        %v1920 = vpop.f32.mrb[0].mxu0
        %v1921 = vadd.f32 %v518, %v1920
        %v1922 = vpop.f32.mrb[0].mxu0
        %1923 = vmatprep.mubr.f32.mxu0 0.0
        %1924 = vmatmul.mubr.f32.gmra.mrb[0].mxu0 %v864
        %v1925 = vpop.f32.mrb[0].mxu0
        %v1926 = vadd.f32 %v518, %v1925
        %v1927 = vpop.f32.mrb[0].mxu0
        %1928 = vmatprep.mubr.f32.mxu0 0.0
        %1929 = vmatmul.mubr.f32.gmra.mrb[0].mxu0 %v867
        %v1930 = vpop.f32.mrb[0].mxu0
        %v1931 = vadd.f32 %v518, %v1930
        %v1932 = vpop.f32.mrb[0].mxu0
        %1933 = vmatprep.mubr.f32.mxu0 0.0
        %1934 = vmatmul.mubr.f32.gmra.mrb[0].mxu0 %v870
        %v1935 = vpop.f32.mrb[0].mxu0
        %v1936 = vadd.f32 %v518, %v1935
        %v1937 = vpop.f32.mrb[0].mxu0
        %1938 = vmatprep.mubr.f32.mxu0 0.0
        %1939 = vmatmul.mubr.f32.gmra.mrb[0].mxu0 %v873
        %v1940 = vpop.f32.mrb[0].mxu0
        %v1941 = vadd.f32 %v518, %v1940
        %v1942 = vpop.f32.mrb[0].mxu0
        %1943 = vmatprep.mubr.f32.mxu0 0.0
        %1944 = vmatmul.mubr.f32.gmra.mrb[0].mxu0 %v876
        %v1945 = vpop.f32.mrb[0].mxu0
        %v1946 = vadd.f32 %v518, %v1945
        %v1947 = vpop.f32.mrb[0].mxu0
        %1948 = vmatprep.mubr.f32.mxu0 0.0
        %1949 = vmatmul.mubr.f32.gmra.mrb[0].mxu0 %v879
        %v1950 = vpop.f32.mrb[0].mxu0
        %v1951 = vadd.f32 %v518, %v1950
        %v1952 = vpop.f32.mrb[0].mxu0
        %1953 = vmatprep.mubr.f32.mxu0 0.0
        %1954 = vmatmul.mubr.f32.gmra.mrb[0].mxu0 %v882
        %v1955 = vpop.f32.mrb[0].mxu0
        %v1956 = vadd.f32 %v518, %v1955
        %v1957 = vpop.f32.mrb[0].mxu0
        %1958 = vmatprep.mubr.f32.mxu0 0.0
        %1959 = vmatmul.mubr.f32.gmra.mrb[0].mxu0 %v885
        %v1960 = vpop.f32.mrb[0].mxu0
        %v1961 = vadd.f32 %v518, %v1960
        %v1962 = vpop.f32.mrb[0].mxu0
        %1963 = vmatprep.mubr.f32.mxu0 0.0
        %1964 = vmatmul.mubr.f32.gmra.mrb[0].mxu0 %v888
        %v1965 = vpop.f32.mrb[0].mxu0
        %v1966 = vadd.f32 %v518, %v1965
        %v1967 = vpop.f32.mrb[0].mxu0
        %1968 = vmatprep.mubr.f32.mxu0 0.0
        %1969 = vmatmul.mubr.f32.gmra.mrb[0].mxu0 %v891
        %v1970 = vpop.f32.mrb[0].mxu0
        %v1971 = vadd.f32 %v518, %v1970
        %v1972 = vpop.f32.mrb[0].mxu0
        %1973 = vmatprep.mubr.f32.mxu0 0.0
        %1974 = vmatmul.mubr.f32.gmra.mrb[0].mxu0 %v894
        %v1975 = vpop.f32.mrb[0].mxu0
        %v1976 = vadd.f32 %v518, %v1975
        %v1977 = vpop.f32.mrb[0].mxu0
        %1978 = vmatprep.mubr.f32.mxu0 0.0
        %1979 = vmatmul.mubr.f32.gmra.mrb[0].mxu0 %v897
        %v1980 = vpop.f32.mrb[0].mxu0
        %v1981 = vadd.f32 %v518, %v1980
        %v1982 = vpop.f32.mrb[0].mxu0
        %1983 = vmatprep.mubr.f32.mxu0 0.0
        %1984 = vmatmul.mubr.f32.gmra.mrb[0].mxu0 %v900
        %v1985 = vpop.f32.mrb[0].mxu0
        %v1986 = vadd.f32 %v518, %v1985
        %v1987 = vpop.f32.mrb[0].mxu0
        %1988 = vmatprep.mubr.f32.mxu0 0.0
        %1989 = vmatmul.mubr.f32.gmra.mrb[0].mxu0 %v903
        %v1990 = vpop.f32.mrb[0].mxu0
        %v1991 = vadd.f32 %v518, %v1990
        %v1992 = vpop.f32.mrb[0].mxu0
        %1993 = vmatprep.mubr.f32.mxu0 0.0
        %1994 = vmatmul.mubr.f32.gmra.mrb[0].mxu0 %v906
        %v1995 = vpop.f32.mrb[0].mxu0
        %v1996 = vadd.f32 %v518, %v1995
        %v1997 = vpop.f32.mrb[0].mxu0
        %1998 = vmatprep.mubr.f32.mxu0 0.0
        %1999 = vmatmul.mubr.f32.gmra.mrb[0].mxu0 %v909
        %v2000 = vpop.f32.mrb[0].mxu0
        %v2001 = vadd.f32 %v518, %v2000
        %v2002 = vpop.f32.mrb[0].mxu0
        %2003 = vmatprep.mubr.f32.mxu0 0.0
        %2004 = vmatmul.mubr.f32.gmra.mrb[0].mxu0 %v912
        %v2005 = vpop.f32.mrb[0].mxu0
        %v2006 = vadd.f32 %v518, %v2005
        %v2007 = vpop.f32.mrb[0].mxu0
        %2008 = vmatprep.mubr.f32.mxu0 0.0
        %2009 = vmatmul.mubr.f32.gmra.mrb[0].mxu0 %v915
        %v2010 = vpop.f32.mrb[0].mxu0
        %v2011 = vadd.f32 %v518, %v2010
        %v2012 = vpop.f32.mrb[0].mxu0
        %2013 = vmatprep.mubr.f32.mxu0 0.0
        %2014 = vmatmul.mubr.f32.gmra.mrb[0].mxu0 %v918
        %v2015 = vpop.f32.mrb[0].mxu0
        %v2016 = vadd.f32 %v518, %v2015
        %v2017 = vpop.f32.mrb[0].mxu0
        %2018 = vmatprep.mubr.f32.mxu0 0.0
        %2019 = vmatmul.mubr.f32.gmra.mrb[0].mxu0 %v921
        %v2020 = vpop.f32.mrb[0].mxu0
        %v2021 = vadd.f32 %v518, %v2020
        %v2022 = vpop.f32.mrb[0].mxu0
        %2023 = vmatprep.mubr.f32.mxu0 0.0
        %2024 = vmatmul.mubr.f32.gmra.mrb[0].mxu0 %v924
        %v2025 = vpop.f32.mrb[0].mxu0
        %v2026 = vadd.f32 %v518, %v2025
        %v2027 = vpop.f32.mrb[0].mxu0
        %2028 = vmatprep.mubr.f32.mxu0 0.0
        %2029 = vmatmul.mubr.f32.gmra.mrb[0].mxu0 %v927
        %v2030 = vpop.f32.mrb[0].mxu0
        %v2031 = vadd.f32 %v518, %v2030
        %v2032 = vpop.f32.mrb[0].mxu0
        %2033 = vmatprep.mubr.f32.mxu0 0.0
        %2034 = vmatmul.mubr.f32.gmra.mrb[0].mxu0 %v930
        %v2035 = vpop.f32.mrb[0].mxu0
        %v2036 = vadd.f32 %v518, %v2035
        %v2037 = vpop.f32.mrb[0].mxu0
        %2038 = vmatprep.mubr.f32.mxu0 0.0
        %2039 = vmatmul.mubr.f32.gmra.mrb[0].mxu0 %v933
        %v2040 = vpop.f32.mrb[0].mxu0
        %v2041 = vadd.f32 %v518, %v2040
        %v2042 = vpop.f32.mrb[0].mxu0
        %2043 = vmatprep.mubr.f32.mxu0 0.0
        %2044 = vmatmul.mubr.f32.gmra.mrb[0].mxu0 %v936
        %v2045 = vpop.f32.mrb[0].mxu0
        %v2046 = vadd.f32 %v518, %v2045
        %v2047 = vpop.f32.mrb[0].mxu0
        %2048 = vmatprep.mubr.f32.mxu0 0.0
        %2049 = vmatmul.mubr.f32.gmra.mrb[0].mxu0 %v939
        %v2050 = vpop.f32.mrb[0].mxu0
        %v2051 = vadd.f32 %v518, %v2050
        %v2052 = vpop.f32.mrb[0].mxu0
        %2053 = vmatprep.mubr.f32.mxu0 0.0
        %2054 = vmatmul.mubr.f32.gmra.mrb[0].mxu0 %v942
        %v2055 = vpop.f32.mrb[0].mxu0
        %v2056 = vadd.f32 %v518, %v2055
        %v2057 = vpop.f32.mrb[0].mxu0
        %2058 = vmatprep.mubr.f32.mxu0 0.0
        %2059 = vmatmul.mubr.f32.gmra.mrb[0].mxu0 %v945
        %v2060 = vpop.f32.mrb[0].mxu0
        %v2061 = vadd.f32 %v518, %v2060
        %v2062 = vpop.f32.mrb[0].mxu0
        %2063 = vmatprep.mubr.f32.mxu0 0.0
        %2064 = vmatmul.mubr.f32.gmra.mrb[0].mxu0 %v948
        %v2065 = vpop.f32.mrb[0].mxu0
        %v2066 = vadd.f32 %v518, %v2065
        %v2067 = vpop.f32.mrb[0].mxu0
        %2068 = vmatprep.mubr.f32.mxu0 0.0
        %2069 = vmatmul.mubr.f32.gmra.mrb[0].mxu0 %v951
        %v2070 = vpop.f32.mrb[0].mxu0
        %v2071 = vadd.f32 %v518, %v2070
        %v2072 = vpop.f32.mrb[0].mxu0
        %2073 = vmatprep.mubr.f32.mxu0 0.0
        %2074 = vmatmul.mubr.f32.gmra.mrb[0].mxu0 %v954
        %v2075 = vpop.f32.mrb[0].mxu0
        %v2076 = vadd.f32 %v518, %v2075
        %v2077 = vpop.f32.mrb[0].mxu0
        %2078 = vmatprep.mubr.f32.mxu0 0.0
        %2079 = vmatmul.mubr.f32.gmra.mrb[0].mxu0 %v957
        %v2080 = vpop.f32.mrb[0].mxu0
        %v2081 = vadd.f32 %v518, %v2080
        %v2082 = vpop.f32.mrb[0].mxu0
        %2083 = vmatprep.mubr.f32.mxu0 0.0
        %2084 = vmatmul.mubr.f32.gmra.mrb[0].mxu0 %v960
        %v2085 = vpop.f32.mrb[0].mxu0
        %v2086 = vadd.f32 %v518, %v2085
        %v2087 = vpop.f32.mrb[0].mxu0
        %2088 = vmatprep.mubr.f32.mxu0 0.0
        %2089 = vmatmul.mubr.f32.gmra.mrb[0].mxu0 %v963
        %v2090 = vpop.f32.mrb[0].mxu0
        %v2091 = vadd.f32 %v518, %v2090
        %v2092 = vpop.f32.mrb[0].mxu0
        %2093 = vmatprep.mubr.f32.mxu0 0.0
        %2094 = vmatmul.mubr.f32.gmra.mrb[0].mxu0 %v966
        %v2095 = vpop.f32.mrb[0].mxu0
        %v2096 = vadd.f32 %v518, %v2095
        %v2097 = vpop.f32.mrb[0].mxu0
        %2098 = vmatprep.mubr.f32.mxu0 0.0
        %2099 = vmatmul.mubr.f32.gmra.mrb[0].mxu0 %v969
        %v2100 = vpop.f32.mrb[0].mxu0
        %v2101 = vadd.f32 %v518, %v2100
        %v2102 = vpop.f32.mrb[0].mxu0
        %2103 = vmatprep.mubr.f32.mxu0 0.0
        %2104 = vmatmul.mubr.f32.gmra.mrb[0].mxu0 %v972
        %v2105 = vpop.f32.mrb[0].mxu0
        %v2106 = vadd.f32 %v518, %v2105
        %v2107 = vpop.f32.mrb[0].mxu0
        %2108 = vmatprep.mubr.f32.mxu0 0.0
        %2109 = vmatmul.mubr.f32.gmra.mrb[0].mxu0 %v975
        %v2110 = vpop.f32.mrb[0].mxu0
        %v2111 = vadd.f32 %v518, %v2110
        %v2112 = vpop.f32.mrb[0].mxu0
        %2113 = vmatprep.mubr.f32.mxu0 0.0
        %2114 = vmatmul.mubr.f32.gmra.mrb[0].mxu0 %v978
        %v2115 = vpop.f32.mrb[0].mxu0
        %v2116 = vadd.f32 %v518, %v2115
        %v2117 = vpop.f32.mrb[0].mxu0
        %2118 = vmatprep.mubr.f32.mxu0 0.0
        %2119 = vmatmul.mubr.f32.gmra.mrb[0].mxu0 %v981
        %v2120 = vpop.f32.mrb[0].mxu0
        %v2121 = vadd.f32 %v518, %v2120
        %v2122 = vpop.f32.mrb[0].mxu0
        %2123 = vmatprep.mubr.f32.mxu0 0.0
        %2124 = vmatmul.mubr.f32.gmra.mrb[0].mxu0 %v984
        %v2125 = vpop.f32.mrb[0].mxu0
        %v2126 = vadd.f32 %v518, %v2125
        %v2127 = vpop.f32.mrb[0].mxu0
        %2128 = vmatprep.mubr.f32.mxu0 0.0
        %2129 = vmatmul.mubr.f32.gmra.mrb[0].mxu0 %v987
        %v2130 = vpop.f32.mrb[0].mxu0
        %v2131 = vadd.f32 %v518, %v2130
        %v2132 = vpop.f32.mrb[0].mxu0
        %2133 = vmatprep.mubr.f32.mxu0 0.0
        %2134 = vmatmul.mubr.f32.gmra.mrb[0].mxu0 %v990
        %v2135 = vpop.f32.mrb[0].mxu0
        %v2136 = vadd.f32 %v518, %v2135
        %v2137 = vpop.f32.mrb[0].mxu0
        %2138 = vmatprep.mubr.f32.mxu0 0.0
        %2139 = vmatmul.mubr.f32.gmra.mrb[0].mxu0 %v993
        %v2140 = vpop.f32.mrb[0].mxu0
        %v2141 = vadd.f32 %v518, %v2140
        %v2142 = vpop.f32.mrb[0].mxu0
        %2143 = vmatprep.mubr.f32.mxu0 0.0
        %2144 = vmatmul.mubr.f32.gmra.mrb[0].mxu0 %v996
        %v2145 = vpop.f32.mrb[0].mxu0
        %v2146 = vadd.f32 %v518, %v2145
        %v2147 = vpop.f32.mrb[0].mxu0
        %2148 = vmatprep.mubr.f32.mxu0 0.0
        %2149 = vmatmul.mubr.f32.gmra.mrb[0].mxu0 %v999
        %v2150 = vpop.f32.mrb[0].mxu0
        %v2151 = vadd.f32 %v518, %v2150
        %v2152 = vpop.f32.mrb[0].mxu0
        %2153 = vmatprep.mubr.f32.mxu0 0.0
        %2154 = vmatmul.mubr.f32.gmra.mrb[0].mxu0 %v1002
        %v2155 = vpop.f32.mrb[0].mxu0
        %v2156 = vadd.f32 %v518, %v2155
        %v2157 = vpop.f32.mrb[0].mxu0
        %2158 = vmatprep.mubr.f32.mxu0 0.0
        %2159 = vmatmul.mubr.f32.gmra.mrb[0].mxu0 %v1005
        %v2160 = vpop.f32.mrb[0].mxu0
        %v2161 = vadd.f32 %v518, %v2160
        %v2162 = vpop.f32.mrb[0].mxu0
        %2163 = vmatprep.mubr.f32.mxu0 0.0
        %2164 = vmatmul.mubr.f32.gmra.mrb[0].mxu0 %v1008
        %v2165 = vpop.f32.mrb[0].mxu0
        %v2166 = vadd.f32 %v518, %v2165
        %v2167 = vpop.f32.mrb[0].mxu0
        %2168 = vmatprep.mubr.f32.mxu0 0.0
        %2169 = vmatmul.mubr.f32.gmra.mrb[0].mxu0 %v1011
        %v2170 = vpop.f32.mrb[0].mxu0
        %v2171 = vadd.f32 %v518, %v2170
        %v2172 = vpop.f32.mrb[0].mxu0
        %2173 = vmatprep.mubr.f32.mxu0 0.0
        %2174 = vmatmul.mubr.f32.gmra.mrb[0].mxu0 %v1014
        %v2175 = vpop.f32.mrb[0].mxu0
        %v2176 = vadd.f32 %v518, %v2175
        %v2177 = vpop.f32.mrb[0].mxu0
        %2178 = vmatprep.mubr.f32.mxu0 0.0
        %2179 = vmatmul.mubr.f32.gmra.mrb[0].mxu0 %v1017
        %v2180 = vpop.f32.mrb[0].mxu0
        %v2181 = vadd.f32 %v518, %v2180
        %v2182 = vpop.f32.mrb[0].mxu0
        %2183 = vmatprep.mubr.f32.mxu0 0.0
        %2184 = vmatmul.mubr.f32.gmra.mrb[0].mxu0 %v1020
        %v2185 = vpop.f32.mrb[0].mxu0
        %v2186 = vadd.f32 %v518, %v2185
        %v2187 = vpop.f32.mrb[0].mxu0
        %2188 = vmatprep.mubr.f32.mxu0 0.0
        %2189 = vmatmul.mubr.f32.gmra.mrb[0].mxu0 %v1023
        %v2190 = vpop.f32.mrb[0].mxu0
        %v2191 = vadd.f32 %v518, %v2190
        %v2192 = vpop.f32.mrb[0].mxu0
        %2193 = vmatprep.mubr.f32.mxu0 0.0
        %2194 = vmatmul.mubr.f32.gmra.mrb[0].mxu0 %v1026
        %v2195 = vpop.f32.mrb[0].mxu0
        %v2196 = vadd.f32 %v518, %v2195
        %v2197 = vpop.f32.mrb[0].mxu0
        %2198 = vmatprep.mubr.f32.mxu0 0.0
        %2199 = vmatmul.mubr.f32.gmra.mrb[0].mxu0 %v1029
        %v2200 = vpop.f32.mrb[0].mxu0
        %v2201 = vadd.f32 %v518, %v2200
        %v2202 = vpop.f32.mrb[0].mxu0
        %2203 = vmatprep.mubr.f32.mxu0 0.0
        %2204 = vmatmul.mubr.f32.gmra.mrb[0].mxu0 %v1032
        %v2205 = vpop.f32.mrb[0].mxu0
        %v2206 = vadd.f32 %v518, %v2205
        %v2207 = vpop.f32.mrb[0].mxu0
        %2208 = vmatprep.mubr.f32.mxu0 0.0
        %2209 = vmatmul.mubr.f32.gmra.mrb[0].mxu0 %v1035
        %v2210 = vpop.f32.mrb[0].mxu0
        %v2211 = vadd.f32 %v518, %v2210
        %v2212 = vpop.f32.mrb[0].mxu0
        %2213 = vmatprep.mubr.f32.mxu0 0.0
        %2214 = vmatmul.mubr.f32.gmra.mrb[0].mxu0 %v1038
        %v2215 = vpop.f32.mrb[0].mxu0
        %v2216 = vadd.f32 %v518, %v2215
        %v2217 = vpop.f32.mrb[0].mxu0
        %2218 = vmatprep.mubr.f32.mxu0 0.0
        %2219 = vmatmul.mubr.f32.gmra.mrb[0].mxu0 %v1041
        %v2220 = vpop.f32.mrb[0].mxu0
        %v2221 = vadd.f32 %v518, %v2220
        %v2222 = vpop.f32.mrb[0].mxu0
        %2223 = vmatprep.mubr.f32.mxu0 0.0
        %2224 = vmatmul.mubr.f32.gmra.mrb[0].mxu0 %v1044
        %v2225 = vpop.f32.mrb[0].mxu0
        %v2226 = vadd.f32 %v518, %v2225
        %v2227 = vpop.f32.mrb[0].mxu0
        %2228 = vmatprep.mubr.f32.mxu0 0.0
        %2229 = vmatmul.mubr.f32.gmra.mrb[0].mxu0 %v1047
        %v2230 = vpop.f32.mrb[0].mxu0
        %v2231 = vadd.f32 %v518, %v2230
        %v2232 = vpop.f32.mrb[0].mxu0
        %2233 = vmatprep.mubr.f32.mxu0 0.0
        %2234 = vmatmul.mubr.f32.gmra.mrb[0].mxu0 %v1050
        %v2235 = vpop.f32.mrb[0].mxu0
        %v2236 = vadd.f32 %v518, %v2235
        %v2237 = vpop.f32.mrb[0].mxu0
        %2238 = vmatprep.mubr.f32.mxu0 0.0
        %2239 = vmatmul.mubr.f32.gmra.mrb[0].mxu0 %v1053
        %v2240 = vpop.f32.mrb[0].mxu0
        %v2241 = vadd.f32 %v518, %v2240
        %v2242 = vpop.f32.mrb[0].mxu0
        %2243 = vmatprep.mubr.f32.mxu0 0.0
        %2244 = vmatmul.mubr.f32.gmra.mrb[0].mxu0 %v1056
        %v2245 = vpop.f32.mrb[0].mxu0
        %v2246 = vadd.f32 %v518, %v2245
        %v2247 = vpop.f32.mrb[0].mxu0
        %2248 = vmatprep.mubr.f32.mxu0 0.0
        %2249 = vmatmul.mubr.f32.gmra.mrb[0].mxu0 %v1059
        %v2250 = vpop.f32.mrb[0].mxu0
        %v2251 = vadd.f32 %v518, %v2250
        %v2252 = vpop.f32.mrb[0].mxu0
        %2253 = vmatprep.mubr.f32.mxu0 0.0
        %2254 = vmatmul.mubr.f32.gmra.mrb[0].mxu0 %v1062
        %v2255 = vpop.f32.mrb[0].mxu0
        %v2256 = vadd.f32 %v518, %v2255
        %v2257 = vpop.f32.mrb[0].mxu0
        %2258 = vmatprep.mubr.f32.mxu0 0.0
        %2259 = vmatmul.mubr.f32.gmra.mrb[0].mxu0 %v1065
        %v2260 = vpop.f32.mrb[0].mxu0
        %v2261 = vadd.f32 %v518, %v2260
        %v2262 = vpop.f32.mrb[0].mxu0
        %2263 = vmatprep.mubr.f32.mxu0 0.0
        %2264 = vmatmul.mubr.f32.gmra.mrb[0].mxu0 %v1068
        %v2265 = vpop.f32.mrb[0].mxu0
        %v2266 = vadd.f32 %v518, %v2265
        %v2267 = vpop.f32.mrb[0].mxu0
        %2268 = vmatprep.mubr.f32.mxu0 0.0
        %2269 = vmatmul.mubr.f32.gmra.mrb[0].mxu0 %v1071
        %v2270 = vpop.f32.mrb[0].mxu0
        %v2271 = vadd.f32 %v518, %v2270
        %v2272 = vpop.f32.mrb[0].mxu0
        %2273 = vmatprep.mubr.f32.mxu0 0.0
        %2274 = vmatmul.mubr.f32.gmra.mrb[0].mxu0 %v1074
        %v2275 = vpop.f32.mrb[0].mxu0
        %v2276 = vadd.f32 %v518, %v2275
        %v2277 = vpop.f32.mrb[0].mxu0
        %2278 = vmatprep.mubr.f32.mxu0 0.0
        %2279 = vmatmul.mubr.f32.gmra.mrb[0].mxu0 %v1077
        %v2280 = vpop.f32.mrb[0].mxu0
        %v2281 = vadd.f32 %v518, %v2280
        %v2282 = vpop.f32.mrb[0].mxu0
        %2283 = vmatprep.mubr.f32.mxu0 0.0
        %2284 = vmatmul.mubr.f32.gmra.mrb[0].mxu0 %v1080
        %v2285 = vpop.f32.mrb[0].mxu0
        %v2286 = vadd.f32 %v518, %v2285
        %v2287 = vpop.f32.mrb[0].mxu0
        %2288 = vmatprep.mubr.f32.mxu0 0.0
        %2289 = vmatmul.mubr.f32.gmra.mrb[0].mxu0 %v1083
        %v2290 = vpop.f32.mrb[0].mxu0
        %v2291 = vadd.f32 %v518, %v2290
        %v2292 = vpop.f32.mrb[0].mxu0
        %2293 = vmatprep.mubr.f32.mxu0 0.0
        %2294 = vmatmul.mubr.f32.gmra.mrb[0].mxu0 %v1086
        %v2295 = vpop.f32.mrb[0].mxu0
        %v2296 = vadd.f32 %v518, %v2295
        %v2297 = vpop.f32.mrb[0].mxu0
        %2298 = vmatprep.mubr.f32.mxu0 0.0
        %2299 = vmatmul.mubr.f32.gmra.mrb[0].mxu0 %v1089
        %v2300 = vpop.f32.mrb[0].mxu0
        %v2301 = vadd.f32 %v518, %v2300
        %v2302 = vpop.f32.mrb[0].mxu0
        %2303 = vmatprep.mubr.f32.mxu0 0.0
        %2304 = vmatmul.mubr.f32.gmra.mrb[0].mxu0 %v1092
        %v2305 = vpop.f32.mrb[0].mxu0
        %v2306 = vadd.f32 %v518, %v2305
        %v2307 = vpop.f32.mrb[0].mxu0
        %2308 = vmatprep.mubr.f32.mxu0 0.0
        %2309 = vmatmul.mubr.f32.gmra.mrb[0].mxu0 %v1095
        %v2310 = vpop.f32.mrb[0].mxu0
        %v2311 = vadd.f32 %v518, %v2310
        %v2312 = vpop.f32.mrb[0].mxu0
        %2313 = vmatprep.mubr.f32.mxu0 0.0
        %2314 = vmatmul.mubr.f32.gmra.mrb[0].mxu0 %v1098
        %v2315 = vpop.f32.mrb[0].mxu0
        %v2316 = vadd.f32 %v518, %v2315
        %v2317 = vpop.f32.mrb[0].mxu0
        %2318 = vmatprep.mubr.f32.mxu0 0.0
        %2319 = vmatmul.mubr.f32.gmra.mrb[0].mxu0 %v1101
        %v2320 = vpop.f32.mrb[0].mxu0
        %v2321 = vadd.f32 %v518, %v2320
        %v2322 = vpop.f32.mrb[0].mxu0
        %2323 = vmatprep.mubr.f32.mxu0 0.0
        %2324 = vmatmul.mubr.f32.gmra.mrb[0].mxu0 %v1104
        %v2325 = vpop.f32.mrb[0].mxu0
        %v2326 = vadd.f32 %v518, %v2325
        %v2327 = vpop.f32.mrb[0].mxu0
        %2328 = vmatprep.mubr.f32.mxu0 0.0
        %2329 = vmatmul.mubr.f32.gmra.mrb[0].mxu0 %v1107
        %v2330 = vpop.f32.mrb[0].mxu0
        %v2331 = vadd.f32 %v518, %v2330
        %v2332 = vpop.f32.mrb[0].mxu0
        %2333 = vmatprep.mubr.f32.mxu0 0.0
        %2334 = vmatmul.mubr.f32.gmra.mrb[0].mxu0 %v1110
        %v2335 = vpop.f32.mrb[0].mxu0
        %v2336 = vadd.f32 %v518, %v2335
        %v2337 = vpop.f32.mrb[0].mxu0
        %2338 = vmatprep.mubr.f32.mxu0 0.0
        %2339 = vmatmul.mubr.f32.gmra.mrb[0].mxu0 %v1113
        %v2340 = vpop.f32.mrb[0].mxu0
        %v2341 = vadd.f32 %v518, %v2340
        %v2342 = vpop.f32.mrb[0].mxu0
        %2343 = vmatprep.mubr.f32.mxu0 0.0
        %2344 = vmatmul.mubr.f32.gmra.mrb[0].mxu0 %v1116
        %v2345 = vpop.f32.mrb[0].mxu0
        %v2346 = vadd.f32 %v518, %v2345
        %v2347 = vpop.f32.mrb[0].mxu0
        %2348 = vmatprep.mubr.f32.mxu0 0.0
        %2349 = vmatmul.mubr.f32.gmra.mrb[0].mxu0 %v1119
        %v2350 = vpop.f32.mrb[0].mxu0
        %v2351 = vadd.f32 %v518, %v2350
        %v2352 = vpop.f32.mrb[0].mxu0
        %2353 = vmatprep.mubr.f32.mxu0 0.0
        %2354 = vmatmul.mubr.f32.gmra.mrb[0].mxu0 %v1122
        %v2355 = vpop.f32.mrb[0].mxu0
        %v2356 = vadd.f32 %v518, %v2355
        %v2357 = vpop.f32.mrb[0].mxu0
        %2358 = vmatprep.mubr.f32.mxu0 0.0
        %2359 = vmatmul.mubr.f32.gmra.mrb[0].mxu0 %v1125
        %v2360 = vpop.f32.mrb[0].mxu0
        %v2361 = vadd.f32 %v518, %v2360
        %v2362 = vpop.f32.mrb[0].mxu0
        %2363 = vmatprep.mubr.f32.mxu0 0.0
        %2364 = vmatmul.mubr.f32.gmra.mrb[0].mxu0 %v1128
        %v2365 = vpop.f32.mrb[0].mxu0
        %v2366 = vadd.f32 %v518, %v2365
        %v2367 = vpop.f32.mrb[0].mxu0
        %2368 = vmatprep.mubr.f32.mxu0 0.0
        %2369 = vmatmul.mubr.f32.gmra.mrb[0].mxu0 %v1131
        %v2370 = vpop.f32.mrb[0].mxu0
        %v2371 = vadd.f32 %v518, %v2370
        %v2372 = vpop.f32.mrb[0].mxu0
        %2373 = vmatprep.mubr.f32.mxu0 0.0
        %2374 = vmatmul.mubr.f32.gmra.mrb[0].mxu0 %v1134
        %v2375 = vpop.f32.mrb[0].mxu0
        %v2376 = vadd.f32 %v518, %v2375
        %v2377 = vpop.f32.mrb[0].mxu0
        %2378 = vmatprep.mubr.f32.mxu0 0.0
        %2379 = vmatmul.mubr.f32.gmra.mrb[0].mxu0 %v1137
        %v2380 = vpop.f32.mrb[0].mxu0
        %v2381 = vadd.f32 %v518, %v2380
        %v2382 = vpop.f32.mrb[0].mxu0
        %2383 = vmatprep.mubr.f32.mxu0 0.0
        %2384 = vmatmul.mubr.f32.gmra.mrb[0].mxu0 %v1140
        %v2385 = vpop.f32.mrb[0].mxu0
        %v2386 = vadd.f32 %v518, %v2385
        %v2387 = vpop.f32.mrb[0].mxu0
        %2388 = vmatprep.mubr.f32.mxu0 0.0
        %2389 = vmatmul.mubr.f32.gmra.mrb[0].mxu0 %v1143
        %v2390 = vpop.f32.mrb[0].mxu0
        %v2391 = vadd.f32 %v518, %v2390
        %v2392 = vpop.f32.mrb[0].mxu0
        %2393 = vmatprep.mubr.f32.mxu0 0.0
        %2394 = vmatmul.mubr.f32.gmra.mrb[0].mxu0 %v1146
        %v2395 = vpop.f32.mrb[0].mxu0
        %v2396 = vadd.f32 %v518, %v2395
        %v2397 = vpop.f32.mrb[0].mxu0
        %2398 = vmatprep.mubr.f32.mxu0 0.0
        %2399 = vmatmul.mubr.f32.gmra.mrb[0].mxu0 %v1149
        %v2400 = vpop.f32.mrb[0].mxu0
        %v2401 = vadd.f32 %v518, %v2400
        %v2402 = vpop.f32.mrb[0].mxu0
        %2403 = vmatprep.mubr.f32.mxu0 0.0
        %2404 = vmatmul.mubr.f32.gmra.mrb[0].mxu0 %v1152
        %v2405 = vpop.f32.mrb[0].mxu0
        %v2406 = vadd.f32 %v518, %v2405
        %v2407 = vpop.f32.mrb[0].mxu0
        %2408 = vmatprep.mubr.f32.mxu0 0.0
        %2409 = vmatmul.mubr.f32.gmra.mrb[0].mxu0 %v1155
        %v2410 = vpop.f32.mrb[0].mxu0
        %v2411 = vadd.f32 %v518, %v2410
        %v2412 = vpop.f32.mrb[0].mxu0
        %2413 = vmatprep.mubr.f32.mxu0 0.0
        %2414 = vmatmul.mubr.f32.gmra.mrb[0].mxu0 %v1158
        %v2415 = vpop.f32.mrb[0].mxu0
        %v2416 = vadd.f32 %v518, %v2415
        %v2417 = vpop.f32.mrb[0].mxu0
        %2418 = vmatprep.mubr.f32.mxu0 0.0
        %2419 = vmatmul.mubr.f32.gmra.mrb[0].mxu0 %v1161
        %v2420 = vpop.f32.mrb[0].mxu0
        %v2421 = vadd.f32 %v518, %v2420
        %v2422 = vpop.f32.mrb[0].mxu0
        %2423 = vmatprep.mubr.f32.mxu0 0.0
        %2424 = vmatmul.mubr.f32.gmra.mrb[0].mxu0 %v1164
        %v2425 = vpop.f32.mrb[0].mxu0
        %v2426 = vadd.f32 %v518, %v2425
        %v2427 = vpop.f32.mrb[0].mxu0
        %2428 = vmatprep.mubr.f32.mxu0 0.0
        %2429 = vmatmul.mubr.f32.gmra.mrb[0].mxu0 %v1167
        %v2430 = vpop.f32.mrb[0].mxu0
        %v2431 = vadd.f32 %v518, %v2430
        %v2432 = vpop.f32.mrb[0].mxu0
        %2433 = vmatprep.mubr.f32.mxu0 0.0
        %2434 = vmatmul.mubr.f32.gmra.mrb[0].mxu0 %v1170
        %v2435 = vpop.f32.mrb[0].mxu0
        %v2436 = vadd.f32 %v518, %v2435
        %v2437 = vpop.f32.mrb[0].mxu0
        %2438 = vmatprep.mubr.f32.mxu0 0.0
        %2439 = vmatmul.mubr.f32.gmra.mrb[0].mxu0 %v1173
        %v2440 = vpop.f32.mrb[0].mxu0
        %v2441 = vadd.f32 %v518, %v2440
        %v2442 = vpop.f32.mrb[0].mxu0
        %2443 = vmatprep.mubr.f32.mxu0 0.0
        %2444 = vmatmul.mubr.f32.gmra.mrb[0].mxu0 %v1176
        %v2445 = vpop.f32.mrb[0].mxu0
        %v2446 = vadd.f32 %v518, %v2445
        %v2447 = vpop.f32.mrb[0].mxu0
        %2448 = vmatprep.mubr.f32.mxu0 0.0
        %2449 = vmatmul.mubr.f32.gmra.mrb[0].mxu0 %v1179
        %v2450 = vpop.f32.mrb[0].mxu0
        %v2451 = vadd.f32 %v518, %v2450
        %v2452 = vpop.f32.mrb[0].mxu0
        %2453 = vmatprep.mubr.f32.mxu0 0.0
        %2454 = vmatmul.mubr.f32.gmra.mrb[0].mxu0 %v1182
        %v2455 = vpop.f32.mrb[0].mxu0
        %v2456 = vadd.f32 %v518, %v2455
        %v2457 = vpop.f32.mrb[0].mxu0
        %2458 = vmatprep.mubr.f32.mxu0 0.0
        %2459 = vmatmul.mubr.f32.gmra.mrb[0].mxu0 %v1185
        %v2460 = vpop.f32.mrb[0].mxu0
        %v2461 = vadd.f32 %v518, %v2460
        %v2462 = vpop.f32.mrb[0].mxu0
        %2463 = vmatprep.mubr.f32.mxu0 0.0
        %2464 = vmatmul.mubr.f32.gmra.mrb[0].mxu0 %v1188
        %v2465 = vpop.f32.mrb[0].mxu0
        %v2466 = vadd.f32 %v518, %v2465
        %v2467 = vpop.f32.mrb[0].mxu0
        %2468 = vmatprep.mubr.f32.mxu0 0.0
        %2469 = vmatmul.mubr.f32.gmra.mrb[0].mxu0 %v1191
        %v2470 = vpop.f32.mrb[0].mxu0
        %v2471 = vadd.f32 %v518, %v2470
        %v2472 = vpop.f32.mrb[0].mxu0
        %2473 = vmatprep.mubr.f32.mxu0 0.0
        %2474 = vmatmul.mubr.f32.gmra.mrb[0].mxu0 %v1194
        %v2475 = vpop.f32.mrb[0].mxu0
        %v2476 = vadd.f32 %v518, %v2475
        %v2477 = vpop.f32.mrb[0].mxu0
        %2478 = vmatprep.mubr.f32.mxu0 0.0
        %2479 = vmatmul.mubr.f32.gmra.mrb[0].mxu0 %v1197
        %v2480 = vpop.f32.mrb[0].mxu0
        %v2481 = vadd.f32 %v518, %v2480
        %v2482 = vpop.f32.mrb[0].mxu0
        %2483 = vmatprep.mubr.f32.mxu0 0.0
        %2484 = vmatmul.mubr.f32.gmra.mrb[0].mxu0 %v1200
        %v2485 = vpop.f32.mrb[0].mxu0
        %v2486 = vadd.f32 %v518, %v2485
        %v2487 = vpop.f32.mrb[0].mxu0
        %2488 = vmatprep.mubr.f32.mxu0 0.0
        %2489 = vmatmul.mubr.f32.gmra.mrb[0].mxu0 %v1203
        %v2490 = vpop.f32.mrb[0].mxu0
        %v2491 = vadd.f32 %v518, %v2490
        %v2492 = vpop.f32.mrb[0].mxu0
        %2493 = vmatprep.mubr.f32.mxu0 0.0
        %2494 = vmatmul.mubr.f32.gmra.mrb[0].mxu0 %v1206
        %v2495 = vpop.f32.mrb[0].mxu0
        %v2496 = vadd.f32 %v518, %v2495
        %v2497 = vpop.f32.mrb[0].mxu0
        %2498 = vmatprep.mubr.f32.mxu0 0.0
        %2499 = vmatmul.mubr.f32.gmra.mrb[0].mxu0 %v1209
        %v2500 = vpop.f32.mrb[0].mxu0
        %v2501 = vadd.f32 %v518, %v2500
        %v2502 = vpop.f32.mrb[0].mxu0
        %2503 = vmatprep.mubr.f32.mxu0 0.0
        %2504 = vmatmul.mubr.f32.gmra.mrb[0].mxu0 %v1212
        %v2505 = vpop.f32.mrb[0].mxu0
        %v2506 = vadd.f32 %v518, %v2505
        %v2507 = vpop.f32.mrb[0].mxu0
        %2508 = vmatprep.mubr.f32.mxu0 0.0
        %2509 = vmatmul.mubr.f32.gmra.mrb[0].mxu0 %v1215
        %v2510 = vpop.f32.mrb[0].mxu0
        %v2511 = vadd.f32 %v518, %v2510
        %v2512 = vpop.f32.mrb[0].mxu0
        %2513 = vmatprep.mubr.f32.mxu0 0.0
        %2514 = vmatmul.mubr.f32.gmra.mrb[0].mxu0 %v1218
        %v2515 = vpop.f32.mrb[0].mxu0
        %v2516 = vadd.f32 %v518, %v2515
        %v2517 = vpop.f32.mrb[0].mxu0
        %2518 = vmatprep.mubr.f32.mxu0 0.0
        %2519 = vmatmul.mubr.f32.gmra.mrb[0].mxu0 %v1221
        %v2520 = vpop.f32.mrb[0].mxu0
        %v2521 = vadd.f32 %v518, %v2520
        %v2522 = vpop.f32.mrb[0].mxu0
        %2523 = vmatprep.mubr.f32.mxu0 0.0
        %2524 = vmatmul.mubr.f32.gmra.mrb[0].mxu0 %v1224
        %v2525 = vpop.f32.mrb[0].mxu0
        %v2526 = vadd.f32 %v518, %v2525
        %v2527 = vpop.f32.mrb[0].mxu0
        %2528 = vmatprep.mubr.f32.mxu0 0.0
        %2529 = vmatmul.mubr.f32.gmra.mrb[0].mxu0 %v1227
        %v2530 = vpop.f32.mrb[0].mxu0
        %v2531 = vadd.f32 %v518, %v2530
        %v2532 = vpop.f32.mrb[0].mxu0
        %2533 = vmatprep.mubr.f32.mxu0 0.0
        %2534 = vmatmul.mubr.f32.gmra.mrb[0].mxu0 %v1230
        %v2535 = vpop.f32.mrb[0].mxu0
        %v2536 = vadd.f32 %v518, %v2535
        %v2537 = vpop.f32.mrb[0].mxu0
        %2538 = vmatprep.mubr.f32.mxu0 0.0
        %2539 = vmatmul.mubr.f32.gmra.mrb[0].mxu0 %v1233
        %v2540 = vpop.f32.mrb[0].mxu0
        %v2541 = vadd.f32 %v518, %v2540
        %v2542 = vpop.f32.mrb[0].mxu0
        %2543 = vmatprep.mubr.f32.mxu0 0.0
        %2544 = vmatmul.mubr.f32.gmra.mrb[0].mxu0 %v1236
        %v2545 = vpop.f32.mrb[0].mxu0
        %v2546 = vadd.f32 %v518, %v2545
        %v2547 = vpop.f32.mrb[0].mxu0
        %2548 = vmatprep.mubr.f32.mxu0 0.0
        %2549 = vmatmul.mubr.f32.gmra.mrb[0].mxu0 %v1239
        %v2550 = vpop.f32.mrb[0].mxu0
        %v2551 = vadd.f32 %v518, %v2550
        %v2552 = vpop.f32.mrb[0].mxu0
        %2553 = vmatprep.mubr.f32.mxu0 0.0
        %2554 = vmatmul.mubr.f32.gmra.mrb[0].mxu0 %v1242
        %v2555 = vpop.f32.mrb[0].mxu0
        %v2556 = vadd.f32 %v518, %v2555
        %v2557 = vpop.f32.mrb[0].mxu0
        %2558 = vmatprep.mubr.f32.mxu0 0.0
        %2559 = vmatmul.mubr.f32.gmra.mrb[0].mxu0 %v1245
        %v2560 = vpop.f32.mrb[0].mxu0
        %v2561 = vadd.f32 %v518, %v2560
        %v2562 = vpop.f32.mrb[0].mxu0
        %2563 = vmatprep.mubr.f32.mxu0 0.0
        %2564 = vmatmul.mubr.f32.gmra.mrb[0].mxu0 %v1248
        %v2565 = vpop.f32.mrb[0].mxu0
        %v2566 = vadd.f32 %v518, %v2565
        %v2567 = vpop.f32.mrb[0].mxu0
        %2568 = vmatprep.mubr.f32.mxu0 0.0
        %2569 = vmatmul.mubr.f32.gmra.mrb[0].mxu0 %v1251
        %v2570 = vpop.f32.mrb[0].mxu0
        %v2571 = vadd.f32 %v518, %v2570
        %v2572 = vpop.f32.mrb[0].mxu0
        %2573 = vmatprep.mubr.f32.mxu0 0.0
        %2574 = vmatmul.mubr.f32.gmra.mrb[0].mxu0 %v1254
        %v2575 = vpop.f32.mrb[0].mxu0
        %v2576 = vadd.f32 %v518, %v2575
        %v2577 = vpop.f32.mrb[0].mxu0
        %2578 = vmatprep.mubr.f32.mxu0 0.0
        %2579 = vmatmul.mubr.f32.gmra.mrb[0].mxu0 %v1257
        %v2580 = vpop.f32.mrb[0].mxu0
        %v2581 = vadd.f32 %v518, %v2580
        %v2582 = vpop.f32.mrb[0].mxu0
        %2583 = vmatprep.mubr.f32.mxu0 0.0
        %2584 = vmatmul.mubr.f32.gmra.mrb[0].mxu0 %v1260
        %v2585 = vpop.f32.mrb[0].mxu0
        %v2586 = vadd.f32 %v518, %v2585
        %v2587 = vpop.f32.mrb[0].mxu0
        %2588 = vmatprep.mubr.f32.mxu0 0.0
        %2589 = vmatmul.mubr.f32.gmra.mrb[0].mxu0 %v1263
        %v2590 = vpop.f32.mrb[0].mxu0
        %v2591 = vadd.f32 %v518, %v2590
        %v2592 = vpop.f32.mrb[0].mxu0
        %2593 = vmatprep.mubr.f32.mxu0 0.0
        %2594 = vmatmul.mubr.f32.gmra.mrb[0].mxu0 %v1266
        %v2595 = vpop.f32.mrb[0].mxu0
        %v2596 = vadd.f32 %v518, %v2595
        %v2597 = vpop.f32.mrb[0].mxu0
        %2598 = vmatprep.mubr.f32.mxu0 0.0
        %2599 = vmatmul.mubr.f32.gmra.mrb[0].mxu0 %v1269
        %v2600 = vpop.f32.mrb[0].mxu0
        %v2601 = vadd.f32 %v518, %v2600
        %v2602 = vpop.f32.mrb[0].mxu0
        %2603 = vmatprep.mubr.f32.mxu0 0.0
        %2604 = vmatmul.mubr.f32.gmra.mrb[0].mxu0 %v1272
        %v2605 = vpop.f32.mrb[0].mxu0
        %v2606 = vadd.f32 %v518, %v2605
        %v2607 = vpop.f32.mrb[0].mxu0
        %2608 = vmatprep.mubr.f32.mxu0 0.0
        %2609 = vmatmul.mubr.f32.gmra.mrb[0].mxu0 %v1275
        %v2610 = vpop.f32.mrb[0].mxu0
        %v2611 = vadd.f32 %v518, %v2610
        %v2612 = vpop.f32.mrb[0].mxu0
        %2613 = vmatprep.mubr.f32.mxu0 0.0
        %2614 = vmatmul.mubr.f32.gmra.mrb[0].mxu0 %v1278
        %v2615 = vpop.f32.mrb[0].mxu0
        %v2616 = vadd.f32 %v518, %v2615
        %v2617 = vpop.f32.mrb[0].mxu0
        %2618 = vmatprep.mubr.f32.mxu0 0.0
        %2619 = vmatmul.mubr.f32.gmra.mrb[0].mxu0 %v1281
        %v2620 = vpop.f32.mrb[0].mxu0
        %v2621 = vadd.f32 %v518, %v2620
        %v2622 = vpop.f32.mrb[0].mxu0
        %2623 = vmatprep.mubr.f32.mxu0 0.0
        %2624 = vmatmul.mubr.f32.gmra.mrb[0].mxu0 %v1284
        %v2625 = vpop.f32.mrb[0].mxu0
        %v2626 = vadd.f32 %v518, %v2625
        %v2627 = vpop.f32.mrb[0].mxu0
        %2628 = vmatprep.mubr.f32.mxu0 0.0
        %2629 = vmatmul.mubr.f32.gmra.mrb[0].mxu0 %v1287
        %v2630 = vpop.f32.mrb[0].mxu0
        %v2631 = vadd.f32 %v518, %v2630
        %v2632 = vpop.f32.mrb[0].mxu0
        %2633 = vdwg.mxu0
        %v2634 = vxor.u32 %v1356, 2147483648
        %v2635 = vxor.u32 %v1361, 2147483648
        %v2636 = vxor.u32 %v1366, 2147483648
        %v2637 = vxor.u32 %v1371, 2147483648
        %v2638 = vxor.u32 %v1376, 2147483648
        %v2639 = vxor.u32 %v1381, 2147483648
        %v2640 = vxor.u32 %v1386, 2147483648
        %v2641 = vxor.u32 %v1391, 2147483648
        %v2642 = vxor.u32 %v1396, 2147483648
        %v2643 = vxor.u32 %v1401, 2147483648
        %v2644 = vxor.u32 %v1406, 2147483648
        %v2645 = vxor.u32 %v1411, 2147483648
        %v2646 = vxor.u32 %v1416, 2147483648
        %v2647 = vxor.u32 %v1421, 2147483648
        %v2648 = vxor.u32 %v1426, 2147483648
        %v2649 = vxor.u32 %v1431, 2147483648
        %v2650 = vxor.u32 %v1436, 2147483648
        %v2651 = vxor.u32 %v1441, 2147483648
        %v2652 = vxor.u32 %v1446, 2147483648
        %v2653 = vxor.u32 %v1451, 2147483648
        %v2654 = vxor.u32 %v1456, 2147483648
        %v2655 = vxor.u32 %v1461, 2147483648
        %v2656 = vxor.u32 %v1466, 2147483648
        %v2657 = vxor.u32 %v1471, 2147483648
        %v2658 = vxor.u32 %v1476, 2147483648
        %v2659 = vxor.u32 %v1481, 2147483648
        %v2660 = vxor.u32 %v1486, 2147483648
        %v2661 = vxor.u32 %v1491, 2147483648
        %v2662 = vxor.u32 %v1496, 2147483648
        %v2663 = vxor.u32 %v1501, 2147483648
        %v2664 = vxor.u32 %v1506, 2147483648
        %v2665 = vxor.u32 %v1511, 2147483648
        %v2666 = vxor.u32 %v1516, 2147483648
        %v2667 = vxor.u32 %v1521, 2147483648
        %v2668 = vxor.u32 %v1526, 2147483648
        %v2669 = vxor.u32 %v1531, 2147483648
        %v2670 = vxor.u32 %v1536, 2147483648
        %v2671 = vxor.u32 %v1541, 2147483648
        %v2672 = vxor.u32 %v1546, 2147483648
        %v2673 = vxor.u32 %v1551, 2147483648
        %v2674 = vxor.u32 %v1556, 2147483648
        %v2675 = vxor.u32 %v1561, 2147483648
        %v2676 = vxor.u32 %v1566, 2147483648
        %v2677 = vxor.u32 %v1571, 2147483648
        %v2678 = vxor.u32 %v1576, 2147483648
        %v2679 = vxor.u32 %v1581, 2147483648
        %v2680 = vxor.u32 %v1586, 2147483648
        %v2681 = vxor.u32 %v1591, 2147483648
        %v2682 = vxor.u32 %v1596, 2147483648
        %v2683 = vxor.u32 %v1601, 2147483648
        %v2684 = vxor.u32 %v1606, 2147483648
        %v2685 = vxor.u32 %v1611, 2147483648
        %v2686 = vxor.u32 %v1616, 2147483648
        %v2687 = vxor.u32 %v1621, 2147483648
        %v2688 = vxor.u32 %v1626, 2147483648
        %v2689 = vxor.u32 %v1631, 2147483648
        %v2690 = vxor.u32 %v1636, 2147483648
        %v2691 = vxor.u32 %v1641, 2147483648
        %v2692 = vxor.u32 %v1646, 2147483648
        %v2693 = vxor.u32 %v1651, 2147483648
        %v2694 = vxor.u32 %v1656, 2147483648
        %v2695 = vxor.u32 %v1661, 2147483648
        %v2696 = vxor.u32 %v1666, 2147483648
        %v2697 = vxor.u32 %v1671, 2147483648
        %v2698 = vxor.u32 %v1676, 2147483648
        %v2699 = vxor.u32 %v1681, 2147483648
        %v2700 = vxor.u32 %v1686, 2147483648
        %v2701 = vxor.u32 %v1691, 2147483648
        %v2702 = vxor.u32 %v1696, 2147483648
        %v2703 = vxor.u32 %v1701, 2147483648
        %v2704 = vxor.u32 %v1706, 2147483648
        %v2705 = vxor.u32 %v1711, 2147483648
        %v2706 = vxor.u32 %v1716, 2147483648
        %v2707 = vxor.u32 %v1721, 2147483648
        %v2708 = vxor.u32 %v1726, 2147483648
        %v2709 = vxor.u32 %v1731, 2147483648
        %v2710 = vxor.u32 %v1736, 2147483648
        %v2711 = vxor.u32 %v1741, 2147483648
        %v2712 = vxor.u32 %v1746, 2147483648
        %v2713 = vxor.u32 %v1751, 2147483648
        %v2714 = vxor.u32 %v1756, 2147483648
        %v2715 = vxor.u32 %v1761, 2147483648
        %v2716 = vxor.u32 %v1766, 2147483648
        %v2717 = vxor.u32 %v1771, 2147483648
        %v2718 = vxor.u32 %v1776, 2147483648
        %v2719 = vxor.u32 %v1781, 2147483648
        %v2720 = vxor.u32 %v1786, 2147483648
        %v2721 = vxor.u32 %v1791, 2147483648
        %v2722 = vxor.u32 %v1796, 2147483648
        %v2723 = vxor.u32 %v1801, 2147483648
        %v2724 = vxor.u32 %v1806, 2147483648
        %v2725 = vxor.u32 %v1811, 2147483648
        %v2726 = vxor.u32 %v1816, 2147483648
        %v2727 = vxor.u32 %v1821, 2147483648
        %v2728 = vxor.u32 %v1826, 2147483648
        %v2729 = vxor.u32 %v1831, 2147483648
        %v2730 = vxor.u32 %v1836, 2147483648
        %v2731 = vxor.u32 %v1841, 2147483648
        %v2732 = vxor.u32 %v1846, 2147483648
        %v2733 = vxor.u32 %v1851, 2147483648
        %v2734 = vxor.u32 %v1856, 2147483648
        %v2735 = vxor.u32 %v1861, 2147483648
        %v2736 = vxor.u32 %v1866, 2147483648
        %v2737 = vxor.u32 %v1871, 2147483648
        %v2738 = vxor.u32 %v1876, 2147483648
        %v2739 = vxor.u32 %v1881, 2147483648
        %v2740 = vxor.u32 %v1886, 2147483648
        %v2741 = vxor.u32 %v1891, 2147483648
        %v2742 = vxor.u32 %v1896, 2147483648
        %v2743 = vxor.u32 %v1901, 2147483648
        %v2744 = vxor.u32 %v1906, 2147483648
        %v2745 = vxor.u32 %v1911, 2147483648
        %v2746 = vxor.u32 %v1916, 2147483648
        %v2747 = vxor.u32 %v1921, 2147483648
        %v2748 = vxor.u32 %v1926, 2147483648
        %v2749 = vxor.u32 %v1931, 2147483648
        %v2750 = vxor.u32 %v1936, 2147483648
        %v2751 = vxor.u32 %v1941, 2147483648
        %v2752 = vxor.u32 %v1946, 2147483648
        %v2753 = vxor.u32 %v1951, 2147483648
        %v2754 = vxor.u32 %v1956, 2147483648
        %v2755 = vxor.u32 %v1961, 2147483648
        %v2756 = vxor.u32 %v1966, 2147483648
        %v2757 = vxor.u32 %v1971, 2147483648
        %v2758 = vxor.u32 %v1976, 2147483648
        %v2759 = vxor.u32 %v1981, 2147483648
        %v2760 = vxor.u32 %v1986, 2147483648
        %v2761 = vxor.u32 %v1991, 2147483648
        %v2762 = vxor.u32 %v1996, 2147483648
        %v2763 = vxor.u32 %v2001, 2147483648
        %v2764 = vxor.u32 %v2006, 2147483648
        %v2765 = vxor.u32 %v2011, 2147483648
        %v2766 = vxor.u32 %v2016, 2147483648
        %v2767 = vxor.u32 %v2021, 2147483648
        %v2768 = vxor.u32 %v2026, 2147483648
        %v2769 = vxor.u32 %v2031, 2147483648
        %v2770 = vxor.u32 %v2036, 2147483648
        %v2771 = vxor.u32 %v2041, 2147483648
        %v2772 = vxor.u32 %v2046, 2147483648
        %v2773 = vxor.u32 %v2051, 2147483648
        %v2774 = vxor.u32 %v2056, 2147483648
        %v2775 = vxor.u32 %v2061, 2147483648
        %v2776 = vxor.u32 %v2066, 2147483648
        %v2777 = vxor.u32 %v2071, 2147483648
        %v2778 = vxor.u32 %v2076, 2147483648
        %v2779 = vxor.u32 %v2081, 2147483648
        %v2780 = vxor.u32 %v2086, 2147483648
        %v2781 = vxor.u32 %v2091, 2147483648
        %v2782 = vxor.u32 %v2096, 2147483648
        %v2783 = vxor.u32 %v2101, 2147483648
        %v2784 = vxor.u32 %v2106, 2147483648
        %v2785 = vxor.u32 %v2111, 2147483648
        %v2786 = vxor.u32 %v2116, 2147483648
        %v2787 = vxor.u32 %v2121, 2147483648
        %v2788 = vxor.u32 %v2126, 2147483648
        %v2789 = vxor.u32 %v2131, 2147483648
        %v2790 = vxor.u32 %v2136, 2147483648
        %v2791 = vxor.u32 %v2141, 2147483648
        %v2792 = vxor.u32 %v2146, 2147483648
        %v2793 = vxor.u32 %v2151, 2147483648
        %v2794 = vxor.u32 %v2156, 2147483648
        %v2795 = vxor.u32 %v2161, 2147483648
        %v2796 = vxor.u32 %v2166, 2147483648
        %v2797 = vxor.u32 %v2171, 2147483648
        %v2798 = vxor.u32 %v2176, 2147483648
        %v2799 = vxor.u32 %v2181, 2147483648
        %v2800 = vxor.u32 %v2186, 2147483648
        %v2801 = vxor.u32 %v2191, 2147483648
        %v2802 = vxor.u32 %v2196, 2147483648
        %v2803 = vxor.u32 %v2201, 2147483648
        %v2804 = vxor.u32 %v2206, 2147483648
        %v2805 = vxor.u32 %v2211, 2147483648
        %v2806 = vxor.u32 %v2216, 2147483648
        %v2807 = vxor.u32 %v2221, 2147483648
        %v2808 = vxor.u32 %v2226, 2147483648
        %v2809 = vxor.u32 %v2231, 2147483648
        %v2810 = vxor.u32 %v2236, 2147483648
        %v2811 = vxor.u32 %v2241, 2147483648
        %v2812 = vxor.u32 %v2246, 2147483648
        %v2813 = vxor.u32 %v2251, 2147483648
        %v2814 = vxor.u32 %v2256, 2147483648
        %v2815 = vxor.u32 %v2261, 2147483648
        %v2816 = vxor.u32 %v2266, 2147483648
        %v2817 = vxor.u32 %v2271, 2147483648
        %v2818 = vxor.u32 %v2276, 2147483648
        %v2819 = vxor.u32 %v2281, 2147483648
        %v2820 = vxor.u32 %v2286, 2147483648
        %v2821 = vxor.u32 %v2291, 2147483648
        %v2822 = vxor.u32 %v2296, 2147483648
        %v2823 = vxor.u32 %v2301, 2147483648
        %v2824 = vxor.u32 %v2306, 2147483648
        %v2825 = vxor.u32 %v2311, 2147483648
        %v2826 = vxor.u32 %v2316, 2147483648
        %v2827 = vxor.u32 %v2321, 2147483648
        %v2828 = vxor.u32 %v2326, 2147483648
        %v2829 = vxor.u32 %v2331, 2147483648
        %v2830 = vxor.u32 %v2336, 2147483648
        %v2831 = vxor.u32 %v2341, 2147483648
        %v2832 = vxor.u32 %v2346, 2147483648
        %v2833 = vxor.u32 %v2351, 2147483648
        %v2834 = vxor.u32 %v2356, 2147483648
        %v2835 = vxor.u32 %v2361, 2147483648
        %v2836 = vxor.u32 %v2366, 2147483648
        %v2837 = vxor.u32 %v2371, 2147483648
        %v2838 = vxor.u32 %v2376, 2147483648
        %v2839 = vxor.u32 %v2381, 2147483648
        %v2840 = vxor.u32 %v2386, 2147483648
        %v2841 = vxor.u32 %v2391, 2147483648
        %v2842 = vxor.u32 %v2396, 2147483648
        %v2843 = vxor.u32 %v2401, 2147483648
        %v2844 = vxor.u32 %v2406, 2147483648
        %v2845 = vxor.u32 %v2411, 2147483648
        %v2846 = vxor.u32 %v2416, 2147483648
        %v2847 = vxor.u32 %v2421, 2147483648
        %v2848 = vxor.u32 %v2426, 2147483648
        %v2849 = vxor.u32 %v2431, 2147483648
        %v2850 = vxor.u32 %v2436, 2147483648
        %v2851 = vxor.u32 %v2441, 2147483648
        %v2852 = vxor.u32 %v2446, 2147483648
        %v2853 = vxor.u32 %v2451, 2147483648
        %v2854 = vxor.u32 %v2456, 2147483648
        %v2855 = vxor.u32 %v2461, 2147483648
        %v2856 = vxor.u32 %v2466, 2147483648
        %v2857 = vxor.u32 %v2471, 2147483648
        %v2858 = vxor.u32 %v2476, 2147483648
        %v2859 = vxor.u32 %v2481, 2147483648
        %v2860 = vxor.u32 %v2486, 2147483648
        %v2861 = vxor.u32 %v2491, 2147483648
        %v2862 = vxor.u32 %v2496, 2147483648
        %v2863 = vxor.u32 %v2501, 2147483648
        %v2864 = vxor.u32 %v2506, 2147483648
        %v2865 = vxor.u32 %v2511, 2147483648
        %v2866 = vxor.u32 %v2516, 2147483648
        %v2867 = vxor.u32 %v2521, 2147483648
        %v2868 = vxor.u32 %v2526, 2147483648
        %v2869 = vxor.u32 %v2531, 2147483648
        %v2870 = vxor.u32 %v2536, 2147483648
        %v2871 = vxor.u32 %v2541, 2147483648
        %v2872 = vxor.u32 %v2546, 2147483648
        %v2873 = vxor.u32 %v2551, 2147483648
        %v2874 = vxor.u32 %v2556, 2147483648
        %v2875 = vxor.u32 %v2561, 2147483648
        %v2876 = vxor.u32 %v2566, 2147483648
        %v2877 = vxor.u32 %v2571, 2147483648
        %v2878 = vxor.u32 %v2576, 2147483648
        %v2879 = vxor.u32 %v2581, 2147483648
        %v2880 = vxor.u32 %v2586, 2147483648
        %v2881 = vxor.u32 %v2591, 2147483648
        %v2882 = vxor.u32 %v2596, 2147483648
        %v2883 = vxor.u32 %v2601, 2147483648
        %v2884 = vxor.u32 %v2606, 2147483648
        %v2885 = vxor.u32 %v2611, 2147483648
        %v2886 = vxor.u32 %v2616, 2147483648
        %v2887 = vxor.u32 %v2621, 2147483648
        %v2888 = vxor.u32 %v2626, 2147483648
        %v2889 = vxor.u32 %v2631, 2147483648
        %v2890 = vmul.f32 %v2634, 1.442695
        %v2891 = vpow.pop %v2890
        %v2892 = vmul.f32 %v2635, 1.442695
        %v2893 = vpow.pop %v2892
        %v2894 = vmul.f32 %v2636, 1.442695
        %v2895 = vpow.pop %v2894
        %v2896 = vmul.f32 %v2637, 1.442695
        %v2897 = vpow.pop %v2896
        %v2898 = vmul.f32 %v2638, 1.442695
        %v2899 = vpow.pop %v2898
        %v2900 = vmul.f32 %v2639, 1.442695
        %v2901 = vpow.pop %v2900
        %v2902 = vmul.f32 %v2640, 1.442695
        %v2903 = vpow.pop %v2902
        %v2904 = vmul.f32 %v2641, 1.442695
        %v2905 = vpow.pop %v2904
        %v2906 = vmul.f32 %v2642, 1.442695
        %v2907 = vpow.pop %v2906
        %v2908 = vmul.f32 %v2643, 1.442695
        %v2909 = vpow.pop %v2908
        %v2910 = vmul.f32 %v2644, 1.442695
        %v2911 = vpow.pop %v2910
        %v2912 = vmul.f32 %v2645, 1.442695
        %v2913 = vpow.pop %v2912
        %v2914 = vmul.f32 %v2646, 1.442695
        %v2915 = vpow.pop %v2914
        %v2916 = vmul.f32 %v2647, 1.442695
        %v2917 = vpow.pop %v2916
        %v2918 = vmul.f32 %v2648, 1.442695
        %v2919 = vpow.pop %v2918
        %v2920 = vmul.f32 %v2649, 1.442695
        %v2921 = vpow.pop %v2920
        %v2922 = vmul.f32 %v2650, 1.442695
        %v2923 = vpow.pop %v2922
        %v2924 = vmul.f32 %v2651, 1.442695
        %v2925 = vpow.pop %v2924
        %v2926 = vmul.f32 %v2652, 1.442695
        %v2927 = vpow.pop %v2926
        %v2928 = vmul.f32 %v2653, 1.442695
        %v2929 = vpow.pop %v2928
        %v2930 = vmul.f32 %v2654, 1.442695
        %v2931 = vpow.pop %v2930
        %v2932 = vmul.f32 %v2655, 1.442695
        %v2933 = vpow.pop %v2932
        %v2934 = vmul.f32 %v2656, 1.442695
        %v2935 = vpow.pop %v2934
        %v2936 = vmul.f32 %v2657, 1.442695
        %v2937 = vpow.pop %v2936
        %v2938 = vmul.f32 %v2658, 1.442695
        %v2939 = vpow.pop %v2938
        %v2940 = vmul.f32 %v2659, 1.442695
        %v2941 = vpow.pop %v2940
        %v2942 = vmul.f32 %v2660, 1.442695
        %v2943 = vpow.pop %v2942
        %v2944 = vmul.f32 %v2661, 1.442695
        %v2945 = vpow.pop %v2944
        %v2946 = vmul.f32 %v2662, 1.442695
        %v2947 = vpow.pop %v2946
        %v2948 = vmul.f32 %v2663, 1.442695
        %v2949 = vpow.pop %v2948
        %v2950 = vmul.f32 %v2664, 1.442695
        %v2951 = vpow.pop %v2950
        %v2952 = vmul.f32 %v2665, 1.442695
        %v2953 = vpow.pop %v2952
        %v2954 = vmul.f32 %v2666, 1.442695
        %v2955 = vpow.pop %v2954
        %v2956 = vmul.f32 %v2667, 1.442695
        %v2957 = vpow.pop %v2956
        %v2958 = vmul.f32 %v2668, 1.442695
        %v2959 = vpow.pop %v2958
        %v2960 = vmul.f32 %v2669, 1.442695
        %v2961 = vpow.pop %v2960
        %v2962 = vmul.f32 %v2670, 1.442695
        %v2963 = vpow.pop %v2962
        %v2964 = vmul.f32 %v2671, 1.442695
        %v2965 = vpow.pop %v2964
        %v2966 = vmul.f32 %v2672, 1.442695
        %v2967 = vpow.pop %v2966
        %v2968 = vmul.f32 %v2673, 1.442695
        %v2969 = vpow.pop %v2968
        %v2970 = vmul.f32 %v2674, 1.442695
        %v2971 = vpow.pop %v2970
        %v2972 = vmul.f32 %v2675, 1.442695
        %v2973 = vpow.pop %v2972
        %v2974 = vmul.f32 %v2676, 1.442695
        %v2975 = vpow.pop %v2974
        %v2976 = vmul.f32 %v2677, 1.442695
        %v2977 = vpow.pop %v2976
        %v2978 = vmul.f32 %v2678, 1.442695
        %v2979 = vpow.pop %v2978
        %v2980 = vmul.f32 %v2679, 1.442695
        %v2981 = vpow.pop %v2980
        %v2982 = vmul.f32 %v2680, 1.442695
        %v2983 = vpow.pop %v2982
        %v2984 = vmul.f32 %v2681, 1.442695
        %v2985 = vpow.pop %v2984
        %v2986 = vmul.f32 %v2682, 1.442695
        %v2987 = vpow.pop %v2986
        %v2988 = vmul.f32 %v2683, 1.442695
        %v2989 = vpow.pop %v2988
        %v2990 = vmul.f32 %v2684, 1.442695
        %v2991 = vpow.pop %v2990
        %v2992 = vmul.f32 %v2685, 1.442695
        %v2993 = vpow.pop %v2992
        %v2994 = vmul.f32 %v2686, 1.442695
        %v2995 = vpow.pop %v2994
        %v2996 = vmul.f32 %v2687, 1.442695
        %v2997 = vpow.pop %v2996
        %v2998 = vmul.f32 %v2688, 1.442695
        %v2999 = vpow.pop %v2998
        %v3000 = vmul.f32 %v2689, 1.442695
        %v3001 = vpow.pop %v3000
        %v3002 = vmul.f32 %v2690, 1.442695
        %v3003 = vpow.pop %v3002
        %v3004 = vmul.f32 %v2691, 1.442695
        %v3005 = vpow.pop %v3004
        %v3006 = vmul.f32 %v2692, 1.442695
        %v3007 = vpow.pop %v3006
        %v3008 = vmul.f32 %v2693, 1.442695
        %v3009 = vpow.pop %v3008
        %v3010 = vmul.f32 %v2694, 1.442695
        %v3011 = vpow.pop %v3010
        %v3012 = vmul.f32 %v2695, 1.442695
        %v3013 = vpow.pop %v3012
        %v3014 = vmul.f32 %v2696, 1.442695
        %v3015 = vpow.pop %v3014
        %v3016 = vmul.f32 %v2697, 1.442695
        %v3017 = vpow.pop %v3016
        %v3018 = vmul.f32 %v2698, 1.442695
        %v3019 = vpow.pop %v3018
        %v3020 = vmul.f32 %v2699, 1.442695
        %v3021 = vpow.pop %v3020
        %v3022 = vmul.f32 %v2700, 1.442695
        %v3023 = vpow.pop %v3022
        %v3024 = vmul.f32 %v2701, 1.442695
        %v3025 = vpow.pop %v3024
        %v3026 = vmul.f32 %v2702, 1.442695
        %v3027 = vpow.pop %v3026
        %v3028 = vmul.f32 %v2703, 1.442695
        %v3029 = vpow.pop %v3028
        %v3030 = vmul.f32 %v2704, 1.442695
        %v3031 = vpow.pop %v3030
        %v3032 = vmul.f32 %v2705, 1.442695
        %v3033 = vpow.pop %v3032
        %v3034 = vmul.f32 %v2706, 1.442695
        %v3035 = vpow.pop %v3034
        %v3036 = vmul.f32 %v2707, 1.442695
        %v3037 = vpow.pop %v3036
        %v3038 = vmul.f32 %v2708, 1.442695
        %v3039 = vpow.pop %v3038
        %v3040 = vmul.f32 %v2709, 1.442695
        %v3041 = vpow.pop %v3040
        %v3042 = vmul.f32 %v2710, 1.442695
        %v3043 = vpow.pop %v3042
        %v3044 = vmul.f32 %v2711, 1.442695
        %v3045 = vpow.pop %v3044
        %v3046 = vmul.f32 %v2712, 1.442695
        %v3047 = vpow.pop %v3046
        %v3048 = vmul.f32 %v2713, 1.442695
        %v3049 = vpow.pop %v3048
        %v3050 = vmul.f32 %v2714, 1.442695
        %v3051 = vpow.pop %v3050
        %v3052 = vmul.f32 %v2715, 1.442695
        %v3053 = vpow.pop %v3052
        %v3054 = vmul.f32 %v2716, 1.442695
        %v3055 = vpow.pop %v3054
        %v3056 = vmul.f32 %v2717, 1.442695
        %v3057 = vpow.pop %v3056
        %v3058 = vmul.f32 %v2718, 1.442695
        %v3059 = vpow.pop %v3058
        %v3060 = vmul.f32 %v2719, 1.442695
        %v3061 = vpow.pop %v3060
        %v3062 = vmul.f32 %v2720, 1.442695
        %v3063 = vpow.pop %v3062
        %v3064 = vmul.f32 %v2721, 1.442695
        %v3065 = vpow.pop %v3064
        %v3066 = vmul.f32 %v2722, 1.442695
        %v3067 = vpow.pop %v3066
        %v3068 = vmul.f32 %v2723, 1.442695
        %v3069 = vpow.pop %v3068
        %v3070 = vmul.f32 %v2724, 1.442695
        %v3071 = vpow.pop %v3070
        %v3072 = vmul.f32 %v2725, 1.442695
        %v3073 = vpow.pop %v3072
        %v3074 = vmul.f32 %v2726, 1.442695
        %v3075 = vpow.pop %v3074
        %v3076 = vmul.f32 %v2727, 1.442695
        %v3077 = vpow.pop %v3076
        %v3078 = vmul.f32 %v2728, 1.442695
        %v3079 = vpow.pop %v3078
        %v3080 = vmul.f32 %v2729, 1.442695
        %v3081 = vpow.pop %v3080
        %v3082 = vmul.f32 %v2730, 1.442695
        %v3083 = vpow.pop %v3082
        %v3084 = vmul.f32 %v2731, 1.442695
        %v3085 = vpow.pop %v3084
        %v3086 = vmul.f32 %v2732, 1.442695
        %v3087 = vpow.pop %v3086
        %v3088 = vmul.f32 %v2733, 1.442695
        %v3089 = vpow.pop %v3088
        %v3090 = vmul.f32 %v2734, 1.442695
        %v3091 = vpow.pop %v3090
        %v3092 = vmul.f32 %v2735, 1.442695
        %v3093 = vpow.pop %v3092
        %v3094 = vmul.f32 %v2736, 1.442695
        %v3095 = vpow.pop %v3094
        %v3096 = vmul.f32 %v2737, 1.442695
        %v3097 = vpow.pop %v3096
        %v3098 = vmul.f32 %v2738, 1.442695
        %v3099 = vpow.pop %v3098
        %v3100 = vmul.f32 %v2739, 1.442695
        %v3101 = vpow.pop %v3100
        %v3102 = vmul.f32 %v2740, 1.442695
        %v3103 = vpow.pop %v3102
        %v3104 = vmul.f32 %v2741, 1.442695
        %v3105 = vpow.pop %v3104
        %v3106 = vmul.f32 %v2742, 1.442695
        %v3107 = vpow.pop %v3106
        %v3108 = vmul.f32 %v2743, 1.442695
        %v3109 = vpow.pop %v3108
        %v3110 = vmul.f32 %v2744, 1.442695
        %v3111 = vpow.pop %v3110
        %v3112 = vmul.f32 %v2745, 1.442695
        %v3113 = vpow.pop %v3112
        %v3114 = vmul.f32 %v2746, 1.442695
        %v3115 = vpow.pop %v3114
        %v3116 = vmul.f32 %v2747, 1.442695
        %v3117 = vpow.pop %v3116
        %v3118 = vmul.f32 %v2748, 1.442695
        %v3119 = vpow.pop %v3118
        %v3120 = vmul.f32 %v2749, 1.442695
        %v3121 = vpow.pop %v3120
        %v3122 = vmul.f32 %v2750, 1.442695
        %v3123 = vpow.pop %v3122
        %v3124 = vmul.f32 %v2751, 1.442695
        %v3125 = vpow.pop %v3124
        %v3126 = vmul.f32 %v2752, 1.442695
        %v3127 = vpow.pop %v3126
        %v3128 = vmul.f32 %v2753, 1.442695
        %v3129 = vpow.pop %v3128
        %v3130 = vmul.f32 %v2754, 1.442695
        %v3131 = vpow.pop %v3130
        %v3132 = vmul.f32 %v2755, 1.442695
        %v3133 = vpow.pop %v3132
        %v3134 = vmul.f32 %v2756, 1.442695
        %v3135 = vpow.pop %v3134
        %v3136 = vmul.f32 %v2757, 1.442695
        %v3137 = vpow.pop %v3136
        %v3138 = vmul.f32 %v2758, 1.442695
        %v3139 = vpow.pop %v3138
        %v3140 = vmul.f32 %v2759, 1.442695
        %v3141 = vpow.pop %v3140
        %v3142 = vmul.f32 %v2760, 1.442695
        %v3143 = vpow.pop %v3142
        %v3144 = vmul.f32 %v2761, 1.442695
        %v3145 = vpow.pop %v3144
        %v3146 = vmul.f32 %v2762, 1.442695
        %v3147 = vpow.pop %v3146
        %v3148 = vmul.f32 %v2763, 1.442695
        %v3149 = vpow.pop %v3148
        %v3150 = vmul.f32 %v2764, 1.442695
        %v3151 = vpow.pop %v3150
        %v3152 = vmul.f32 %v2765, 1.442695
        %v3153 = vpow.pop %v3152
        %v3154 = vmul.f32 %v2766, 1.442695
        %v3155 = vpow.pop %v3154
        %v3156 = vmul.f32 %v2767, 1.442695
        %v3157 = vpow.pop %v3156
        %v3158 = vmul.f32 %v2768, 1.442695
        %v3159 = vpow.pop %v3158
        %v3160 = vmul.f32 %v2769, 1.442695
        %v3161 = vpow.pop %v3160
        %v3162 = vmul.f32 %v2770, 1.442695
        %v3163 = vpow.pop %v3162
        %v3164 = vmul.f32 %v2771, 1.442695
        %v3165 = vpow.pop %v3164
        %v3166 = vmul.f32 %v2772, 1.442695
        %v3167 = vpow.pop %v3166
        %v3168 = vmul.f32 %v2773, 1.442695
        %v3169 = vpow.pop %v3168
        %v3170 = vmul.f32 %v2774, 1.442695
        %v3171 = vpow.pop %v3170
        %v3172 = vmul.f32 %v2775, 1.442695
        %v3173 = vpow.pop %v3172
        %v3174 = vmul.f32 %v2776, 1.442695
        %v3175 = vpow.pop %v3174
        %v3176 = vmul.f32 %v2777, 1.442695
        %v3177 = vpow.pop %v3176
        %v3178 = vmul.f32 %v2778, 1.442695
        %v3179 = vpow.pop %v3178
        %v3180 = vmul.f32 %v2779, 1.442695
        %v3181 = vpow.pop %v3180
        %v3182 = vmul.f32 %v2780, 1.442695
        %v3183 = vpow.pop %v3182
        %v3184 = vmul.f32 %v2781, 1.442695
        %v3185 = vpow.pop %v3184
        %v3186 = vmul.f32 %v2782, 1.442695
        %v3187 = vpow.pop %v3186
        %v3188 = vmul.f32 %v2783, 1.442695
        %v3189 = vpow.pop %v3188
        %v3190 = vmul.f32 %v2784, 1.442695
        %v3191 = vpow.pop %v3190
        %v3192 = vmul.f32 %v2785, 1.442695
        %v3193 = vpow.pop %v3192
        %v3194 = vmul.f32 %v2786, 1.442695
        %v3195 = vpow.pop %v3194
        %v3196 = vmul.f32 %v2787, 1.442695
        %v3197 = vpow.pop %v3196
        %v3198 = vmul.f32 %v2788, 1.442695
        %v3199 = vpow.pop %v3198
        %v3200 = vmul.f32 %v2789, 1.442695
        %v3201 = vpow.pop %v3200
        %v3202 = vmul.f32 %v2790, 1.442695
        %v3203 = vpow.pop %v3202
        %v3204 = vmul.f32 %v2791, 1.442695
        %v3205 = vpow.pop %v3204
        %v3206 = vmul.f32 %v2792, 1.442695
        %v3207 = vpow.pop %v3206
        %v3208 = vmul.f32 %v2793, 1.442695
        %v3209 = vpow.pop %v3208
        %v3210 = vmul.f32 %v2794, 1.442695
        %v3211 = vpow.pop %v3210
        %v3212 = vmul.f32 %v2795, 1.442695
        %v3213 = vpow.pop %v3212
        %v3214 = vmul.f32 %v2796, 1.442695
        %v3215 = vpow.pop %v3214
        %v3216 = vmul.f32 %v2797, 1.442695
        %v3217 = vpow.pop %v3216
        %v3218 = vmul.f32 %v2798, 1.442695
        %v3219 = vpow.pop %v3218
        %v3220 = vmul.f32 %v2799, 1.442695
        %v3221 = vpow.pop %v3220
        %v3222 = vmul.f32 %v2800, 1.442695
        %v3223 = vpow.pop %v3222
        %v3224 = vmul.f32 %v2801, 1.442695
        %v3225 = vpow.pop %v3224
        %v3226 = vmul.f32 %v2802, 1.442695
        %v3227 = vpow.pop %v3226
        %v3228 = vmul.f32 %v2803, 1.442695
        %v3229 = vpow.pop %v3228
        %v3230 = vmul.f32 %v2804, 1.442695
        %v3231 = vpow.pop %v3230
        %v3232 = vmul.f32 %v2805, 1.442695
        %v3233 = vpow.pop %v3232
        %v3234 = vmul.f32 %v2806, 1.442695
        %v3235 = vpow.pop %v3234
        %v3236 = vmul.f32 %v2807, 1.442695
        %v3237 = vpow.pop %v3236
        %v3238 = vmul.f32 %v2808, 1.442695
        %v3239 = vpow.pop %v3238
        %v3240 = vmul.f32 %v2809, 1.442695
        %v3241 = vpow.pop %v3240
        %v3242 = vmul.f32 %v2810, 1.442695
        %v3243 = vpow.pop %v3242
        %v3244 = vmul.f32 %v2811, 1.442695
        %v3245 = vpow.pop %v3244
        %v3246 = vmul.f32 %v2812, 1.442695
        %v3247 = vpow.pop %v3246
        %v3248 = vmul.f32 %v2813, 1.442695
        %v3249 = vpow.pop %v3248
        %v3250 = vmul.f32 %v2814, 1.442695
        %v3251 = vpow.pop %v3250
        %v3252 = vmul.f32 %v2815, 1.442695
        %v3253 = vpow.pop %v3252
        %v3254 = vmul.f32 %v2816, 1.442695
        %v3255 = vpow.pop %v3254
        %v3256 = vmul.f32 %v2817, 1.442695
        %v3257 = vpow.pop %v3256
        %v3258 = vmul.f32 %v2818, 1.442695
        %v3259 = vpow.pop %v3258
        %v3260 = vmul.f32 %v2819, 1.442695
        %v3261 = vpow.pop %v3260
        %v3262 = vmul.f32 %v2820, 1.442695
        %v3263 = vpow.pop %v3262
        %v3264 = vmul.f32 %v2821, 1.442695
        %v3265 = vpow.pop %v3264
        %v3266 = vmul.f32 %v2822, 1.442695
        %v3267 = vpow.pop %v3266
        %v3268 = vmul.f32 %v2823, 1.442695
        %v3269 = vpow.pop %v3268
        %v3270 = vmul.f32 %v2824, 1.442695
        %v3271 = vpow.pop %v3270
        %v3272 = vmul.f32 %v2825, 1.442695
        %v3273 = vpow.pop %v3272
        %v3274 = vmul.f32 %v2826, 1.442695
        %v3275 = vpow.pop %v3274
        %v3276 = vmul.f32 %v2827, 1.442695
        %v3277 = vpow.pop %v3276
        %v3278 = vmul.f32 %v2828, 1.442695
        %v3279 = vpow.pop %v3278
        %v3280 = vmul.f32 %v2829, 1.442695
        %v3281 = vpow.pop %v3280
        %v3282 = vmul.f32 %v2830, 1.442695
        %v3283 = vpow.pop %v3282
        %v3284 = vmul.f32 %v2831, 1.442695
        %v3285 = vpow.pop %v3284
        %v3286 = vmul.f32 %v2832, 1.442695
        %v3287 = vpow.pop %v3286
        %v3288 = vmul.f32 %v2833, 1.442695
        %v3289 = vpow.pop %v3288
        %v3290 = vmul.f32 %v2834, 1.442695
        %v3291 = vpow.pop %v3290
        %v3292 = vmul.f32 %v2835, 1.442695
        %v3293 = vpow.pop %v3292
        %v3294 = vmul.f32 %v2836, 1.442695
        %v3295 = vpow.pop %v3294
        %v3296 = vmul.f32 %v2837, 1.442695
        %v3297 = vpow.pop %v3296
        %v3298 = vmul.f32 %v2838, 1.442695
        %v3299 = vpow.pop %v3298
        %v3300 = vmul.f32 %v2839, 1.442695
        %v3301 = vpow.pop %v3300
        %v3302 = vmul.f32 %v2840, 1.442695
        %v3303 = vpow.pop %v3302
        %v3304 = vmul.f32 %v2841, 1.442695
        %v3305 = vpow.pop %v3304
        %v3306 = vmul.f32 %v2842, 1.442695
        %v3307 = vpow.pop %v3306
        %v3308 = vmul.f32 %v2843, 1.442695
        %v3309 = vpow.pop %v3308
        %v3310 = vmul.f32 %v2844, 1.442695
        %v3311 = vpow.pop %v3310
        %v3312 = vmul.f32 %v2845, 1.442695
        %v3313 = vpow.pop %v3312
        %v3314 = vmul.f32 %v2846, 1.442695
        %v3315 = vpow.pop %v3314
        %v3316 = vmul.f32 %v2847, 1.442695
        %v3317 = vpow.pop %v3316
        %v3318 = vmul.f32 %v2848, 1.442695
        %v3319 = vpow.pop %v3318
        %v3320 = vmul.f32 %v2849, 1.442695
        %v3321 = vpow.pop %v3320
        %v3322 = vmul.f32 %v2850, 1.442695
        %v3323 = vpow.pop %v3322
        %v3324 = vmul.f32 %v2851, 1.442695
        %v3325 = vpow.pop %v3324
        %v3326 = vmul.f32 %v2852, 1.442695
        %v3327 = vpow.pop %v3326
        %v3328 = vmul.f32 %v2853, 1.442695
        %v3329 = vpow.pop %v3328
        %v3330 = vmul.f32 %v2854, 1.442695
        %v3331 = vpow.pop %v3330
        %v3332 = vmul.f32 %v2855, 1.442695
        %v3333 = vpow.pop %v3332
        %v3334 = vmul.f32 %v2856, 1.442695
        %v3335 = vpow.pop %v3334
        %v3336 = vmul.f32 %v2857, 1.442695
        %v3337 = vpow.pop %v3336
        %v3338 = vmul.f32 %v2858, 1.442695
        %v3339 = vpow.pop %v3338
        %v3340 = vmul.f32 %v2859, 1.442695
        %v3341 = vpow.pop %v3340
        %v3342 = vmul.f32 %v2860, 1.442695
        %v3343 = vpow.pop %v3342
        %v3344 = vmul.f32 %v2861, 1.442695
        %v3345 = vpow.pop %v3344
        %v3346 = vmul.f32 %v2862, 1.442695
        %v3347 = vpow.pop %v3346
        %v3348 = vmul.f32 %v2863, 1.442695
        %v3349 = vpow.pop %v3348
        %v3350 = vmul.f32 %v2864, 1.442695
        %v3351 = vpow.pop %v3350
        %v3352 = vmul.f32 %v2865, 1.442695
        %v3353 = vpow.pop %v3352
        %v3354 = vmul.f32 %v2866, 1.442695
        %v3355 = vpow.pop %v3354
        %v3356 = vmul.f32 %v2867, 1.442695
        %v3357 = vpow.pop %v3356
        %v3358 = vmul.f32 %v2868, 1.442695
        %v3359 = vpow.pop %v3358
        %v3360 = vmul.f32 %v2869, 1.442695
        %v3361 = vpow.pop %v3360
        %v3362 = vmul.f32 %v2870, 1.442695
        %v3363 = vpow.pop %v3362
        %v3364 = vmul.f32 %v2871, 1.442695
        %v3365 = vpow.pop %v3364
        %v3366 = vmul.f32 %v2872, 1.442695
        %v3367 = vpow.pop %v3366
        %v3368 = vmul.f32 %v2873, 1.442695
        %v3369 = vpow.pop %v3368
        %v3370 = vmul.f32 %v2874, 1.442695
        %v3371 = vpow.pop %v3370
        %v3372 = vmul.f32 %v2875, 1.442695
        %v3373 = vpow.pop %v3372
        %v3374 = vmul.f32 %v2876, 1.442695
        %v3375 = vpow.pop %v3374
        %v3376 = vmul.f32 %v2877, 1.442695
        %v3377 = vpow.pop %v3376
        %v3378 = vmul.f32 %v2878, 1.442695
        %v3379 = vpow.pop %v3378
        %v3380 = vmul.f32 %v2879, 1.442695
        %v3381 = vpow.pop %v3380
        %v3382 = vmul.f32 %v2880, 1.442695
        %v3383 = vpow.pop %v3382
        %v3384 = vmul.f32 %v2881, 1.442695
        %v3385 = vpow.pop %v3384
        %v3386 = vmul.f32 %v2882, 1.442695
        %v3387 = vpow.pop %v3386
        %v3388 = vmul.f32 %v2883, 1.442695
        %v3389 = vpow.pop %v3388
        %v3390 = vmul.f32 %v2884, 1.442695
        %v3391 = vpow.pop %v3390
        %v3392 = vmul.f32 %v2885, 1.442695
        %v3393 = vpow.pop %v3392
        %v3394 = vmul.f32 %v2886, 1.442695
        %v3395 = vpow.pop %v3394
        %v3396 = vmul.f32 %v2887, 1.442695
        %v3397 = vpow.pop %v3396
        %v3398 = vmul.f32 %v2888, 1.442695
        %v3399 = vpow.pop %v3398
        %v3400 = vmul.f32 %v2889, 1.442695
        %v3401 = vpow.pop %v3400
        %v3402 = vadd.f32 %v2891, 1.0
        %v3403 = vadd.f32 %v2893, 1.0
        %v3404 = vadd.f32 %v2895, 1.0
        %v3405 = vadd.f32 %v2897, 1.0
        %v3406 = vadd.f32 %v2899, 1.0
        %v3407 = vadd.f32 %v2901, 1.0
        %v3408 = vadd.f32 %v2903, 1.0
        %v3409 = vadd.f32 %v2905, 1.0
        %v3410 = vadd.f32 %v2907, 1.0
        %v3411 = vadd.f32 %v2909, 1.0
        %v3412 = vadd.f32 %v2911, 1.0
        %v3413 = vadd.f32 %v2913, 1.0
        %v3414 = vadd.f32 %v2915, 1.0
        %v3415 = vadd.f32 %v2917, 1.0
        %v3416 = vadd.f32 %v2919, 1.0
        %v3417 = vadd.f32 %v2921, 1.0
        %v3418 = vadd.f32 %v2923, 1.0
        %v3419 = vadd.f32 %v2925, 1.0
        %v3420 = vadd.f32 %v2927, 1.0
        %v3421 = vadd.f32 %v2929, 1.0
        %v3422 = vadd.f32 %v2931, 1.0
        %v3423 = vadd.f32 %v2933, 1.0
        %v3424 = vadd.f32 %v2935, 1.0
        %v3425 = vadd.f32 %v2937, 1.0
        %v3426 = vadd.f32 %v2939, 1.0
        %v3427 = vadd.f32 %v2941, 1.0
        %v3428 = vadd.f32 %v2943, 1.0
        %v3429 = vadd.f32 %v2945, 1.0
        %v3430 = vadd.f32 %v2947, 1.0
        %v3431 = vadd.f32 %v2949, 1.0
        %v3432 = vadd.f32 %v2951, 1.0
        %v3433 = vadd.f32 %v2953, 1.0
        %v3434 = vadd.f32 %v2955, 1.0
        %v3435 = vadd.f32 %v2957, 1.0
        %v3436 = vadd.f32 %v2959, 1.0
        %v3437 = vadd.f32 %v2961, 1.0
        %v3438 = vadd.f32 %v2963, 1.0
        %v3439 = vadd.f32 %v2965, 1.0
        %v3440 = vadd.f32 %v2967, 1.0
        %v3441 = vadd.f32 %v2969, 1.0
        %v3442 = vadd.f32 %v2971, 1.0
        %v3443 = vadd.f32 %v2973, 1.0
        %v3444 = vadd.f32 %v2975, 1.0
        %v3445 = vadd.f32 %v2977, 1.0
        %v3446 = vadd.f32 %v2979, 1.0
        %v3447 = vadd.f32 %v2981, 1.0
        %v3448 = vadd.f32 %v2983, 1.0
        %v3449 = vadd.f32 %v2985, 1.0
        %v3450 = vadd.f32 %v2987, 1.0
        %v3451 = vadd.f32 %v2989, 1.0
        %v3452 = vadd.f32 %v2991, 1.0
        %v3453 = vadd.f32 %v2993, 1.0
        %v3454 = vadd.f32 %v2995, 1.0
        %v3455 = vadd.f32 %v2997, 1.0
        %v3456 = vadd.f32 %v2999, 1.0
        %v3457 = vadd.f32 %v3001, 1.0
        %v3458 = vadd.f32 %v3003, 1.0
        %v3459 = vadd.f32 %v3005, 1.0
        %v3460 = vadd.f32 %v3007, 1.0
        %v3461 = vadd.f32 %v3009, 1.0
        %v3462 = vadd.f32 %v3011, 1.0
        %v3463 = vadd.f32 %v3013, 1.0
        %v3464 = vadd.f32 %v3015, 1.0
        %v3465 = vadd.f32 %v3017, 1.0
        %v3466 = vadd.f32 %v3019, 1.0
        %v3467 = vadd.f32 %v3021, 1.0
        %v3468 = vadd.f32 %v3023, 1.0
        %v3469 = vadd.f32 %v3025, 1.0
        %v3470 = vadd.f32 %v3027, 1.0
        %v3471 = vadd.f32 %v3029, 1.0
        %v3472 = vadd.f32 %v3031, 1.0
        %v3473 = vadd.f32 %v3033, 1.0
        %v3474 = vadd.f32 %v3035, 1.0
        %v3475 = vadd.f32 %v3037, 1.0
        %v3476 = vadd.f32 %v3039, 1.0
        %v3477 = vadd.f32 %v3041, 1.0
        %v3478 = vadd.f32 %v3043, 1.0
        %v3479 = vadd.f32 %v3045, 1.0
        %v3480 = vadd.f32 %v3047, 1.0
        %v3481 = vadd.f32 %v3049, 1.0
        %v3482 = vadd.f32 %v3051, 1.0
        %v3483 = vadd.f32 %v3053, 1.0
        %v3484 = vadd.f32 %v3055, 1.0
        %v3485 = vadd.f32 %v3057, 1.0
        %v3486 = vadd.f32 %v3059, 1.0
        %v3487 = vadd.f32 %v3061, 1.0
        %v3488 = vadd.f32 %v3063, 1.0
        %v3489 = vadd.f32 %v3065, 1.0
        %v3490 = vadd.f32 %v3067, 1.0
        %v3491 = vadd.f32 %v3069, 1.0
        %v3492 = vadd.f32 %v3071, 1.0
        %v3493 = vadd.f32 %v3073, 1.0
        %v3494 = vadd.f32 %v3075, 1.0
        %v3495 = vadd.f32 %v3077, 1.0
        %v3496 = vadd.f32 %v3079, 1.0
        %v3497 = vadd.f32 %v3081, 1.0
        %v3498 = vadd.f32 %v3083, 1.0
        %v3499 = vadd.f32 %v3085, 1.0
        %v3500 = vadd.f32 %v3087, 1.0
        %v3501 = vadd.f32 %v3089, 1.0
        %v3502 = vadd.f32 %v3091, 1.0
        %v3503 = vadd.f32 %v3093, 1.0
        %v3504 = vadd.f32 %v3095, 1.0
        %v3505 = vadd.f32 %v3097, 1.0
        %v3506 = vadd.f32 %v3099, 1.0
        %v3507 = vadd.f32 %v3101, 1.0
        %v3508 = vadd.f32 %v3103, 1.0
        %v3509 = vadd.f32 %v3105, 1.0
        %v3510 = vadd.f32 %v3107, 1.0
        %v3511 = vadd.f32 %v3109, 1.0
        %v3512 = vadd.f32 %v3111, 1.0
        %v3513 = vadd.f32 %v3113, 1.0
        %v3514 = vadd.f32 %v3115, 1.0
        %v3515 = vadd.f32 %v3117, 1.0
        %v3516 = vadd.f32 %v3119, 1.0
        %v3517 = vadd.f32 %v3121, 1.0
        %v3518 = vadd.f32 %v3123, 1.0
        %v3519 = vadd.f32 %v3125, 1.0
        %v3520 = vadd.f32 %v3127, 1.0
        %v3521 = vadd.f32 %v3129, 1.0
        %v3522 = vadd.f32 %v3131, 1.0
        %v3523 = vadd.f32 %v3133, 1.0
        %v3524 = vadd.f32 %v3135, 1.0
        %v3525 = vadd.f32 %v3137, 1.0
        %v3526 = vadd.f32 %v3139, 1.0
        %v3527 = vadd.f32 %v3141, 1.0
        %v3528 = vadd.f32 %v3143, 1.0
        %v3529 = vadd.f32 %v3145, 1.0
        %v3530 = vadd.f32 %v3147, 1.0
        %v3531 = vadd.f32 %v3149, 1.0
        %v3532 = vadd.f32 %v3151, 1.0
        %v3533 = vadd.f32 %v3153, 1.0
        %v3534 = vadd.f32 %v3155, 1.0
        %v3535 = vadd.f32 %v3157, 1.0
        %v3536 = vadd.f32 %v3159, 1.0
        %v3537 = vadd.f32 %v3161, 1.0
        %v3538 = vadd.f32 %v3163, 1.0
        %v3539 = vadd.f32 %v3165, 1.0
        %v3540 = vadd.f32 %v3167, 1.0
        %v3541 = vadd.f32 %v3169, 1.0
        %v3542 = vadd.f32 %v3171, 1.0
        %v3543 = vadd.f32 %v3173, 1.0
        %v3544 = vadd.f32 %v3175, 1.0
        %v3545 = vadd.f32 %v3177, 1.0
        %v3546 = vadd.f32 %v3179, 1.0
        %v3547 = vadd.f32 %v3181, 1.0
        %v3548 = vadd.f32 %v3183, 1.0
        %v3549 = vadd.f32 %v3185, 1.0
        %v3550 = vadd.f32 %v3187, 1.0
        %v3551 = vadd.f32 %v3189, 1.0
        %v3552 = vadd.f32 %v3191, 1.0
        %v3553 = vadd.f32 %v3193, 1.0
        %v3554 = vadd.f32 %v3195, 1.0
        %v3555 = vadd.f32 %v3197, 1.0
        %v3556 = vadd.f32 %v3199, 1.0
        %v3557 = vadd.f32 %v3201, 1.0
        %v3558 = vadd.f32 %v3203, 1.0
        %v3559 = vadd.f32 %v3205, 1.0
        %v3560 = vadd.f32 %v3207, 1.0
        %v3561 = vadd.f32 %v3209, 1.0
        %v3562 = vadd.f32 %v3211, 1.0
        %v3563 = vadd.f32 %v3213, 1.0
        %v3564 = vadd.f32 %v3215, 1.0
        %v3565 = vadd.f32 %v3217, 1.0
        %v3566 = vadd.f32 %v3219, 1.0
        %v3567 = vadd.f32 %v3221, 1.0
        %v3568 = vadd.f32 %v3223, 1.0
        %v3569 = vadd.f32 %v3225, 1.0
        %v3570 = vadd.f32 %v3227, 1.0
        %v3571 = vadd.f32 %v3229, 1.0
        %v3572 = vadd.f32 %v3231, 1.0
        %v3573 = vadd.f32 %v3233, 1.0
        %v3574 = vadd.f32 %v3235, 1.0
        %v3575 = vadd.f32 %v3237, 1.0
        %v3576 = vadd.f32 %v3239, 1.0
        %v3577 = vadd.f32 %v3241, 1.0
        %v3578 = vadd.f32 %v3243, 1.0
        %v3579 = vadd.f32 %v3245, 1.0
        %v3580 = vadd.f32 %v3247, 1.0
        %v3581 = vadd.f32 %v3249, 1.0
        %v3582 = vadd.f32 %v3251, 1.0
        %v3583 = vadd.f32 %v3253, 1.0
        %v3584 = vadd.f32 %v3255, 1.0
        %v3585 = vadd.f32 %v3257, 1.0
        %v3586 = vadd.f32 %v3259, 1.0
        %v3587 = vadd.f32 %v3261, 1.0
        %v3588 = vadd.f32 %v3263, 1.0
        %v3589 = vadd.f32 %v3265, 1.0
        %v3590 = vadd.f32 %v3267, 1.0
        %v3591 = vadd.f32 %v3269, 1.0
        %v3592 = vadd.f32 %v3271, 1.0
        %v3593 = vadd.f32 %v3273, 1.0
        %v3594 = vadd.f32 %v3275, 1.0
        %v3595 = vadd.f32 %v3277, 1.0
        %v3596 = vadd.f32 %v3279, 1.0
        %v3597 = vadd.f32 %v3281, 1.0
        %v3598 = vadd.f32 %v3283, 1.0
        %v3599 = vadd.f32 %v3285, 1.0
        %v3600 = vadd.f32 %v3287, 1.0
        %v3601 = vadd.f32 %v3289, 1.0
        %v3602 = vadd.f32 %v3291, 1.0
        %v3603 = vadd.f32 %v3293, 1.0
        %v3604 = vadd.f32 %v3295, 1.0
        %v3605 = vadd.f32 %v3297, 1.0
        %v3606 = vadd.f32 %v3299, 1.0
        %v3607 = vadd.f32 %v3301, 1.0
        %v3608 = vadd.f32 %v3303, 1.0
        %v3609 = vadd.f32 %v3305, 1.0
        %v3610 = vadd.f32 %v3307, 1.0
        %v3611 = vadd.f32 %v3309, 1.0
        %v3612 = vadd.f32 %v3311, 1.0
        %v3613 = vadd.f32 %v3313, 1.0
        %v3614 = vadd.f32 %v3315, 1.0
        %v3615 = vadd.f32 %v3317, 1.0
        %v3616 = vadd.f32 %v3319, 1.0
        %v3617 = vadd.f32 %v3321, 1.0
        %v3618 = vadd.f32 %v3323, 1.0
        %v3619 = vadd.f32 %v3325, 1.0
        %v3620 = vadd.f32 %v3327, 1.0
        %v3621 = vadd.f32 %v3329, 1.0
        %v3622 = vadd.f32 %v3331, 1.0
        %v3623 = vadd.f32 %v3333, 1.0
        %v3624 = vadd.f32 %v3335, 1.0
        %v3625 = vadd.f32 %v3337, 1.0
        %v3626 = vadd.f32 %v3339, 1.0
        %v3627 = vadd.f32 %v3341, 1.0
        %v3628 = vadd.f32 %v3343, 1.0
        %v3629 = vadd.f32 %v3345, 1.0
        %v3630 = vadd.f32 %v3347, 1.0
        %v3631 = vadd.f32 %v3349, 1.0
        %v3632 = vadd.f32 %v3351, 1.0
        %v3633 = vadd.f32 %v3353, 1.0
        %v3634 = vadd.f32 %v3355, 1.0
        %v3635 = vadd.f32 %v3357, 1.0
        %v3636 = vadd.f32 %v3359, 1.0
        %v3637 = vadd.f32 %v3361, 1.0
        %v3638 = vadd.f32 %v3363, 1.0
        %v3639 = vadd.f32 %v3365, 1.0
        %v3640 = vadd.f32 %v3367, 1.0
        %v3641 = vadd.f32 %v3369, 1.0
        %v3642 = vadd.f32 %v3371, 1.0
        %v3643 = vadd.f32 %v3373, 1.0
        %v3644 = vadd.f32 %v3375, 1.0
        %v3645 = vadd.f32 %v3377, 1.0
        %v3646 = vadd.f32 %v3379, 1.0
        %v3647 = vadd.f32 %v3381, 1.0
        %v3648 = vadd.f32 %v3383, 1.0
        %v3649 = vadd.f32 %v3385, 1.0
        %v3650 = vadd.f32 %v3387, 1.0
        %v3651 = vadd.f32 %v3389, 1.0
        %v3652 = vadd.f32 %v3391, 1.0
        %v3653 = vadd.f32 %v3393, 1.0
        %v3654 = vadd.f32 %v3395, 1.0
        %v3655 = vadd.f32 %v3397, 1.0
        %v3656 = vadd.f32 %v3399, 1.0
        %v3657 = vadd.f32 %v3401, 1.0
        %v3658 = vrcp.pop %v3402
        %v3659 = vmul.f32 1.0, %v3658
        %v3660 = vrcp.pop %v3403
        %v3661 = vmul.f32 1.0, %v3660
        %v3662 = vrcp.pop %v3404
        %v3663 = vmul.f32 1.0, %v3662
        %v3664 = vrcp.pop %v3405
        %v3665 = vmul.f32 1.0, %v3664
        %v3666 = vrcp.pop %v3406
        %v3667 = vmul.f32 1.0, %v3666
        %v3668 = vrcp.pop %v3407
        %v3669 = vmul.f32 1.0, %v3668
        %v3670 = vrcp.pop %v3408
        %v3671 = vmul.f32 1.0, %v3670
        %v3672 = vrcp.pop %v3409
        %v3673 = vmul.f32 1.0, %v3672
        %v3674 = vrcp.pop %v3410
        %v3675 = vmul.f32 1.0, %v3674
        %v3676 = vrcp.pop %v3411
        %v3677 = vmul.f32 1.0, %v3676
        %v3678 = vrcp.pop %v3412
        %v3679 = vmul.f32 1.0, %v3678
        %v3680 = vrcp.pop %v3413
        %v3681 = vmul.f32 1.0, %v3680
        %v3682 = vrcp.pop %v3414
        %v3683 = vmul.f32 1.0, %v3682
        %v3684 = vrcp.pop %v3415
        %v3685 = vmul.f32 1.0, %v3684
        %v3686 = vrcp.pop %v3416
        %v3687 = vmul.f32 1.0, %v3686
        %v3688 = vrcp.pop %v3417
        %v3689 = vmul.f32 1.0, %v3688
        %v3690 = vrcp.pop %v3418
        %v3691 = vmul.f32 1.0, %v3690
        %v3692 = vrcp.pop %v3419
        %v3693 = vmul.f32 1.0, %v3692
        %v3694 = vrcp.pop %v3420
        %v3695 = vmul.f32 1.0, %v3694
        %v3696 = vrcp.pop %v3421
        %v3697 = vmul.f32 1.0, %v3696
        %v3698 = vrcp.pop %v3422
        %v3699 = vmul.f32 1.0, %v3698
        %v3700 = vrcp.pop %v3423
        %v3701 = vmul.f32 1.0, %v3700
        %v3702 = vrcp.pop %v3424
        %v3703 = vmul.f32 1.0, %v3702
        %v3704 = vrcp.pop %v3425
        %v3705 = vmul.f32 1.0, %v3704
        %v3706 = vrcp.pop %v3426
        %v3707 = vmul.f32 1.0, %v3706
        %v3708 = vrcp.pop %v3427
        %v3709 = vmul.f32 1.0, %v3708
        %v3710 = vrcp.pop %v3428
        %v3711 = vmul.f32 1.0, %v3710
        %v3712 = vrcp.pop %v3429
        %v3713 = vmul.f32 1.0, %v3712
        %v3714 = vrcp.pop %v3430
        %v3715 = vmul.f32 1.0, %v3714
        %v3716 = vrcp.pop %v3431
        %v3717 = vmul.f32 1.0, %v3716
        %v3718 = vrcp.pop %v3432
        %v3719 = vmul.f32 1.0, %v3718
        %v3720 = vrcp.pop %v3433
        %v3721 = vmul.f32 1.0, %v3720
        %v3722 = vrcp.pop %v3434
        %v3723 = vmul.f32 1.0, %v3722
        %v3724 = vrcp.pop %v3435
        %v3725 = vmul.f32 1.0, %v3724
        %v3726 = vrcp.pop %v3436
        %v3727 = vmul.f32 1.0, %v3726
        %v3728 = vrcp.pop %v3437
        %v3729 = vmul.f32 1.0, %v3728
        %v3730 = vrcp.pop %v3438
        %v3731 = vmul.f32 1.0, %v3730
        %v3732 = vrcp.pop %v3439
        %v3733 = vmul.f32 1.0, %v3732
        %v3734 = vrcp.pop %v3440
        %v3735 = vmul.f32 1.0, %v3734
        %v3736 = vrcp.pop %v3441
        %v3737 = vmul.f32 1.0, %v3736
        %v3738 = vrcp.pop %v3442
        %v3739 = vmul.f32 1.0, %v3738
        %v3740 = vrcp.pop %v3443
        %v3741 = vmul.f32 1.0, %v3740
        %v3742 = vrcp.pop %v3444
        %v3743 = vmul.f32 1.0, %v3742
        %v3744 = vrcp.pop %v3445
        %v3745 = vmul.f32 1.0, %v3744
        %v3746 = vrcp.pop %v3446
        %v3747 = vmul.f32 1.0, %v3746
        %v3748 = vrcp.pop %v3447
        %v3749 = vmul.f32 1.0, %v3748
        %v3750 = vrcp.pop %v3448
        %v3751 = vmul.f32 1.0, %v3750
        %v3752 = vrcp.pop %v3449
        %v3753 = vmul.f32 1.0, %v3752
        %v3754 = vrcp.pop %v3450
        %v3755 = vmul.f32 1.0, %v3754
        %v3756 = vrcp.pop %v3451
        %v3757 = vmul.f32 1.0, %v3756
        %v3758 = vrcp.pop %v3452
        %v3759 = vmul.f32 1.0, %v3758
        %v3760 = vrcp.pop %v3453
        %v3761 = vmul.f32 1.0, %v3760
        %v3762 = vrcp.pop %v3454
        %v3763 = vmul.f32 1.0, %v3762
        %v3764 = vrcp.pop %v3455
        %v3765 = vmul.f32 1.0, %v3764
        %v3766 = vrcp.pop %v3456
        %v3767 = vmul.f32 1.0, %v3766
        %v3768 = vrcp.pop %v3457
        %v3769 = vmul.f32 1.0, %v3768
        %v3770 = vrcp.pop %v3458
        %v3771 = vmul.f32 1.0, %v3770
        %v3772 = vrcp.pop %v3459
        %v3773 = vmul.f32 1.0, %v3772
        %v3774 = vrcp.pop %v3460
        %v3775 = vmul.f32 1.0, %v3774
        %v3776 = vrcp.pop %v3461
        %v3777 = vmul.f32 1.0, %v3776
        %v3778 = vrcp.pop %v3462
        %v3779 = vmul.f32 1.0, %v3778
        %v3780 = vrcp.pop %v3463
        %v3781 = vmul.f32 1.0, %v3780
        %v3782 = vrcp.pop %v3464
        %v3783 = vmul.f32 1.0, %v3782
        %v3784 = vrcp.pop %v3465
        %v3785 = vmul.f32 1.0, %v3784
        %v3786 = vrcp.pop %v3466
        %v3787 = vmul.f32 1.0, %v3786
        %v3788 = vrcp.pop %v3467
        %v3789 = vmul.f32 1.0, %v3788
        %v3790 = vrcp.pop %v3468
        %v3791 = vmul.f32 1.0, %v3790
        %v3792 = vrcp.pop %v3469
        %v3793 = vmul.f32 1.0, %v3792
        %v3794 = vrcp.pop %v3470
        %v3795 = vmul.f32 1.0, %v3794
        %v3796 = vrcp.pop %v3471
        %v3797 = vmul.f32 1.0, %v3796
        %v3798 = vrcp.pop %v3472
        %v3799 = vmul.f32 1.0, %v3798
        %v3800 = vrcp.pop %v3473
        %v3801 = vmul.f32 1.0, %v3800
        %v3802 = vrcp.pop %v3474
        %v3803 = vmul.f32 1.0, %v3802
        %v3804 = vrcp.pop %v3475
        %v3805 = vmul.f32 1.0, %v3804
        %v3806 = vrcp.pop %v3476
        %v3807 = vmul.f32 1.0, %v3806
        %v3808 = vrcp.pop %v3477
        %v3809 = vmul.f32 1.0, %v3808
        %v3810 = vrcp.pop %v3478
        %v3811 = vmul.f32 1.0, %v3810
        %v3812 = vrcp.pop %v3479
        %v3813 = vmul.f32 1.0, %v3812
        %v3814 = vrcp.pop %v3480
        %v3815 = vmul.f32 1.0, %v3814
        %v3816 = vrcp.pop %v3481
        %v3817 = vmul.f32 1.0, %v3816
        %v3818 = vrcp.pop %v3482
        %v3819 = vmul.f32 1.0, %v3818
        %v3820 = vrcp.pop %v3483
        %v3821 = vmul.f32 1.0, %v3820
        %v3822 = vrcp.pop %v3484
        %v3823 = vmul.f32 1.0, %v3822
        %v3824 = vrcp.pop %v3485
        %v3825 = vmul.f32 1.0, %v3824
        %v3826 = vrcp.pop %v3486
        %v3827 = vmul.f32 1.0, %v3826
        %v3828 = vrcp.pop %v3487
        %v3829 = vmul.f32 1.0, %v3828
        %v3830 = vrcp.pop %v3488
        %v3831 = vmul.f32 1.0, %v3830
        %v3832 = vrcp.pop %v3489
        %v3833 = vmul.f32 1.0, %v3832
        %v3834 = vrcp.pop %v3490
        %v3835 = vmul.f32 1.0, %v3834
        %v3836 = vrcp.pop %v3491
        %v3837 = vmul.f32 1.0, %v3836
        %v3838 = vrcp.pop %v3492
        %v3839 = vmul.f32 1.0, %v3838
        %v3840 = vrcp.pop %v3493
        %v3841 = vmul.f32 1.0, %v3840
        %v3842 = vrcp.pop %v3494
        %v3843 = vmul.f32 1.0, %v3842
        %v3844 = vrcp.pop %v3495
        %v3845 = vmul.f32 1.0, %v3844
        %v3846 = vrcp.pop %v3496
        %v3847 = vmul.f32 1.0, %v3846
        %v3848 = vrcp.pop %v3497
        %v3849 = vmul.f32 1.0, %v3848
        %v3850 = vrcp.pop %v3498
        %v3851 = vmul.f32 1.0, %v3850
        %v3852 = vrcp.pop %v3499
        %v3853 = vmul.f32 1.0, %v3852
        %v3854 = vrcp.pop %v3500
        %v3855 = vmul.f32 1.0, %v3854
        %v3856 = vrcp.pop %v3501
        %v3857 = vmul.f32 1.0, %v3856
        %v3858 = vrcp.pop %v3502
        %v3859 = vmul.f32 1.0, %v3858
        %v3860 = vrcp.pop %v3503
        %v3861 = vmul.f32 1.0, %v3860
        %v3862 = vrcp.pop %v3504
        %v3863 = vmul.f32 1.0, %v3862
        %v3864 = vrcp.pop %v3505
        %v3865 = vmul.f32 1.0, %v3864
        %v3866 = vrcp.pop %v3506
        %v3867 = vmul.f32 1.0, %v3866
        %v3868 = vrcp.pop %v3507
        %v3869 = vmul.f32 1.0, %v3868
        %v3870 = vrcp.pop %v3508
        %v3871 = vmul.f32 1.0, %v3870
        %v3872 = vrcp.pop %v3509
        %v3873 = vmul.f32 1.0, %v3872
        %v3874 = vrcp.pop %v3510
        %v3875 = vmul.f32 1.0, %v3874
        %v3876 = vrcp.pop %v3511
        %v3877 = vmul.f32 1.0, %v3876
        %v3878 = vrcp.pop %v3512
        %v3879 = vmul.f32 1.0, %v3878
        %v3880 = vrcp.pop %v3513
        %v3881 = vmul.f32 1.0, %v3880
        %v3882 = vrcp.pop %v3514
        %v3883 = vmul.f32 1.0, %v3882
        %v3884 = vrcp.pop %v3515
        %v3885 = vmul.f32 1.0, %v3884
        %v3886 = vrcp.pop %v3516
        %v3887 = vmul.f32 1.0, %v3886
        %v3888 = vrcp.pop %v3517
        %v3889 = vmul.f32 1.0, %v3888
        %v3890 = vrcp.pop %v3518
        %v3891 = vmul.f32 1.0, %v3890
        %v3892 = vrcp.pop %v3519
        %v3893 = vmul.f32 1.0, %v3892
        %v3894 = vrcp.pop %v3520
        %v3895 = vmul.f32 1.0, %v3894
        %v3896 = vrcp.pop %v3521
        %v3897 = vmul.f32 1.0, %v3896
        %v3898 = vrcp.pop %v3522
        %v3899 = vmul.f32 1.0, %v3898
        %v3900 = vrcp.pop %v3523
        %v3901 = vmul.f32 1.0, %v3900
        %v3902 = vrcp.pop %v3524
        %v3903 = vmul.f32 1.0, %v3902
        %v3904 = vrcp.pop %v3525
        %v3905 = vmul.f32 1.0, %v3904
        %v3906 = vrcp.pop %v3526
        %v3907 = vmul.f32 1.0, %v3906
        %v3908 = vrcp.pop %v3527
        %v3909 = vmul.f32 1.0, %v3908
        %v3910 = vrcp.pop %v3528
        %v3911 = vmul.f32 1.0, %v3910
        %v3912 = vrcp.pop %v3529
        %v3913 = vmul.f32 1.0, %v3912
        %v3914 = vrcp.pop %v3530
        %v3915 = vmul.f32 1.0, %v3914
        %v3916 = vrcp.pop %v3531
        %v3917 = vmul.f32 1.0, %v3916
        %v3918 = vrcp.pop %v3532
        %v3919 = vmul.f32 1.0, %v3918
        %v3920 = vrcp.pop %v3533
        %v3921 = vmul.f32 1.0, %v3920
        %v3922 = vrcp.pop %v3534
        %v3923 = vmul.f32 1.0, %v3922
        %v3924 = vrcp.pop %v3535
        %v3925 = vmul.f32 1.0, %v3924
        %v3926 = vrcp.pop %v3536
        %v3927 = vmul.f32 1.0, %v3926
        %v3928 = vrcp.pop %v3537
        %v3929 = vmul.f32 1.0, %v3928
        %v3930 = vrcp.pop %v3538
        %v3931 = vmul.f32 1.0, %v3930
        %v3932 = vrcp.pop %v3539
        %v3933 = vmul.f32 1.0, %v3932
        %v3934 = vrcp.pop %v3540
        %v3935 = vmul.f32 1.0, %v3934
        %v3936 = vrcp.pop %v3541
        %v3937 = vmul.f32 1.0, %v3936
        %v3938 = vrcp.pop %v3542
        %v3939 = vmul.f32 1.0, %v3938
        %v3940 = vrcp.pop %v3543
        %v3941 = vmul.f32 1.0, %v3940
        %v3942 = vrcp.pop %v3544
        %v3943 = vmul.f32 1.0, %v3942
        %v3944 = vrcp.pop %v3545
        %v3945 = vmul.f32 1.0, %v3944
        %v3946 = vrcp.pop %v3546
        %v3947 = vmul.f32 1.0, %v3946
        %v3948 = vrcp.pop %v3547
        %v3949 = vmul.f32 1.0, %v3948
        %v3950 = vrcp.pop %v3548
        %v3951 = vmul.f32 1.0, %v3950
        %v3952 = vrcp.pop %v3549
        %v3953 = vmul.f32 1.0, %v3952
        %v3954 = vrcp.pop %v3550
        %v3955 = vmul.f32 1.0, %v3954
        %v3956 = vrcp.pop %v3551
        %v3957 = vmul.f32 1.0, %v3956
        %v3958 = vrcp.pop %v3552
        %v3959 = vmul.f32 1.0, %v3958
        %v3960 = vrcp.pop %v3553
        %v3961 = vmul.f32 1.0, %v3960
        %v3962 = vrcp.pop %v3554
        %v3963 = vmul.f32 1.0, %v3962
        %v3964 = vrcp.pop %v3555
        %v3965 = vmul.f32 1.0, %v3964
        %v3966 = vrcp.pop %v3556
        %v3967 = vmul.f32 1.0, %v3966
        %v3968 = vrcp.pop %v3557
        %v3969 = vmul.f32 1.0, %v3968
        %v3970 = vrcp.pop %v3558
        %v3971 = vmul.f32 1.0, %v3970
        %v3972 = vrcp.pop %v3559
        %v3973 = vmul.f32 1.0, %v3972
        %v3974 = vrcp.pop %v3560
        %v3975 = vmul.f32 1.0, %v3974
        %v3976 = vrcp.pop %v3561
        %v3977 = vmul.f32 1.0, %v3976
        %v3978 = vrcp.pop %v3562
        %v3979 = vmul.f32 1.0, %v3978
        %v3980 = vrcp.pop %v3563
        %v3981 = vmul.f32 1.0, %v3980
        %v3982 = vrcp.pop %v3564
        %v3983 = vmul.f32 1.0, %v3982
        %v3984 = vrcp.pop %v3565
        %v3985 = vmul.f32 1.0, %v3984
        %v3986 = vrcp.pop %v3566
        %v3987 = vmul.f32 1.0, %v3986
        %v3988 = vrcp.pop %v3567
        %v3989 = vmul.f32 1.0, %v3988
        %v3990 = vrcp.pop %v3568
        %v3991 = vmul.f32 1.0, %v3990
        %v3992 = vrcp.pop %v3569
        %v3993 = vmul.f32 1.0, %v3992
        %v3994 = vrcp.pop %v3570
        %v3995 = vmul.f32 1.0, %v3994
        %v3996 = vrcp.pop %v3571
        %v3997 = vmul.f32 1.0, %v3996
        %v3998 = vrcp.pop %v3572
        %v3999 = vmul.f32 1.0, %v3998
        %v4000 = vrcp.pop %v3573
        %v4001 = vmul.f32 1.0, %v4000
        %v4002 = vrcp.pop %v3574
        %v4003 = vmul.f32 1.0, %v4002
        %v4004 = vrcp.pop %v3575
        %v4005 = vmul.f32 1.0, %v4004
        %v4006 = vrcp.pop %v3576
        %v4007 = vmul.f32 1.0, %v4006
        %v4008 = vrcp.pop %v3577
        %v4009 = vmul.f32 1.0, %v4008
        %v4010 = vrcp.pop %v3578
        %v4011 = vmul.f32 1.0, %v4010
        %v4012 = vrcp.pop %v3579
        %v4013 = vmul.f32 1.0, %v4012
        %v4014 = vrcp.pop %v3580
        %v4015 = vmul.f32 1.0, %v4014
        %v4016 = vrcp.pop %v3581
        %v4017 = vmul.f32 1.0, %v4016
        %v4018 = vrcp.pop %v3582
        %v4019 = vmul.f32 1.0, %v4018
        %v4020 = vrcp.pop %v3583
        %v4021 = vmul.f32 1.0, %v4020
        %v4022 = vrcp.pop %v3584
        %v4023 = vmul.f32 1.0, %v4022
        %v4024 = vrcp.pop %v3585
        %v4025 = vmul.f32 1.0, %v4024
        %v4026 = vrcp.pop %v3586
        %v4027 = vmul.f32 1.0, %v4026
        %v4028 = vrcp.pop %v3587
        %v4029 = vmul.f32 1.0, %v4028
        %v4030 = vrcp.pop %v3588
        %v4031 = vmul.f32 1.0, %v4030
        %v4032 = vrcp.pop %v3589
        %v4033 = vmul.f32 1.0, %v4032
        %v4034 = vrcp.pop %v3590
        %v4035 = vmul.f32 1.0, %v4034
        %v4036 = vrcp.pop %v3591
        %v4037 = vmul.f32 1.0, %v4036
        %v4038 = vrcp.pop %v3592
        %v4039 = vmul.f32 1.0, %v4038
        %v4040 = vrcp.pop %v3593
        %v4041 = vmul.f32 1.0, %v4040
        %v4042 = vrcp.pop %v3594
        %v4043 = vmul.f32 1.0, %v4042
        %v4044 = vrcp.pop %v3595
        %v4045 = vmul.f32 1.0, %v4044
        %v4046 = vrcp.pop %v3596
        %v4047 = vmul.f32 1.0, %v4046
        %v4048 = vrcp.pop %v3597
        %v4049 = vmul.f32 1.0, %v4048
        %v4050 = vrcp.pop %v3598
        %v4051 = vmul.f32 1.0, %v4050
        %v4052 = vrcp.pop %v3599
        %v4053 = vmul.f32 1.0, %v4052
        %v4054 = vrcp.pop %v3600
        %v4055 = vmul.f32 1.0, %v4054
        %v4056 = vrcp.pop %v3601
        %v4057 = vmul.f32 1.0, %v4056
        %v4058 = vrcp.pop %v3602
        %v4059 = vmul.f32 1.0, %v4058
        %v4060 = vrcp.pop %v3603
        %v4061 = vmul.f32 1.0, %v4060
        %v4062 = vrcp.pop %v3604
        %v4063 = vmul.f32 1.0, %v4062
        %v4064 = vrcp.pop %v3605
        %v4065 = vmul.f32 1.0, %v4064
        %v4066 = vrcp.pop %v3606
        %v4067 = vmul.f32 1.0, %v4066
        %v4068 = vrcp.pop %v3607
        %v4069 = vmul.f32 1.0, %v4068
        %v4070 = vrcp.pop %v3608
        %v4071 = vmul.f32 1.0, %v4070
        %v4072 = vrcp.pop %v3609
        %v4073 = vmul.f32 1.0, %v4072
        %v4074 = vrcp.pop %v3610
        %v4075 = vmul.f32 1.0, %v4074
        %v4076 = vrcp.pop %v3611
        %v4077 = vmul.f32 1.0, %v4076
        %v4078 = vrcp.pop %v3612
        %v4079 = vmul.f32 1.0, %v4078
        %v4080 = vrcp.pop %v3613
        %v4081 = vmul.f32 1.0, %v4080
        %v4082 = vrcp.pop %v3614
        %v4083 = vmul.f32 1.0, %v4082
        %v4084 = vrcp.pop %v3615
        %v4085 = vmul.f32 1.0, %v4084
        %v4086 = vrcp.pop %v3616
        %v4087 = vmul.f32 1.0, %v4086
        %v4088 = vrcp.pop %v3617
        %v4089 = vmul.f32 1.0, %v4088
        %v4090 = vrcp.pop %v3618
        %v4091 = vmul.f32 1.0, %v4090
        %v4092 = vrcp.pop %v3619
        %v4093 = vmul.f32 1.0, %v4092
        %v4094 = vrcp.pop %v3620
        %v4095 = vmul.f32 1.0, %v4094
        %v4096 = vrcp.pop %v3621
        %v4097 = vmul.f32 1.0, %v4096
        %v4098 = vrcp.pop %v3622
        %v4099 = vmul.f32 1.0, %v4098
        %v4100 = vrcp.pop %v3623
        %v4101 = vmul.f32 1.0, %v4100
        %v4102 = vrcp.pop %v3624
        %v4103 = vmul.f32 1.0, %v4102
        %v4104 = vrcp.pop %v3625
        %v4105 = vmul.f32 1.0, %v4104
        %v4106 = vrcp.pop %v3626
        %v4107 = vmul.f32 1.0, %v4106
        %v4108 = vrcp.pop %v3627
        %v4109 = vmul.f32 1.0, %v4108
        %v4110 = vrcp.pop %v3628
        %v4111 = vmul.f32 1.0, %v4110
        %v4112 = vrcp.pop %v3629
        %v4113 = vmul.f32 1.0, %v4112
        %v4114 = vrcp.pop %v3630
        %v4115 = vmul.f32 1.0, %v4114
        %v4116 = vrcp.pop %v3631
        %v4117 = vmul.f32 1.0, %v4116
        %v4118 = vrcp.pop %v3632
        %v4119 = vmul.f32 1.0, %v4118
        %v4120 = vrcp.pop %v3633
        %v4121 = vmul.f32 1.0, %v4120
        %v4122 = vrcp.pop %v3634
        %v4123 = vmul.f32 1.0, %v4122
        %v4124 = vrcp.pop %v3635
        %v4125 = vmul.f32 1.0, %v4124
        %v4126 = vrcp.pop %v3636
        %v4127 = vmul.f32 1.0, %v4126
        %v4128 = vrcp.pop %v3637
        %v4129 = vmul.f32 1.0, %v4128
        %v4130 = vrcp.pop %v3638
        %v4131 = vmul.f32 1.0, %v4130
        %v4132 = vrcp.pop %v3639
        %v4133 = vmul.f32 1.0, %v4132
        %v4134 = vrcp.pop %v3640
        %v4135 = vmul.f32 1.0, %v4134
        %v4136 = vrcp.pop %v3641
        %v4137 = vmul.f32 1.0, %v4136
        %v4138 = vrcp.pop %v3642
        %v4139 = vmul.f32 1.0, %v4138
        %v4140 = vrcp.pop %v3643
        %v4141 = vmul.f32 1.0, %v4140
        %v4142 = vrcp.pop %v3644
        %v4143 = vmul.f32 1.0, %v4142
        %v4144 = vrcp.pop %v3645
        %v4145 = vmul.f32 1.0, %v4144
        %v4146 = vrcp.pop %v3646
        %v4147 = vmul.f32 1.0, %v4146
        %v4148 = vrcp.pop %v3647
        %v4149 = vmul.f32 1.0, %v4148
        %v4150 = vrcp.pop %v3648
        %v4151 = vmul.f32 1.0, %v4150
        %v4152 = vrcp.pop %v3649
        %v4153 = vmul.f32 1.0, %v4152
        %v4154 = vrcp.pop %v3650
        %v4155 = vmul.f32 1.0, %v4154
        %v4156 = vrcp.pop %v3651
        %v4157 = vmul.f32 1.0, %v4156
        %v4158 = vrcp.pop %v3652
        %v4159 = vmul.f32 1.0, %v4158
        %v4160 = vrcp.pop %v3653
        %v4161 = vmul.f32 1.0, %v4160
        %v4162 = vrcp.pop %v3654
        %v4163 = vmul.f32 1.0, %v4162
        %v4164 = vrcp.pop %v3655
        %v4165 = vmul.f32 1.0, %v4164
        %v4166 = vrcp.pop %v3656
        %v4167 = vmul.f32 1.0, %v4166
        %v4168 = vrcp.pop %v3657
        %v4169 = vmul.f32 1.0, %v4168
        %v4170 = vmul.f32 %v1356, %v3659
        %v4171 = vmul.f32 %v1361, %v3661
        %v4172 = vmul.f32 %v1366, %v3663
        %v4173 = vmul.f32 %v1371, %v3665
        %v4174 = vmul.f32 %v1376, %v3667
        %v4175 = vmul.f32 %v1381, %v3669
        %v4176 = vmul.f32 %v1386, %v3671
        %v4177 = vmul.f32 %v1391, %v3673
        %v4178 = vmul.f32 %v1396, %v3675
        %v4179 = vmul.f32 %v1401, %v3677
        %v4180 = vmul.f32 %v1406, %v3679
        %v4181 = vmul.f32 %v1411, %v3681
        %v4182 = vmul.f32 %v1416, %v3683
        %v4183 = vmul.f32 %v1421, %v3685
        %v4184 = vmul.f32 %v1426, %v3687
        %v4185 = vmul.f32 %v1431, %v3689
        %v4186 = vmul.f32 %v1436, %v3691
        %v4187 = vmul.f32 %v1441, %v3693
        %v4188 = vmul.f32 %v1446, %v3695
        %v4189 = vmul.f32 %v1451, %v3697
        %v4190 = vmul.f32 %v1456, %v3699
        %v4191 = vmul.f32 %v1461, %v3701
        %v4192 = vmul.f32 %v1466, %v3703
        %v4193 = vmul.f32 %v1471, %v3705
        %v4194 = vmul.f32 %v1476, %v3707
        %v4195 = vmul.f32 %v1481, %v3709
        %v4196 = vmul.f32 %v1486, %v3711
        %v4197 = vmul.f32 %v1491, %v3713
        %v4198 = vmul.f32 %v1496, %v3715
        %v4199 = vmul.f32 %v1501, %v3717
        %v4200 = vmul.f32 %v1506, %v3719
        %v4201 = vmul.f32 %v1511, %v3721
        %v4202 = vmul.f32 %v1516, %v3723
        %v4203 = vmul.f32 %v1521, %v3725
        %v4204 = vmul.f32 %v1526, %v3727
        %v4205 = vmul.f32 %v1531, %v3729
        %v4206 = vmul.f32 %v1536, %v3731
        %v4207 = vmul.f32 %v1541, %v3733
        %v4208 = vmul.f32 %v1546, %v3735
        %v4209 = vmul.f32 %v1551, %v3737
        %v4210 = vmul.f32 %v1556, %v3739
        %v4211 = vmul.f32 %v1561, %v3741
        %v4212 = vmul.f32 %v1566, %v3743
        %v4213 = vmul.f32 %v1571, %v3745
        %v4214 = vmul.f32 %v1576, %v3747
        %v4215 = vmul.f32 %v1581, %v3749
        %v4216 = vmul.f32 %v1586, %v3751
        %v4217 = vmul.f32 %v1591, %v3753
        %v4218 = vmul.f32 %v1596, %v3755
        %v4219 = vmul.f32 %v1601, %v3757
        %v4220 = vmul.f32 %v1606, %v3759
        %v4221 = vmul.f32 %v1611, %v3761
        %v4222 = vmul.f32 %v1616, %v3763
        %v4223 = vmul.f32 %v1621, %v3765
        %v4224 = vmul.f32 %v1626, %v3767
        %v4225 = vmul.f32 %v1631, %v3769
        %v4226 = vmul.f32 %v1636, %v3771
        %v4227 = vmul.f32 %v1641, %v3773
        %v4228 = vmul.f32 %v1646, %v3775
        %v4229 = vmul.f32 %v1651, %v3777
        %v4230 = vmul.f32 %v1656, %v3779
        %v4231 = vmul.f32 %v1661, %v3781
        %v4232 = vmul.f32 %v1666, %v3783
        %v4233 = vmul.f32 %v1671, %v3785
        %v4234 = vmul.f32 %v1676, %v3787
        %v4235 = vmul.f32 %v1681, %v3789
        %v4236 = vmul.f32 %v1686, %v3791
        %v4237 = vmul.f32 %v1691, %v3793
        %v4238 = vmul.f32 %v1696, %v3795
        %v4239 = vmul.f32 %v1701, %v3797
        %v4240 = vmul.f32 %v1706, %v3799
        %v4241 = vmul.f32 %v1711, %v3801
        %v4242 = vmul.f32 %v1716, %v3803
        %v4243 = vmul.f32 %v1721, %v3805
        %v4244 = vmul.f32 %v1726, %v3807
        %v4245 = vmul.f32 %v1731, %v3809
        %v4246 = vmul.f32 %v1736, %v3811
        %v4247 = vmul.f32 %v1741, %v3813
        %v4248 = vmul.f32 %v1746, %v3815
        %v4249 = vmul.f32 %v1751, %v3817
        %v4250 = vmul.f32 %v1756, %v3819
        %v4251 = vmul.f32 %v1761, %v3821
        %v4252 = vmul.f32 %v1766, %v3823
        %v4253 = vmul.f32 %v1771, %v3825
        %v4254 = vmul.f32 %v1776, %v3827
        %v4255 = vmul.f32 %v1781, %v3829
        %v4256 = vmul.f32 %v1786, %v3831
        %v4257 = vmul.f32 %v1791, %v3833
        %v4258 = vmul.f32 %v1796, %v3835
        %v4259 = vmul.f32 %v1801, %v3837
        %v4260 = vmul.f32 %v1806, %v3839
        %v4261 = vmul.f32 %v1811, %v3841
        %v4262 = vmul.f32 %v1816, %v3843
        %v4263 = vmul.f32 %v1821, %v3845
        %v4264 = vmul.f32 %v1826, %v3847
        %v4265 = vmul.f32 %v1831, %v3849
        %v4266 = vmul.f32 %v1836, %v3851
        %v4267 = vmul.f32 %v1841, %v3853
        %v4268 = vmul.f32 %v1846, %v3855
        %v4269 = vmul.f32 %v1851, %v3857
        %v4270 = vmul.f32 %v1856, %v3859
        %v4271 = vmul.f32 %v1861, %v3861
        %v4272 = vmul.f32 %v1866, %v3863
        %v4273 = vmul.f32 %v1871, %v3865
        %v4274 = vmul.f32 %v1876, %v3867
        %v4275 = vmul.f32 %v1881, %v3869
        %v4276 = vmul.f32 %v1886, %v3871
        %v4277 = vmul.f32 %v1891, %v3873
        %v4278 = vmul.f32 %v1896, %v3875
        %v4279 = vmul.f32 %v1901, %v3877
        %v4280 = vmul.f32 %v1906, %v3879
        %v4281 = vmul.f32 %v1911, %v3881
        %v4282 = vmul.f32 %v1916, %v3883
        %v4283 = vmul.f32 %v1921, %v3885
        %v4284 = vmul.f32 %v1926, %v3887
        %v4285 = vmul.f32 %v1931, %v3889
        %v4286 = vmul.f32 %v1936, %v3891
        %v4287 = vmul.f32 %v1941, %v3893
        %v4288 = vmul.f32 %v1946, %v3895
        %v4289 = vmul.f32 %v1951, %v3897
        %v4290 = vmul.f32 %v1956, %v3899
        %v4291 = vmul.f32 %v1961, %v3901
        %v4292 = vmul.f32 %v1966, %v3903
        %v4293 = vmul.f32 %v1971, %v3905
        %v4294 = vmul.f32 %v1976, %v3907
        %v4295 = vmul.f32 %v1981, %v3909
        %v4296 = vmul.f32 %v1986, %v3911
        %v4297 = vmul.f32 %v1991, %v3913
        %v4298 = vmul.f32 %v1996, %v3915
        %v4299 = vmul.f32 %v2001, %v3917
        %v4300 = vmul.f32 %v2006, %v3919
        %v4301 = vmul.f32 %v2011, %v3921
        %v4302 = vmul.f32 %v2016, %v3923
        %v4303 = vmul.f32 %v2021, %v3925
        %v4304 = vmul.f32 %v2026, %v3927
        %v4305 = vmul.f32 %v2031, %v3929
        %v4306 = vmul.f32 %v2036, %v3931
        %v4307 = vmul.f32 %v2041, %v3933
        %v4308 = vmul.f32 %v2046, %v3935
        %v4309 = vmul.f32 %v2051, %v3937
        %v4310 = vmul.f32 %v2056, %v3939
        %v4311 = vmul.f32 %v2061, %v3941
        %v4312 = vmul.f32 %v2066, %v3943
        %v4313 = vmul.f32 %v2071, %v3945
        %v4314 = vmul.f32 %v2076, %v3947
        %v4315 = vmul.f32 %v2081, %v3949
        %v4316 = vmul.f32 %v2086, %v3951
        %v4317 = vmul.f32 %v2091, %v3953
        %v4318 = vmul.f32 %v2096, %v3955
        %v4319 = vmul.f32 %v2101, %v3957
        %v4320 = vmul.f32 %v2106, %v3959
        %v4321 = vmul.f32 %v2111, %v3961
        %v4322 = vmul.f32 %v2116, %v3963
        %v4323 = vmul.f32 %v2121, %v3965
        %v4324 = vmul.f32 %v2126, %v3967
        %v4325 = vmul.f32 %v2131, %v3969
        %v4326 = vmul.f32 %v2136, %v3971
        %v4327 = vmul.f32 %v2141, %v3973
        %v4328 = vmul.f32 %v2146, %v3975
        %v4329 = vmul.f32 %v2151, %v3977
        %v4330 = vmul.f32 %v2156, %v3979
        %v4331 = vmul.f32 %v2161, %v3981
        %v4332 = vmul.f32 %v2166, %v3983
        %v4333 = vmul.f32 %v2171, %v3985
        %v4334 = vmul.f32 %v2176, %v3987
        %v4335 = vmul.f32 %v2181, %v3989
        %v4336 = vmul.f32 %v2186, %v3991
        %v4337 = vmul.f32 %v2191, %v3993
        %v4338 = vmul.f32 %v2196, %v3995
        %v4339 = vmul.f32 %v2201, %v3997
        %v4340 = vmul.f32 %v2206, %v3999
        %v4341 = vmul.f32 %v2211, %v4001
        %v4342 = vmul.f32 %v2216, %v4003
        %v4343 = vmul.f32 %v2221, %v4005
        %v4344 = vmul.f32 %v2226, %v4007
        %v4345 = vmul.f32 %v2231, %v4009
        %v4346 = vmul.f32 %v2236, %v4011
        %v4347 = vmul.f32 %v2241, %v4013
        %v4348 = vmul.f32 %v2246, %v4015
        %v4349 = vmul.f32 %v2251, %v4017
        %v4350 = vmul.f32 %v2256, %v4019
        %v4351 = vmul.f32 %v2261, %v4021
        %v4352 = vmul.f32 %v2266, %v4023
        %v4353 = vmul.f32 %v2271, %v4025
        %v4354 = vmul.f32 %v2276, %v4027
        %v4355 = vmul.f32 %v2281, %v4029
        %v4356 = vmul.f32 %v2286, %v4031
        %v4357 = vmul.f32 %v2291, %v4033
        %v4358 = vmul.f32 %v2296, %v4035
        %v4359 = vmul.f32 %v2301, %v4037
        %v4360 = vmul.f32 %v2306, %v4039
        %v4361 = vmul.f32 %v2311, %v4041
        %v4362 = vmul.f32 %v2316, %v4043
        %v4363 = vmul.f32 %v2321, %v4045
        %v4364 = vmul.f32 %v2326, %v4047
        %v4365 = vmul.f32 %v2331, %v4049
        %v4366 = vmul.f32 %v2336, %v4051
        %v4367 = vmul.f32 %v2341, %v4053
        %v4368 = vmul.f32 %v2346, %v4055
        %v4369 = vmul.f32 %v2351, %v4057
        %v4370 = vmul.f32 %v2356, %v4059
        %v4371 = vmul.f32 %v2361, %v4061
        %v4372 = vmul.f32 %v2366, %v4063
        %v4373 = vmul.f32 %v2371, %v4065
        %v4374 = vmul.f32 %v2376, %v4067
        %v4375 = vmul.f32 %v2381, %v4069
        %v4376 = vmul.f32 %v2386, %v4071
        %v4377 = vmul.f32 %v2391, %v4073
        %v4378 = vmul.f32 %v2396, %v4075
        %v4379 = vmul.f32 %v2401, %v4077
        %v4380 = vmul.f32 %v2406, %v4079
        %v4381 = vmul.f32 %v2411, %v4081
        %v4382 = vmul.f32 %v2416, %v4083
        %v4383 = vmul.f32 %v2421, %v4085
        %v4384 = vmul.f32 %v2426, %v4087
        %v4385 = vmul.f32 %v2431, %v4089
        %v4386 = vmul.f32 %v2436, %v4091
        %v4387 = vmul.f32 %v2441, %v4093
        %v4388 = vmul.f32 %v2446, %v4095
        %v4389 = vmul.f32 %v2451, %v4097
        %v4390 = vmul.f32 %v2456, %v4099
        %v4391 = vmul.f32 %v2461, %v4101
        %v4392 = vmul.f32 %v2466, %v4103
        %v4393 = vmul.f32 %v2471, %v4105
        %v4394 = vmul.f32 %v2476, %v4107
        %v4395 = vmul.f32 %v2481, %v4109
        %v4396 = vmul.f32 %v2486, %v4111
        %v4397 = vmul.f32 %v2491, %v4113
        %v4398 = vmul.f32 %v2496, %v4115
        %v4399 = vmul.f32 %v2501, %v4117
        %v4400 = vmul.f32 %v2506, %v4119
        %v4401 = vmul.f32 %v2511, %v4121
        %v4402 = vmul.f32 %v2516, %v4123
        %v4403 = vmul.f32 %v2521, %v4125
        %v4404 = vmul.f32 %v2526, %v4127
        %v4405 = vmul.f32 %v2531, %v4129
        %v4406 = vmul.f32 %v2536, %v4131
        %v4407 = vmul.f32 %v2541, %v4133
        %v4408 = vmul.f32 %v2546, %v4135
        %v4409 = vmul.f32 %v2551, %v4137
        %v4410 = vmul.f32 %v2556, %v4139
        %v4411 = vmul.f32 %v2561, %v4141
        %v4412 = vmul.f32 %v2566, %v4143
        %v4413 = vmul.f32 %v2571, %v4145
        %v4414 = vmul.f32 %v2576, %v4147
        %v4415 = vmul.f32 %v2581, %v4149
        %v4416 = vmul.f32 %v2586, %v4151
        %v4417 = vmul.f32 %v2591, %v4153
        %v4418 = vmul.f32 %v2596, %v4155
        %v4419 = vmul.f32 %v2601, %v4157
        %v4420 = vmul.f32 %v2606, %v4159
        %v4421 = vmul.f32 %v2611, %v4161
        %v4422 = vmul.f32 %v2616, %v4163
        %v4423 = vmul.f32 %v2621, %v4165
        %v4424 = vmul.f32 %v2626, %v4167
        %v4425 = vmul.f32 %v2631, %v4169
        %v4426 = vld [vmem:[%s3] sm:$0xff]
        %v4427 = vld [vmem:[%s3 + $0x8] sm:$0xff]
        %v4428 = vld [vmem:[%s3 + $0x10] sm:$0xff]
        %v4429 = vld [vmem:[%s3 + $0x18] sm:$0xff]
        %v4430 = vld [vmem:[%s3 + $0x20] sm:$0xff]
        %v4431 = vld [vmem:[%s3 + $0x28] sm:$0xff]
        %v4432 = vld [vmem:[%s3 + $0x30] sm:$0xff]
        %v4433 = vld [vmem:[%s3 + $0x38] sm:$0xff]
        %v4434 = vld [vmem:[%s3 + $0x40] sm:$0xff]
        %v4435 = vld [vmem:[%s3 + $0x48] sm:$0xff]
        %v4436 = vld [vmem:[%s3 + $0x50] sm:$0xff]
        %v4437 = vld [vmem:[%s3 + $0x58] sm:$0xff]
        %v4438 = vld [vmem:[%s3 + $0x60] sm:$0xff]
        %v4439 = vld [vmem:[%s3 + $0x68] sm:$0xff]
        %v4440 = vld [vmem:[%s3 + $0x70] sm:$0xff]
        %v4441 = vld [vmem:[%s3 + $0x78] sm:$0xff]
        %4442 = vmatprep.subr.mxu0 0.0
        %4443 = vmatpush1.msra.mxu0 %v4170
        %4444 = vmatprep.subr.mxu0 0.0
        %4445 = vmatpush1.msra.mxu0 %v4171
        %4446 = vmatprep.subr.mxu0 0.0
        %4447 = vmatpush1.msra.mxu0 %v4172
        %4448 = vmatprep.subr.mxu0 0.0
        %4449 = vmatpush1.msra.mxu0 %v4173
        %4450 = vmatprep.subr.mxu0 0.0
        %4451 = vmatpush1.msra.mxu0 %v4174
        %4452 = vmatprep.subr.mxu0 0.0
        %4453 = vmatpush1.msra.mxu0 %v4175
        %4454 = vmatprep.subr.mxu0 0.0
        %4455 = vmatpush1.msra.mxu0 %v4176
        %4456 = vmatprep.subr.mxu0 0.0
        %4457 = vmatpush1.msra.mxu0 %v4177
        %4458 = vmatprep.subr.mxu0 0.0
        %4459 = vmatpush1.msra.mxu0 %v4178
        %4460 = vmatprep.subr.mxu0 0.0
        %4461 = vmatpush1.msra.mxu0 %v4179
        %4462 = vmatprep.subr.mxu0 0.0
        %4463 = vmatpush1.msra.mxu0 %v4180
        %4464 = vmatprep.subr.mxu0 0.0
        %4465 = vmatpush1.msra.mxu0 %v4181
        %4466 = vmatprep.subr.mxu0 0.0
        %4467 = vmatpush1.msra.mxu0 %v4182
        %4468 = vmatprep.subr.mxu0 0.0
        %4469 = vmatpush1.msra.mxu0 %v4183
        %4470 = vmatprep.subr.mxu0 0.0
        %4471 = vmatpush1.msra.mxu0 %v4184
        %4472 = vmatprep.subr.mxu0 0.0
        %4473 = vmatpush1.msra.mxu0 %v4185
        %4474 = vmatprep.subr.mxu0 0.0
        %4475 = vmatpush1.msra.mxu0 %v4186
        %4476 = vmatprep.subr.mxu0 0.0
        %4477 = vmatpush1.msra.mxu0 %v4187
        %4478 = vmatprep.subr.mxu0 0.0
        %4479 = vmatpush1.msra.mxu0 %v4188
        %4480 = vmatprep.subr.mxu0 0.0
        %4481 = vmatpush1.msra.mxu0 %v4189
        %4482 = vmatprep.subr.mxu0 0.0
        %4483 = vmatpush1.msra.mxu0 %v4190
        %4484 = vmatprep.subr.mxu0 0.0
        %4485 = vmatpush1.msra.mxu0 %v4191
        %4486 = vmatprep.subr.mxu0 0.0
        %4487 = vmatpush1.msra.mxu0 %v4192
        %4488 = vmatprep.subr.mxu0 0.0
        %4489 = vmatpush1.msra.mxu0 %v4193
        %4490 = vmatprep.subr.mxu0 0.0
        %4491 = vmatpush1.msra.mxu0 %v4194
        %4492 = vmatprep.subr.mxu0 0.0
        %4493 = vmatpush1.msra.mxu0 %v4195
        %4494 = vmatprep.subr.mxu0 0.0
        %4495 = vmatpush1.msra.mxu0 %v4196
        %4496 = vmatprep.subr.mxu0 0.0
        %4497 = vmatpush1.msra.mxu0 %v4197
        %4498 = vmatprep.subr.mxu0 0.0
        %4499 = vmatpush1.msra.mxu0 %v4198
        %4500 = vmatprep.subr.mxu0 0.0
        %4501 = vmatpush1.msra.mxu0 %v4199
        %4502 = vmatprep.subr.mxu0 0.0
        %4503 = vmatpush1.msra.mxu0 %v4200
        %4504 = vmatprep.subr.mxu0 0.0
        %4505 = vmatpush1.msra.mxu0 %v4201
        %4506 = vmatprep.mubr.f32.mxu0 %v4427
        %4507 = vmatmul.mubr.f32.gmra.mrb[0].mxu0 %v4426
        %v4508 = vpop.f32.mrb[0].mxu0
        %v4509 = vadd.f32 0.0, %v4508
        %v4510 = vpop.f32.mrb[0].mxu0
        %4511 = vdwg.mxu0
        %4512 = vmatprep.subr.mxu0 0.0
        %4513 = vmatpush1.msra.mxu0 %v4202
        %4514 = vmatprep.subr.mxu0 0.0
        %4515 = vmatpush1.msra.mxu0 %v4203
        %4516 = vmatprep.subr.mxu0 0.0
        %4517 = vmatpush1.msra.mxu0 %v4204
        %4518 = vmatprep.subr.mxu0 0.0
        %4519 = vmatpush1.msra.mxu0 %v4205
        %4520 = vmatprep.subr.mxu0 0.0
        %4521 = vmatpush1.msra.mxu0 %v4206
        %4522 = vmatprep.subr.mxu0 0.0
        %4523 = vmatpush1.msra.mxu0 %v4207
        %4524 = vmatprep.subr.mxu0 0.0
        %4525 = vmatpush1.msra.mxu0 %v4208
        %4526 = vmatprep.subr.mxu0 0.0
        %4527 = vmatpush1.msra.mxu0 %v4209
        %4528 = vmatprep.subr.mxu0 0.0
        %4529 = vmatpush1.msra.mxu0 %v4210
        %4530 = vmatprep.subr.mxu0 0.0
        %4531 = vmatpush1.msra.mxu0 %v4211
        %4532 = vmatprep.subr.mxu0 0.0
        %4533 = vmatpush1.msra.mxu0 %v4212
        %4534 = vmatprep.subr.mxu0 0.0
        %4535 = vmatpush1.msra.mxu0 %v4213
        %4536 = vmatprep.subr.mxu0 0.0
        %4537 = vmatpush1.msra.mxu0 %v4214
        %4538 = vmatprep.subr.mxu0 0.0
        %4539 = vmatpush1.msra.mxu0 %v4215
        %4540 = vmatprep.subr.mxu0 0.0
        %4541 = vmatpush1.msra.mxu0 %v4216
        %4542 = vmatprep.subr.mxu0 0.0
        %4543 = vmatpush1.msra.mxu0 %v4217
        %4544 = vmatprep.subr.mxu0 0.0
        %4545 = vmatpush1.msra.mxu0 %v4218
        %4546 = vmatprep.subr.mxu0 0.0
        %4547 = vmatpush1.msra.mxu0 %v4219
        %4548 = vmatprep.subr.mxu0 0.0
        %4549 = vmatpush1.msra.mxu0 %v4220
        %4550 = vmatprep.subr.mxu0 0.0
        %4551 = vmatpush1.msra.mxu0 %v4221
        %4552 = vmatprep.subr.mxu0 0.0
        %4553 = vmatpush1.msra.mxu0 %v4222
        %4554 = vmatprep.subr.mxu0 0.0
        %4555 = vmatpush1.msra.mxu0 %v4223
        %4556 = vmatprep.subr.mxu0 0.0
        %4557 = vmatpush1.msra.mxu0 %v4224
        %4558 = vmatprep.subr.mxu0 0.0
        %4559 = vmatpush1.msra.mxu0 %v4225
        %4560 = vmatprep.subr.mxu0 0.0
        %4561 = vmatpush1.msra.mxu0 %v4226
        %4562 = vmatprep.subr.mxu0 0.0
        %4563 = vmatpush1.msra.mxu0 %v4227
        %4564 = vmatprep.subr.mxu0 0.0
        %4565 = vmatpush1.msra.mxu0 %v4228
        %4566 = vmatprep.subr.mxu0 0.0
        %4567 = vmatpush1.msra.mxu0 %v4229
        %4568 = vmatprep.subr.mxu0 0.0
        %4569 = vmatpush1.msra.mxu0 %v4230
        %4570 = vmatprep.subr.mxu0 0.0
        %4571 = vmatpush1.msra.mxu0 %v4231
        %4572 = vmatprep.subr.mxu0 0.0
        %4573 = vmatpush1.msra.mxu0 %v4232
        %4574 = vmatprep.subr.mxu0 0.0
        %4575 = vmatpush1.msra.mxu0 %v4233
        %4576 = vmatprep.mubr.f32.mxu0 %v4429
        %4577 = vmatmul.mubr.f32.gmra.mrb[0].mxu0 %v4428
        %v4578 = vpop.f32.mrb[0].mxu0
        %v4579 = vadd.f32 %v4509, %v4578
        %v4580 = vpop.f32.mrb[0].mxu0
        %4581 = vdwg.mxu0
        %4582 = vmatprep.subr.mxu0 0.0
        %4583 = vmatpush1.msra.mxu0 %v4234
        %4584 = vmatprep.subr.mxu0 0.0
        %4585 = vmatpush1.msra.mxu0 %v4235
        %4586 = vmatprep.subr.mxu0 0.0
        %4587 = vmatpush1.msra.mxu0 %v4236
        %4588 = vmatprep.subr.mxu0 0.0
        %4589 = vmatpush1.msra.mxu0 %v4237
        %4590 = vmatprep.subr.mxu0 0.0
        %4591 = vmatpush1.msra.mxu0 %v4238
        %4592 = vmatprep.subr.mxu0 0.0
        %4593 = vmatpush1.msra.mxu0 %v4239
        %4594 = vmatprep.subr.mxu0 0.0
        %4595 = vmatpush1.msra.mxu0 %v4240
        %4596 = vmatprep.subr.mxu0 0.0
        %4597 = vmatpush1.msra.mxu0 %v4241
        %4598 = vmatprep.subr.mxu0 0.0
        %4599 = vmatpush1.msra.mxu0 %v4242
        %4600 = vmatprep.subr.mxu0 0.0
        %4601 = vmatpush1.msra.mxu0 %v4243
        %4602 = vmatprep.subr.mxu0 0.0
        %4603 = vmatpush1.msra.mxu0 %v4244
        %4604 = vmatprep.subr.mxu0 0.0
        %4605 = vmatpush1.msra.mxu0 %v4245
        %4606 = vmatprep.subr.mxu0 0.0
        %4607 = vmatpush1.msra.mxu0 %v4246
        %4608 = vmatprep.subr.mxu0 0.0
        %4609 = vmatpush1.msra.mxu0 %v4247
        %4610 = vmatprep.subr.mxu0 0.0
        %4611 = vmatpush1.msra.mxu0 %v4248
        %4612 = vmatprep.subr.mxu0 0.0
        %4613 = vmatpush1.msra.mxu0 %v4249
        %4614 = vmatprep.subr.mxu0 0.0
        %4615 = vmatpush1.msra.mxu0 %v4250
        %4616 = vmatprep.subr.mxu0 0.0
        %4617 = vmatpush1.msra.mxu0 %v4251
        %4618 = vmatprep.subr.mxu0 0.0
        %4619 = vmatpush1.msra.mxu0 %v4252
        %4620 = vmatprep.subr.mxu0 0.0
        %4621 = vmatpush1.msra.mxu0 %v4253
        %4622 = vmatprep.subr.mxu0 0.0
        %4623 = vmatpush1.msra.mxu0 %v4254
        %4624 = vmatprep.subr.mxu0 0.0
        %4625 = vmatpush1.msra.mxu0 %v4255
        %4626 = vmatprep.subr.mxu0 0.0
        %4627 = vmatpush1.msra.mxu0 %v4256
        %4628 = vmatprep.subr.mxu0 0.0
        %4629 = vmatpush1.msra.mxu0 %v4257
        %4630 = vmatprep.subr.mxu0 0.0
        %4631 = vmatpush1.msra.mxu0 %v4258
        %4632 = vmatprep.subr.mxu0 0.0
        %4633 = vmatpush1.msra.mxu0 %v4259
        %4634 = vmatprep.subr.mxu0 0.0
        %4635 = vmatpush1.msra.mxu0 %v4260
        %4636 = vmatprep.subr.mxu0 0.0
        %4637 = vmatpush1.msra.mxu0 %v4261
        %4638 = vmatprep.subr.mxu0 0.0
        %4639 = vmatpush1.msra.mxu0 %v4262
        %4640 = vmatprep.subr.mxu0 0.0
        %4641 = vmatpush1.msra.mxu0 %v4263
        %4642 = vmatprep.subr.mxu0 0.0
        %4643 = vmatpush1.msra.mxu0 %v4264
        %4644 = vmatprep.subr.mxu0 0.0
        %4645 = vmatpush1.msra.mxu0 %v4265
        %4646 = vmatprep.mubr.f32.mxu0 %v4431
        %4647 = vmatmul.mubr.f32.gmra.mrb[0].mxu0 %v4430
        %v4648 = vpop.f32.mrb[0].mxu0
        %v4649 = vadd.f32 %v4579, %v4648
        %v4650 = vpop.f32.mrb[0].mxu0
        %4651 = vdwg.mxu0
        %4652 = vmatprep.subr.mxu0 0.0
        %4653 = vmatpush1.msra.mxu0 %v4266
        %4654 = vmatprep.subr.mxu0 0.0
        %4655 = vmatpush1.msra.mxu0 %v4267
        %4656 = vmatprep.subr.mxu0 0.0
        %4657 = vmatpush1.msra.mxu0 %v4268
        %4658 = vmatprep.subr.mxu0 0.0
        %4659 = vmatpush1.msra.mxu0 %v4269
        %4660 = vmatprep.subr.mxu0 0.0
        %4661 = vmatpush1.msra.mxu0 %v4270
        %4662 = vmatprep.subr.mxu0 0.0
        %4663 = vmatpush1.msra.mxu0 %v4271
        %4664 = vmatprep.subr.mxu0 0.0
        %4665 = vmatpush1.msra.mxu0 %v4272
        %4666 = vmatprep.subr.mxu0 0.0
        %4667 = vmatpush1.msra.mxu0 %v4273
        %4668 = vmatprep.subr.mxu0 0.0
        %4669 = vmatpush1.msra.mxu0 %v4274
        %4670 = vmatprep.subr.mxu0 0.0
        %4671 = vmatpush1.msra.mxu0 %v4275
        %4672 = vmatprep.subr.mxu0 0.0
        %4673 = vmatpush1.msra.mxu0 %v4276
        %4674 = vmatprep.subr.mxu0 0.0
        %4675 = vmatpush1.msra.mxu0 %v4277
        %4676 = vmatprep.subr.mxu0 0.0
        %4677 = vmatpush1.msra.mxu0 %v4278
        %4678 = vmatprep.subr.mxu0 0.0
        %4679 = vmatpush1.msra.mxu0 %v4279
        %4680 = vmatprep.subr.mxu0 0.0
        %4681 = vmatpush1.msra.mxu0 %v4280
        %4682 = vmatprep.subr.mxu0 0.0
        %4683 = vmatpush1.msra.mxu0 %v4281
        %4684 = vmatprep.subr.mxu0 0.0
        %4685 = vmatpush1.msra.mxu0 %v4282
        %4686 = vmatprep.subr.mxu0 0.0
        %4687 = vmatpush1.msra.mxu0 %v4283
        %4688 = vmatprep.subr.mxu0 0.0
        %4689 = vmatpush1.msra.mxu0 %v4284
        %4690 = vmatprep.subr.mxu0 0.0
        %4691 = vmatpush1.msra.mxu0 %v4285
        %4692 = vmatprep.subr.mxu0 0.0
        %4693 = vmatpush1.msra.mxu0 %v4286
        %4694 = vmatprep.subr.mxu0 0.0
        %4695 = vmatpush1.msra.mxu0 %v4287
        %4696 = vmatprep.subr.mxu0 0.0
        %4697 = vmatpush1.msra.mxu0 %v4288
        %4698 = vmatprep.subr.mxu0 0.0
        %4699 = vmatpush1.msra.mxu0 %v4289
        %4700 = vmatprep.subr.mxu0 0.0
        %4701 = vmatpush1.msra.mxu0 %v4290
        %4702 = vmatprep.subr.mxu0 0.0
        %4703 = vmatpush1.msra.mxu0 %v4291
        %4704 = vmatprep.subr.mxu0 0.0
        %4705 = vmatpush1.msra.mxu0 %v4292
        %4706 = vmatprep.subr.mxu0 0.0
        %4707 = vmatpush1.msra.mxu0 %v4293
        %4708 = vmatprep.subr.mxu0 0.0
        %4709 = vmatpush1.msra.mxu0 %v4294
        %4710 = vmatprep.subr.mxu0 0.0
        %4711 = vmatpush1.msra.mxu0 %v4295
        %4712 = vmatprep.subr.mxu0 0.0
        %4713 = vmatpush1.msra.mxu0 %v4296
        %4714 = vmatprep.subr.mxu0 0.0
        %4715 = vmatpush1.msra.mxu0 %v4297
        %4716 = vmatprep.mubr.f32.mxu0 %v4433
        %4717 = vmatmul.mubr.f32.gmra.mrb[0].mxu0 %v4432
        %v4718 = vpop.f32.mrb[0].mxu0
        %v4719 = vadd.f32 %v4649, %v4718
        %v4720 = vpop.f32.mrb[0].mxu0
        %4721 = vdwg.mxu0
        %4722 = vmatprep.subr.mxu0 0.0
        %4723 = vmatpush1.msra.mxu0 %v4298
        %4724 = vmatprep.subr.mxu0 0.0
        %4725 = vmatpush1.msra.mxu0 %v4299
        %4726 = vmatprep.subr.mxu0 0.0
        %4727 = vmatpush1.msra.mxu0 %v4300
        %4728 = vmatprep.subr.mxu0 0.0
        %4729 = vmatpush1.msra.mxu0 %v4301
        %4730 = vmatprep.subr.mxu0 0.0
        %4731 = vmatpush1.msra.mxu0 %v4302
        %4732 = vmatprep.subr.mxu0 0.0
        %4733 = vmatpush1.msra.mxu0 %v4303
        %4734 = vmatprep.subr.mxu0 0.0
        %4735 = vmatpush1.msra.mxu0 %v4304
        %4736 = vmatprep.subr.mxu0 0.0
        %4737 = vmatpush1.msra.mxu0 %v4305
        %4738 = vmatprep.subr.mxu0 0.0
        %4739 = vmatpush1.msra.mxu0 %v4306
        %4740 = vmatprep.subr.mxu0 0.0
        %4741 = vmatpush1.msra.mxu0 %v4307
        %4742 = vmatprep.subr.mxu0 0.0
        %4743 = vmatpush1.msra.mxu0 %v4308
        %4744 = vmatprep.subr.mxu0 0.0
        %4745 = vmatpush1.msra.mxu0 %v4309
        %4746 = vmatprep.subr.mxu0 0.0
        %4747 = vmatpush1.msra.mxu0 %v4310
        %4748 = vmatprep.subr.mxu0 0.0
        %4749 = vmatpush1.msra.mxu0 %v4311
        %4750 = vmatprep.subr.mxu0 0.0
        %4751 = vmatpush1.msra.mxu0 %v4312
        %4752 = vmatprep.subr.mxu0 0.0
        %4753 = vmatpush1.msra.mxu0 %v4313
        %4754 = vmatprep.subr.mxu0 0.0
        %4755 = vmatpush1.msra.mxu0 %v4314
        %4756 = vmatprep.subr.mxu0 0.0
        %4757 = vmatpush1.msra.mxu0 %v4315
        %4758 = vmatprep.subr.mxu0 0.0
        %4759 = vmatpush1.msra.mxu0 %v4316
        %4760 = vmatprep.subr.mxu0 0.0
        %4761 = vmatpush1.msra.mxu0 %v4317
        %4762 = vmatprep.subr.mxu0 0.0
        %4763 = vmatpush1.msra.mxu0 %v4318
        %4764 = vmatprep.subr.mxu0 0.0
        %4765 = vmatpush1.msra.mxu0 %v4319
        %4766 = vmatprep.subr.mxu0 0.0
        %4767 = vmatpush1.msra.mxu0 %v4320
        %4768 = vmatprep.subr.mxu0 0.0
        %4769 = vmatpush1.msra.mxu0 %v4321
        %4770 = vmatprep.subr.mxu0 0.0
        %4771 = vmatpush1.msra.mxu0 %v4322
        %4772 = vmatprep.subr.mxu0 0.0
        %4773 = vmatpush1.msra.mxu0 %v4323
        %4774 = vmatprep.subr.mxu0 0.0
        %4775 = vmatpush1.msra.mxu0 %v4324
        %4776 = vmatprep.subr.mxu0 0.0
        %4777 = vmatpush1.msra.mxu0 %v4325
        %4778 = vmatprep.subr.mxu0 0.0
        %4779 = vmatpush1.msra.mxu0 %v4326
        %4780 = vmatprep.subr.mxu0 0.0
        %4781 = vmatpush1.msra.mxu0 %v4327
        %4782 = vmatprep.subr.mxu0 0.0
        %4783 = vmatpush1.msra.mxu0 %v4328
        %4784 = vmatprep.subr.mxu0 0.0
        %4785 = vmatpush1.msra.mxu0 %v4329
        %4786 = vmatprep.mubr.f32.mxu0 %v4435
        %4787 = vmatmul.mubr.f32.gmra.mrb[0].mxu0 %v4434
        %v4788 = vpop.f32.mrb[0].mxu0
        %v4789 = vadd.f32 %v4719, %v4788
        %v4790 = vpop.f32.mrb[0].mxu0
        %4791 = vdwg.mxu0
        %4792 = vmatprep.subr.mxu0 0.0
        %4793 = vmatpush1.msra.mxu0 %v4330
        %4794 = vmatprep.subr.mxu0 0.0
        %4795 = vmatpush1.msra.mxu0 %v4331
        %4796 = vmatprep.subr.mxu0 0.0
        %4797 = vmatpush1.msra.mxu0 %v4332
        %4798 = vmatprep.subr.mxu0 0.0
        %4799 = vmatpush1.msra.mxu0 %v4333
        %4800 = vmatprep.subr.mxu0 0.0
        %4801 = vmatpush1.msra.mxu0 %v4334
        %4802 = vmatprep.subr.mxu0 0.0
        %4803 = vmatpush1.msra.mxu0 %v4335
        %4804 = vmatprep.subr.mxu0 0.0
        %4805 = vmatpush1.msra.mxu0 %v4336
        %4806 = vmatprep.subr.mxu0 0.0
        %4807 = vmatpush1.msra.mxu0 %v4337
        %4808 = vmatprep.subr.mxu0 0.0
        %4809 = vmatpush1.msra.mxu0 %v4338
        %4810 = vmatprep.subr.mxu0 0.0
        %4811 = vmatpush1.msra.mxu0 %v4339
        %4812 = vmatprep.subr.mxu0 0.0
        %4813 = vmatpush1.msra.mxu0 %v4340
        %4814 = vmatprep.subr.mxu0 0.0
        %4815 = vmatpush1.msra.mxu0 %v4341
        %4816 = vmatprep.subr.mxu0 0.0
        %4817 = vmatpush1.msra.mxu0 %v4342
        %4818 = vmatprep.subr.mxu0 0.0
        %4819 = vmatpush1.msra.mxu0 %v4343
        %4820 = vmatprep.subr.mxu0 0.0
        %4821 = vmatpush1.msra.mxu0 %v4344
        %4822 = vmatprep.subr.mxu0 0.0
        %4823 = vmatpush1.msra.mxu0 %v4345
        %4824 = vmatprep.subr.mxu0 0.0
        %4825 = vmatpush1.msra.mxu0 %v4346
        %4826 = vmatprep.subr.mxu0 0.0
        %4827 = vmatpush1.msra.mxu0 %v4347
        %4828 = vmatprep.subr.mxu0 0.0
        %4829 = vmatpush1.msra.mxu0 %v4348
        %4830 = vmatprep.subr.mxu0 0.0
        %4831 = vmatpush1.msra.mxu0 %v4349
        %4832 = vmatprep.subr.mxu0 0.0
        %4833 = vmatpush1.msra.mxu0 %v4350
        %4834 = vmatprep.subr.mxu0 0.0
        %4835 = vmatpush1.msra.mxu0 %v4351
        %4836 = vmatprep.subr.mxu0 0.0
        %4837 = vmatpush1.msra.mxu0 %v4352
        %4838 = vmatprep.subr.mxu0 0.0
        %4839 = vmatpush1.msra.mxu0 %v4353
        %4840 = vmatprep.subr.mxu0 0.0
        %4841 = vmatpush1.msra.mxu0 %v4354
        %4842 = vmatprep.subr.mxu0 0.0
        %4843 = vmatpush1.msra.mxu0 %v4355
        %4844 = vmatprep.subr.mxu0 0.0
        %4845 = vmatpush1.msra.mxu0 %v4356
        %4846 = vmatprep.subr.mxu0 0.0
        %4847 = vmatpush1.msra.mxu0 %v4357
        %4848 = vmatprep.subr.mxu0 0.0
        %4849 = vmatpush1.msra.mxu0 %v4358
        %4850 = vmatprep.subr.mxu0 0.0
        %4851 = vmatpush1.msra.mxu0 %v4359
        %4852 = vmatprep.subr.mxu0 0.0
        %4853 = vmatpush1.msra.mxu0 %v4360
        %4854 = vmatprep.subr.mxu0 0.0
        %4855 = vmatpush1.msra.mxu0 %v4361
        %4856 = vmatprep.mubr.f32.mxu0 %v4437
        %4857 = vmatmul.mubr.f32.gmra.mrb[0].mxu0 %v4436
        %v4858 = vpop.f32.mrb[0].mxu0
        %v4859 = vadd.f32 %v4789, %v4858
        %v4860 = vpop.f32.mrb[0].mxu0
        %4861 = vdwg.mxu0
        %4862 = vmatprep.subr.mxu0 0.0
        %4863 = vmatpush1.msra.mxu0 %v4362
        %4864 = vmatprep.subr.mxu0 0.0
        %4865 = vmatpush1.msra.mxu0 %v4363
        %4866 = vmatprep.subr.mxu0 0.0
        %4867 = vmatpush1.msra.mxu0 %v4364
        %4868 = vmatprep.subr.mxu0 0.0
        %4869 = vmatpush1.msra.mxu0 %v4365
        %4870 = vmatprep.subr.mxu0 0.0
        %4871 = vmatpush1.msra.mxu0 %v4366
        %4872 = vmatprep.subr.mxu0 0.0
        %4873 = vmatpush1.msra.mxu0 %v4367
        %4874 = vmatprep.subr.mxu0 0.0
        %4875 = vmatpush1.msra.mxu0 %v4368
        %4876 = vmatprep.subr.mxu0 0.0
        %4877 = vmatpush1.msra.mxu0 %v4369
        %4878 = vmatprep.subr.mxu0 0.0
        %4879 = vmatpush1.msra.mxu0 %v4370
        %4880 = vmatprep.subr.mxu0 0.0
        %4881 = vmatpush1.msra.mxu0 %v4371
        %4882 = vmatprep.subr.mxu0 0.0
        %4883 = vmatpush1.msra.mxu0 %v4372
        %4884 = vmatprep.subr.mxu0 0.0
        %4885 = vmatpush1.msra.mxu0 %v4373
        %4886 = vmatprep.subr.mxu0 0.0
        %4887 = vmatpush1.msra.mxu0 %v4374
        %4888 = vmatprep.subr.mxu0 0.0
        %4889 = vmatpush1.msra.mxu0 %v4375
        %4890 = vmatprep.subr.mxu0 0.0
        %4891 = vmatpush1.msra.mxu0 %v4376
        %4892 = vmatprep.subr.mxu0 0.0
        %4893 = vmatpush1.msra.mxu0 %v4377
        %4894 = vmatprep.subr.mxu0 0.0
        %4895 = vmatpush1.msra.mxu0 %v4378
        %4896 = vmatprep.subr.mxu0 0.0
        %4897 = vmatpush1.msra.mxu0 %v4379
        %4898 = vmatprep.subr.mxu0 0.0
        %4899 = vmatpush1.msra.mxu0 %v4380
        %4900 = vmatprep.subr.mxu0 0.0
        %4901 = vmatpush1.msra.mxu0 %v4381
        %4902 = vmatprep.subr.mxu0 0.0
        %4903 = vmatpush1.msra.mxu0 %v4382
        %4904 = vmatprep.subr.mxu0 0.0
        %4905 = vmatpush1.msra.mxu0 %v4383
        %4906 = vmatprep.subr.mxu0 0.0
        %4907 = vmatpush1.msra.mxu0 %v4384
        %4908 = vmatprep.subr.mxu0 0.0
        %4909 = vmatpush1.msra.mxu0 %v4385
        %4910 = vmatprep.subr.mxu0 0.0
        %4911 = vmatpush1.msra.mxu0 %v4386
        %4912 = vmatprep.subr.mxu0 0.0
        %4913 = vmatpush1.msra.mxu0 %v4387
        %4914 = vmatprep.subr.mxu0 0.0
        %4915 = vmatpush1.msra.mxu0 %v4388
        %4916 = vmatprep.subr.mxu0 0.0
        %4917 = vmatpush1.msra.mxu0 %v4389
        %4918 = vmatprep.subr.mxu0 0.0
        %4919 = vmatpush1.msra.mxu0 %v4390
        %4920 = vmatprep.subr.mxu0 0.0
        %4921 = vmatpush1.msra.mxu0 %v4391
        %4922 = vmatprep.subr.mxu0 0.0
        %4923 = vmatpush1.msra.mxu0 %v4392
        %4924 = vmatprep.subr.mxu0 0.0
        %4925 = vmatpush1.msra.mxu0 %v4393
        %4926 = vmatprep.mubr.f32.mxu0 %v4439
        %4927 = vmatmul.mubr.f32.gmra.mrb[0].mxu0 %v4438
        %v4928 = vpop.f32.mrb[0].mxu0
        %v4929 = vadd.f32 %v4859, %v4928
        %v4930 = vpop.f32.mrb[0].mxu0
        %4931 = vdwg.mxu0
        %4932 = vmatprep.subr.mxu0 0.0
        %4933 = vmatpush1.msra.mxu0 %v4394
        %4934 = vmatprep.subr.mxu0 0.0
        %4935 = vmatpush1.msra.mxu0 %v4395
        %4936 = vmatprep.subr.mxu0 0.0
        %4937 = vmatpush1.msra.mxu0 %v4396
        %4938 = vmatprep.subr.mxu0 0.0
        %4939 = vmatpush1.msra.mxu0 %v4397
        %4940 = vmatprep.subr.mxu0 0.0
        %4941 = vmatpush1.msra.mxu0 %v4398
        %4942 = vmatprep.subr.mxu0 0.0
        %4943 = vmatpush1.msra.mxu0 %v4399
        %4944 = vmatprep.subr.mxu0 0.0
        %4945 = vmatpush1.msra.mxu0 %v4400
        %4946 = vmatprep.subr.mxu0 0.0
        %4947 = vmatpush1.msra.mxu0 %v4401
        %4948 = vmatprep.subr.mxu0 0.0
        %4949 = vmatpush1.msra.mxu0 %v4402
        %4950 = vmatprep.subr.mxu0 0.0
        %4951 = vmatpush1.msra.mxu0 %v4403
        %4952 = vmatprep.subr.mxu0 0.0
        %4953 = vmatpush1.msra.mxu0 %v4404
        %4954 = vmatprep.subr.mxu0 0.0
        %4955 = vmatpush1.msra.mxu0 %v4405
        %4956 = vmatprep.subr.mxu0 0.0
        %4957 = vmatpush1.msra.mxu0 %v4406
        %4958 = vmatprep.subr.mxu0 0.0
        %4959 = vmatpush1.msra.mxu0 %v4407
        %4960 = vmatprep.subr.mxu0 0.0
        %4961 = vmatpush1.msra.mxu0 %v4408
        %4962 = vmatprep.subr.mxu0 0.0
        %4963 = vmatpush1.msra.mxu0 %v4409
        %4964 = vmatprep.subr.mxu0 0.0
        %4965 = vmatpush1.msra.mxu0 %v4410
        %4966 = vmatprep.subr.mxu0 0.0
        %4967 = vmatpush1.msra.mxu0 %v4411
        %4968 = vmatprep.subr.mxu0 0.0
        %4969 = vmatpush1.msra.mxu0 %v4412
        %4970 = vmatprep.subr.mxu0 0.0
        %4971 = vmatpush1.msra.mxu0 %v4413
        %4972 = vmatprep.subr.mxu0 0.0
        %4973 = vmatpush1.msra.mxu0 %v4414
        %4974 = vmatprep.subr.mxu0 0.0
        %4975 = vmatpush1.msra.mxu0 %v4415
        %4976 = vmatprep.subr.mxu0 0.0
        %4977 = vmatpush1.msra.mxu0 %v4416
        %4978 = vmatprep.subr.mxu0 0.0
        %4979 = vmatpush1.msra.mxu0 %v4417
        %4980 = vmatprep.subr.mxu0 0.0
        %4981 = vmatpush1.msra.mxu0 %v4418
        %4982 = vmatprep.subr.mxu0 0.0
        %4983 = vmatpush1.msra.mxu0 %v4419
        %4984 = vmatprep.subr.mxu0 0.0
        %4985 = vmatpush1.msra.mxu0 %v4420
        %4986 = vmatprep.subr.mxu0 0.0
        %4987 = vmatpush1.msra.mxu0 %v4421
        %4988 = vmatprep.subr.mxu0 0.0
        %4989 = vmatpush1.msra.mxu0 %v4422
        %4990 = vmatprep.subr.mxu0 0.0
        %4991 = vmatpush1.msra.mxu0 %v4423
        %4992 = vmatprep.subr.mxu0 0.0
        %4993 = vmatpush1.msra.mxu0 %v4424
        %4994 = vmatprep.subr.mxu0 0.0
        %4995 = vmatpush1.msra.mxu0 %v4425
        %4996 = vmatprep.mubr.f32.mxu0 %v4441
        %4997 = vmatmul.mubr.f32.gmra.mrb[0].mxu0 %v4440
        %v4998 = vpop.f32.mrb[0].mxu0
        %v4999 = vadd.f32 %v4929, %v4998
        %v5000 = vpop.f32.mrb[0].mxu0
        %5001 = vdwg.mxu0
        %v5002 = vld [vmem:[%s4] sm:$0xff]
        %v5003 = vld [vmem:[%s4 + $0x8] sm:$0xff]
        %v5004 = vld [vmem:[%s4 + $0x10] sm:$0xff]
        %v5005 = vld [vmem:[%s4 + $0x18] sm:$0xff]
        %v5006 = vld [vmem:[%s4 + $0x20] sm:$0xff]
        %v5007 = vld [vmem:[%s4 + $0x28] sm:$0xff]
        %v5008 = vld [vmem:[%s4 + $0x30] sm:$0xff]
        %v5009 = vld [vmem:[%s4 + $0x38] sm:$0xff]
        %v5010 = vld [vmem:[%s4 + $0x40] sm:$0xff]
        %v5011 = vld [vmem:[%s4 + $0x48] sm:$0xff]
        %v5012 = vld [vmem:[%s4 + $0x50] sm:$0xff]
        %v5013 = vld [vmem:[%s4 + $0x58] sm:$0xff]
        %v5014 = vld [vmem:[%s4 + $0x60] sm:$0xff]
        %v5015 = vld [vmem:[%s4 + $0x68] sm:$0xff]
        %v5016 = vld [vmem:[%s4 + $0x70] sm:$0xff]
        %v5017 = vld [vmem:[%s4 + $0x78] sm:$0xff]
        %v5018 = vld [vmem:[%s5] sm:$0x1]
        %v5020 = vlaneseq
        %v5021 = vshrl.u32 %v5020, 7
        %v5022 = vsub.s32 0, %v5021
        %v5023 = vrot.slane %v5018, %v5022
        %5025 = vmatprep.subr.mxu0 0.0
        %5026 = vmatpush1.msra.mxu0 %v5002
        %5027 = vmatprep.subr.mxu0 0.0
        %5028 = vmatpush1.msra.mxu0 %v5003
        %5029 = vmatprep.subr.mxu0 0.0
        %5030 = vmatpush1.msra.mxu0 %v5004
        %5031 = vmatprep.subr.mxu0 0.0
        %5032 = vmatpush1.msra.mxu0 %v5005
        %5033 = vmatprep.subr.mxu0 0.0
        %5034 = vmatpush1.msra.mxu0 %v5006
        %5035 = vmatprep.subr.mxu0 0.0
        %5036 = vmatpush1.msra.mxu0 %v5007
        %5037 = vmatprep.subr.mxu0 0.0
        %5038 = vmatpush1.msra.mxu0 %v5008
        %5039 = vmatprep.subr.mxu0 0.0
        %5040 = vmatpush1.msra.mxu0 %v5009
        %5041 = vmatprep.subr.mxu0 0.0
        %5042 = vmatpush1.msra.mxu0 %v5010
        %5043 = vmatprep.subr.mxu0 0.0
        %5044 = vmatpush1.msra.mxu0 %v5011
        %5045 = vmatprep.subr.mxu0 0.0
        %5046 = vmatpush1.msra.mxu0 %v5012
        %5047 = vmatprep.subr.mxu0 0.0
        %5048 = vmatpush1.msra.mxu0 %v5013
        %5049 = vmatprep.subr.mxu0 0.0
        %5050 = vmatpush1.msra.mxu0 %v5014
        %5051 = vmatprep.subr.mxu0 0.0
        %5052 = vmatpush1.msra.mxu0 %v5015
        %5053 = vmatprep.subr.mxu0 0.0
        %5054 = vmatpush1.msra.mxu0 %v5016
        %5055 = vmatprep.subr.mxu0 0.0
        %5056 = vmatpush1.msra.mxu0 %v5017
        %5057 = vmatprep.subr.mxu0 0.0
        %5058 = vmatpush1.msra.mxu0 0.0
        %5059 = vmatprep.subr.mxu0 0.0
        %5060 = vmatpush1.msra.mxu0 0.0
        %5061 = vmatprep.subr.mxu0 0.0
        %5062 = vmatpush1.msra.mxu0 0.0
        %5063 = vmatprep.subr.mxu0 0.0
        %5064 = vmatpush1.msra.mxu0 0.0
        %5065 = vmatprep.subr.mxu0 0.0
        %5066 = vmatpush1.msra.mxu0 0.0
        %5067 = vmatprep.subr.mxu0 0.0
        %5068 = vmatpush1.msra.mxu0 0.0
        %5069 = vmatprep.subr.mxu0 0.0
        %5070 = vmatpush1.msra.mxu0 0.0
        %5071 = vmatprep.subr.mxu0 0.0
        %5072 = vmatpush1.msra.mxu0 0.0
        %5073 = vmatprep.subr.mxu0 0.0
        %5074 = vmatpush1.msra.mxu0 0.0
        %5075 = vmatprep.subr.mxu0 0.0
        %5076 = vmatpush1.msra.mxu0 0.0
        %5077 = vmatprep.subr.mxu0 0.0
        %5078 = vmatpush1.msra.mxu0 0.0
        %5079 = vmatprep.subr.mxu0 0.0
        %5080 = vmatpush1.msra.mxu0 0.0
        %5081 = vmatprep.subr.mxu0 0.0
        %5082 = vmatpush1.msra.mxu0 0.0
        %5083 = vmatprep.subr.mxu0 0.0
        %5084 = vmatpush1.msra.mxu0 0.0
        %5085 = vmatprep.subr.mxu0 0.0
        %5086 = vmatpush1.msra.mxu0 0.0
        %5087 = vmatprep.subr.mxu0 0.0
        %5088 = vmatpush1.msra.mxu0 0.0
        %5089 = vmatprep.mubr.f32.mxu0 0.0
        %5090 = vmatmul.mubr.f32.gmra.mrb[0].mxu0 %v4999
        %v5091 = vpop.f32.mrb[0].mxu0
        %v5092 = vadd.f32 %v5023, %v5091
        %v5093 = vpop.f32.mrb[0].mxu0
        %5094 = vdwg.mxu0
        %5095 = vst [vmem:[%s247] sm:$0xff] %v5092
        %s5096 = sand.u32 %s159, 1
        %s5097 = scalar_lea.sflag [#allocation3], %s5096
        %s5098 = sand.u32 %s159, 1
        %s5099 = smul.addr %s5098, 8
        %s5100 = scalar_lea.vmem [#allocation2], %s5099
        // Predicated region
        $region45: #{tpu_custom_call.1} parent=43 // pred_check
          %p5101 = pneg %p169
        $region46: #{tpu_custom_call.1} parent=43 // pred_check_branch
          %5103 = sbr.rel (%p5101) target = $region48
        $region47: #{tpu_custom_call.1} parent=43 // pred_region
          %s5105 = ssub.s32 128, 128
          %5106 = vsyncadd %s5097, %s5105
          %s5107 = smul.addr %s20, 128
          %s5108 = scalar_lea.hbm %s6, %s5107
          %s5110 = sshll.u32 %s5100, 4
          %s5111 = int_to_ptr.vmem [resolvable:$true] %s5110
          %5113 = dma.vmem_to_hbm [thread:$0]  %s5111, 128, %s5108, %s5097
        $region48: #{tpu_custom_call.1} parent=43 // pred_fallthru
          _
      $region44: #{tpu_custom_call.1} parent=5 // pred_fallthru
        _
      %p5114 = scmp.le.s32.totalorder 2, %s15
      // Predicated region
      $region49: #{tpu_custom_call.1} parent=5 // pred_check
        %p5115 = pneg %p5114
      $region50: #{tpu_custom_call.1} parent=5 // pred_check_branch
        %5117 = sbr.rel (%p5115) target = $region52
      $region51: #{tpu_custom_call.1} parent=5 // pred_region
        %s5118 = ssub.s32 %s15, 2
        // Predicated region
        $region53: #{tpu_custom_call.1} parent=51 // pred_check
          %p5119 = pneg %p175
        $region54: #{tpu_custom_call.1} parent=51 // pred_check_branch
          %5121 = sbr.rel (%p5119) target = $region56
        $region55: #{tpu_custom_call.1} parent=51 // pred_region
          %s5122 = sand.u32 %s160, 1
          %s5123 = scalar_lea.sflag [#allocation3], %s5122
          %s5124 = sand.u32 %s160, 1
          %s5125 = smul.addr %s5124, 8
          %s5126 = scalar_lea.vmem [#allocation2], %s5125
          %5127 = dma.done %s5123, 128
        $region56: #{tpu_custom_call.1} parent=51 // pred_fallthru
          _
      $region52: #{tpu_custom_call.1} parent=5 // pred_fallthru
        _
    $region6: #{tpu_custom_call.1} parent=1 // loop_footer
      %s19 = sadd.s32 1, %s15
    $region7: #{tpu_custom_call.1} parent=1 // loop_footer_branch
      %14 = sbr.rel target = $region3
    $region8: #{tpu_custom_call.1} parent=1 // loop_exit
      _
    %5128 = vsyncpa [#allocation3], 1
    %s5129 = scalar_lea.sflag [#allocation3], 1
    %5130 = vsyncpa %s5129, 1

</llo_original>
